<compile_context>
chip_gen: v5e
topology: v5e:2x2
jax: 0.10.0
libtpu: 0.0.40
codegen_flags: <defaults>
</compile_context>

<pallas_src>
import functools

import jax
import jax.numpy as jnp
import numpy as np
from jax.experimental import pallas as pl
from jax.experimental.pallas import tpu as pltpu


# --------------------------------------------------------------------------- kernels

def _conv_mm_kernel(x_ref, w_ref, b_ref, o_ref, *scratch, KH, KW, stride,
                    H_t, W_out, Cg, mxu_dtype, has_act, act_type):
    """Dense/grouped conv, one grid step = (group, cout-tile, image, H_out-tile).

    x_ref: (s*s, Hq, Wq, Cg)   polyphase zero-padded input slab (resident per (n, g))
    w_ref: (KH*KW*Cg, tn)      weights, BN scale folded, fused contraction dim
    b_ref: (1, tn)             folded BN bias (f32)
    o_ref: (M_t, tn)           lane-dense 2-D output tile, M_t = H_t * W_out
    scratch[0] (optional): (M_t, KH*KW*Cg) VMEM patch buffer (only when KH*KW > 1)
    """
    h0 = pl.multiple_of(pl.program_id(3) * H_t, H_t)
    M_t = H_t * W_out

    if KH * KW == 1:
        # 1x1 conv: the "patch" is just the input rows; skip the staging copy.
        xt = x_ref[0, pl.ds(h0, H_t), 0:W_out, :]
        patch = xt.reshape(M_t, Cg).astype(mxu_dtype)
    else:
        patch_ref = scratch[0]
        # In-kernel im2col into VMEM: static unroll over taps, unit-stride slices
        # (stride handled by the wrapper's polyphase plane index `ph`).
        for kh in range(KH):
            for kw in range(KW):
                ph = (kh % stride) * stride + (kw % stride)
                qh, qw = kh // stride, kw // stride
                t = kh * KW + kw
                xt = x_ref[ph, pl.ds(h0 + qh, H_t), qw:qw + W_out, :]
                patch_ref[:, t * Cg:(t + 1) * Cg] = (
                    xt.reshape(M_t, Cg).astype(mxu_dtype))
        patch = patch_ref[...]

    # Single fused-K matmul: K = KH*KW*Cg feeds the MXU contraction dim.
    acc = jnp.dot(patch, w_ref[...], preferred_element_type=jnp.float32)
    acc = acc + b_ref[...]
    if has_act:
        if act_type == 'relu':
            acc = jnp.maximum(acc, 0.0)
        else:  # hard_swish: x * relu6(x + 3) / 6
            acc = acc * (jnp.clip(acc + 3.0, 0.0, 6.0) * (1.0 / 6.0))
    o_ref[...] = acc.astype(o_ref.dtype)


def _dw_conv_kernel(x_ref, w_ref, b_ref, o_ref, *, KH, KW, stride, H_t, W_out,
                    has_act, act_type):
    """Depthwise conv (Cg == 1, opg == 1): pure VPU path, channels in the lane dim.

    x_ref: (s*s, Hq, Wq, C)    polyphase zero-padded input slab (resident per image)
    w_ref: (KH*KW, 1, 1, C)    per-channel weights, BN scale folded (f32)
    b_ref: (1, 1, C)           folded BN bias (f32)
    o_ref: (H_t, W_out, C)
    """
    h0 = pl.multiple_of(pl.program_id(1) * H_t, H_t)
    acc = jnp.zeros(o_ref.shape, jnp.float32)
    for kh in range(KH):
        for kw in range(KW):
            ph = (kh % stride) * stride + (kw % stride)
            qh, qw = kh // stride, kw // stride
            xt = x_ref[ph, pl.ds(h0 + qh, H_t), qw:qw + W_out, :]
            acc = acc + xt.astype(jnp.float32) * w_ref[kh * KW + kw]
    acc = acc + b_ref[...]
    if has_act:
        if act_type == 'relu':
            acc = jnp.maximum(acc, 0.0)
        else:
            acc = acc * (jnp.clip(acc + 3.0, 0.0, 6.0) * (1.0 / 6.0))
    o_ref[...] = acc.astype(o_ref.dtype)


# --------------------------------------------------------------------------- helpers

def _prep_input(x, G, Cg, s, pad):
    """NCHW -> (N*G, s*s, Hq, Wq, Cg): zero-pad + polyphase stride decomposition folded
    into a single layout transpose (one XLA pass)."""
    N, C, H, W = x.shape
    Hp, Wp = H + 2 * pad, W + 2 * pad
    Hpr, Wpr = pl.cdiv(Hp, s) * s, pl.cdiv(Wp, s) * s
    Hq, Wq = Hpr // s, Wpr // s
    x5 = x.reshape(N, G, Cg, H, W)
    x5 = jnp.pad(x5, ((0, 0), (0, 0), (0, 0),
                      (pad, pad + Hpr - Hp), (pad, pad + Wpr - Wp)))
    x7 = x5.reshape(N, G, Cg, Hq, s, Wq, s)
    xt = jnp.transpose(x7, (0, 1, 4, 6, 3, 5, 2))   # (N, G, ph, pw, Hq, Wq, Cg)
    return xt.reshape(N * G, s * s, Hq, Wq, Cg), Hq, Wq


def _pick_h_tile(H_out, W_out, per_row_bytes, budget, need_mult8):
    """Largest divisor of H_out whose f32 result tile fits `budget`; for the 2-D output
    store the tile row count must keep M_t = H_t*W_out a multiple of 8 (or be full)."""
    divs = [d for d in range(1, H_out + 1) if H_out % d == 0]
    ok = [d for d in divs
          if (not need_mult8) or d == H_out or (d * W_out) % 8 == 0]
    fits = [d for d in ok if d * per_row_bytes <= budget]
    if fits:
        return max(fits)
    return min(ok)


# --------------------------------------------------------------------------- wrapper

def conv_bn_act_block(x, weight, bn_params=None, *, stride, padding, groups=1,
                      has_bn=True, has_act=True, act_type='relu',
                      mxu_dtype=jnp.bfloat16, cout_tile=256,
                      acc_tile_bytes=128 * 1024, vmem_cap_bytes=48 * 2**20):
    """x: (N, C_in, H, W) NCHW.  weight: (C_out, C_in//groups, KH, KW) (PyTorch layout).

    cout_tile: 256 for v6e/v7x, 128 for v5e (must be a multiple of 128).
    """
    assert act_type in ('relu', 'hard_swish')
    N, C_in, H, W = x.shape
    C_out, Cg, KH, KW = weight.shape
    G = int(groups)
    assert C_in == G * Cg and C_out % G == 0
    opg = C_out // G
    s, p = int(stride), int(padding)
    H_out = (H + 2 * p - KH) // s + 1
    W_out = (W + 2 * p - KW) // s + 1
    assert H_out > 0 and W_out > 0
    out_dtype = x.dtype

    # ---- fold BatchNorm (inference / running-stats semantics) into scale + bias.
    if has_bn:
        gamma, beta, rmean, rvar, eps = bn_params
        scale = (gamma / jnp.sqrt(rvar + eps)).astype(jnp.float32)
        bias = (beta - rmean * scale).astype(jnp.float32)
    else:
        scale = jnp.ones((C_out,), jnp.float32)
        bias = jnp.zeros((C_out,), jnp.float32)

    out_esz = jnp.dtype(out_dtype).itemsize

    # ======================= depthwise path (VPU, no MXU) =======================
    if G == C_in and C_out == C_in:
        C = C_in
        w = weight.astype(jnp.float32).reshape(C, KH * KW) * scale[:, None]
        w = jnp.transpose(w, (1, 0)).reshape(KH * KW, 1, 1, C)
        b = bias.reshape(1, 1, C)
        x_pp, Hq, Wq = _prep_input(x, 1, C, s, p)     # (N, s*s, Hq, Wq, C)

        H_t = _pick_h_tile(H_out, W_out, W_out * C * 4, acc_tile_bytes,
                           need_mult8=False)
        n_h = H_out // H_t

        kernel = functools.partial(_dw_conv_kernel, KH=KH, KW=KW, stride=s,
                                   H_t=H_t, W_out=W_out,
                                   has_act=has_act, act_type=act_type)

        esz = jnp.dtype(x.dtype).itemsize
        blocks = (2 * s * s * Hq * Wq * C * esz + 2 * KH * KW * C * 4 + 2 * C * 4
                  + 2 * H_t * W_out * C * out_esz + 2 * H_t * W_out * C * 4)
        vmem_limit = int(min(vmem_cap_bytes, max(16 * 2**20, 2 * blocks)))

        out = pl.pallas_call(
            kernel,
            out_shape=jax.ShapeDtypeStruct((N, H_out, W_out, C), out_dtype),
            grid_spec=pltpu.PrefetchScalarGridSpec(
                num_scalar_prefetch=0,
                grid=(N, n_h),
                in_specs=[
                    pl.BlockSpec((None, s * s, Hq, Wq, C),
                                 lambda n, ih: (n, 0, 0, 0, 0)),
                    pl.BlockSpec((KH * KW, 1, 1, C), lambda n, ih: (0, 0, 0, 0)),
                    pl.BlockSpec((1, 1, C), lambda n, ih: (0, 0, 0)),
                ],
                out_specs=pl.BlockSpec((None, H_t, W_out, C),
                                       lambda n, ih: (n, ih, 0, 0)),
            ),
            compiler_params=pltpu.CompilerParams(
                dimension_semantics=("parallel", "parallel"),
                vmem_limit_bytes=vmem_limit),
        )(x_pp, w, b)
        return jnp.transpose(out, (0, 3, 1, 2))       # NHWC -> NCHW

    # ======================= dense / grouped path (MXU) =========================
    lane = 128
    assert cout_tile % lane == 0
    if opg <= cout_tile:
        tn = ((opg + lane - 1) // lane) * lane        # lane-dense output tile
        opg_p, n_co = tn, 1
    else:
        tn = cout_tile
        n_co = pl.cdiv(opg, tn)
        opg_p = n_co * tn

    K = KH * KW * Cg
    taps = KH * KW

    # weights: (C_out, Cg, KH, KW) -> (G, KH*KW*Cg, opg_p), BN scale folded in.
    w = weight.astype(jnp.float32).reshape(G, opg, Cg, KH, KW)
    w = w * scale.reshape(G, opg, 1, 1, 1)
    w = jnp.transpose(w, (0, 3, 4, 2, 1)).reshape(G, K, opg)
    if opg_p != opg:
        w = jnp.pad(w, ((0, 0), (0, 0), (0, opg_p - opg)))
    w = w.astype(mxu_dtype)
    b = bias.reshape(G, 1, opg)
    if opg_p != opg:
        b = jnp.pad(b, ((0, 0), (0, 0), (0, opg_p - opg)))

    x_pp, Hq, Wq = _prep_input(x.astype(mxu_dtype), G, Cg, s, p)

    # spatial (H_out) tiling: bound the live f32 result tile.
    H_t = _pick_h_tile(H_out, W_out, W_out * tn * 4, acc_tile_bytes,
                       need_mult8=True)
    n_h = H_out // H_t
    M, M_t = H_out * W_out, H_t * W_out

    kernel = functools.partial(_conv_mm_kernel, KH=KH, KW=KW, stride=s,
                               H_t=H_t, W_out=W_out, Cg=Cg, mxu_dtype=mxu_dtype,
                               has_act=has_act, act_type=act_type)

    # grid ordering: keep the larger of {weight stack, input slab} resident innermost.
    esz = jnp.dtype(mxu_dtype).itemsize
    in_slab = s * s * Hq * Wq * Cg * esz
    w_slab = K * opg_p * esz
    weights_resident = (n_co == 1) or (w_slab >= in_slab)
    if weights_resident:
        grid = (G, n_co, N, n_h)
        x_map = lambda g, j, n, ih: (n * G + g, 0, 0, 0, 0)
        w_map = lambda g, j, n, ih: (g, 0, j)
        b_map = lambda g, j, n, ih: (g, 0, j)
        o_map = lambda g, j, n, ih: (n * G + g, ih, j)
    else:
        grid = (G, N, n_co, n_h)
        x_map = lambda g, n, j, ih: (n * G + g, 0, 0, 0, 0)
        w_map = lambda g, n, j, ih: (g, 0, j)
        b_map = lambda g, n, j, ih: (g, 0, j)
        o_map = lambda g, n, j, ih: (n * G + g, ih, j)

    scratch = [pltpu.VMEM((M_t, K), mxu_dtype)] if taps > 1 else []

    blocks = (2 * in_slab + 2 * K * tn * esz + 2 * tn * 4
              + 2 * M_t * tn * out_esz
              + (M_t * max(K, lane) * esz if taps > 1 else 0)
              + 2 * M_t * tn * 4)
    vmem_limit = int(min(vmem_cap_bytes, max(16 * 2**20, 2 * blocks)))

    out = pl.pallas_call(
        kernel,
        out_shape=jax.ShapeDtypeStruct((N * G, M, opg_p), out_dtype),
        grid_spec=pltpu.PrefetchScalarGridSpec(
            num_scalar_prefetch=0,
            grid=grid,
            in_specs=[
                pl.BlockSpec((None, s * s, Hq, Wq, Cg), x_map),
                pl.BlockSpec((None, K, tn), w_map),
                pl.BlockSpec((None, 1, tn), b_map),
            ],
            out_specs=pl.BlockSpec((None, M_t, tn), o_map),
            scratch_shapes=scratch),
        compiler_params=pltpu.CompilerParams(
            dimension_semantics=("parallel",) * 4,
            vmem_limit_bytes=vmem_limit),
    )(x_pp, w, b)

    # crop C_out padding, back to NCHW (glue).
    out = out[:, :, :opg].reshape(N, G, H_out, W_out, opg)
    out = jnp.transpose(out, (0, 1, 4, 2, 3)).reshape(N, C_out, H_out, W_out)
    return out


# --------------------------------------------------------------------------- reference

def _reference(x, weight, bn_params, *, stride, padding, groups, has_bn, has_act, act_type):
    y = jax.lax.conv_general_dilated(
        x, weight, window_strides=(stride, stride),
        padding=[(padding, padding), (padding, padding)],
        feature_group_count=groups,
        dimension_numbers=('NCHW', 'OIHW', 'NCHW'),
        precision=jax.lax.Precision.HIGHEST)
    if has_bn:
        gamma, beta, rmean, rvar, eps = bn_params
        y = (y - rmean[None, :, None, None]) / jnp.sqrt(rvar[None, :, None, None] + eps)
        y = y * gamma[None, :, None, None] + beta[None, :, None, None]
    if has_act:
        if act_type == 'relu':
            y = jnp.maximum(y, 0.0)
        else:
            y = y * (jnp.clip(y + 3.0, 0.0, 6.0) / 6.0)
    return y


if __name__ == "__main__":
    key = jax.random.PRNGKey(0)

    def make_case(k, n, inplanes, planes, hw, ksize, groups):
        k_x, k_w, k_g, k_b, k_m, k_v = jax.random.split(k, 6)
        x = jax.random.normal(k_x, (n, inplanes, hw, hw), dtype=jnp.float32)
        weight = jax.random.normal(k_w, (planes, inplanes // groups, ksize, ksize),
                                   dtype=jnp.float32) * 0.1
        gamma = 1.0 + 0.1 * jax.random.normal(k_g, (planes,), dtype=jnp.float32)
        beta = 0.1 * jax.random.normal(k_b, (planes,), dtype=jnp.float32)
        rmean = 0.05 * jax.random.normal(k_m, (planes,), dtype=jnp.float32)
        rvar = jnp.abs(1.0 + 0.1 * jax.random.normal(k_v, (planes,), dtype=jnp.float32))
        return x, weight, (gamma, beta, rmean, rvar, 1e-5)

    k1, k2, k3 = jax.random.split(key, 3)

    # Case 1: ConvBnActBlock(4, 8, k=3, s=1, p=1, groups=1, hard_swish) — fused-K MXU
    # path, bf16 operands / f32 accumulation, lane-dense (padded) C_out.
    x, w, bn = make_case(k1, 2, 4, 8, 16, 3, 1)
    ref = _reference(x, w, bn, stride=1, padding=1, groups=1,
                     has_bn=True, has_act=True, act_type='hard_swish')
    out = conv_bn_act_block(x, w, bn, stride=1, padding=1, groups=1,
                            has_bn=True, has_act=True, act_type='hard_swish',
                            mxu_dtype=jnp.bfloat16)
    out = jax.block_until_ready(out)
    np.testing.assert_allclose(np.asarray(out), np.asarray(ref), atol=5e-2, rtol=5e-2)

    # Same config, f32 MXU operands: near-exact semantics check.
    out32 = conv_bn_act_block(x, w, bn, stride=1, padding=1, groups=1,
                              has_bn=True, has_act=True, act_type='hard_swish',
                              mxu_dtype=jnp.float32)
    out32 = jax.block_until_ready(out32)
    np.testing.assert_allclose(np.asarray(out32), np.asarray(ref), atol=1e-4, rtol=1e-4)

    # Case 2: strided grouped conv + ReLU — polyphase stride + per-group grid axis.
    x2, w2, bn2 = make_case(k2, 2, 4, 8, 16, 3, 2)
    ref2 = _reference(x2, w2, bn2, stride=2, padding=1, groups=2,
                      has_bn=True, has_act=True, act_type='relu')
    out2 = conv_bn_act_block(x2, w2, bn2, stride=2, padding=1, groups=2,
                             has_bn=True, has_act=True, act_type='relu',
                             mxu_dtype=jnp.float32)
    out2 = jax.block_until_ready(out2)
    np.testing.assert_allclose(np.asarray(out2), np.asarray(ref2), atol=1e-4, rtol=1e-4)

    # Case 3: depthwise (groups == C_in == C_out) strided conv — VPU path (no MXU).
    x3, w3, bn3 = make_case(k3, 2, 8, 8, 16, 3, 8)
    ref3 = _reference(x3, w3, bn3, stride=2, padding=1, groups=8,
                      has_bn=True, has_act=True, act_type='hard_swish')
    out3 = conv_bn_act_block(x3, w3, bn3, stride=2, padding=1, groups=8,
                             has_bn=True, has_act=True, act_type='hard_swish')
    out3 = jax.block_until_ready(out3)
    np.testing.assert_allclose(np.asarray(out3), np.asarray(ref3), atol=1e-4, rtol=1e-4)

    print("KERNEL_OK")
</pallas_src>

<mosaic_0001>
module attributes {stable_mosaic.version = 11 : i64} {
  func.func @_conv_mm_kernel(%arg0: i32, %arg1: i32, %arg2: i32, %arg3: i32, %arg4: memref<1x1x18x18x4xbf16, #tpu.memory_space<vmem>>, %arg5: memref<1x36x128xbf16, #tpu.memory_space<vmem>>, %arg6: memref<1x1x128xf32, #tpu.memory_space<vmem>>, %arg7: memref<1x256x128xf32, #tpu.memory_space<vmem>>, %arg8: memref<256x36xbf16, #tpu.memory_space<vmem>>) attributes {dimension_semantics = [#tpu.dimension_semantics<parallel>, #tpu.dimension_semantics<parallel>, #tpu.dimension_semantics<parallel>, #tpu.dimension_semantics<parallel>], iteration_bounds = array<i64: 1, 1, 2, 1>, scalar_prefetch = 0 : i64, scratch_operands = 1 : i64, tpu.core_type = #tpu.core_type<tc>, window_params = [{transform_indices = @transform_0, window_bounds = array<i64: 1, 1, 18, 18, 4>}, {transform_indices = @transform_1, window_bounds = array<i64: 1, 36, 128>}, {transform_indices = @transform_2, window_bounds = array<i64: 1, 1, 128>}, {transform_indices = @transform_3, window_bounds = array<i64: 1, 256, 128>}]} {
    %c16_i32 = arith.constant 16 : i32
    %0 = arith.muli %arg3, %c16_i32 : i32
    %1 = tpu.assume_multiple %0, 16 : i32
    %c0_i32 = arith.constant 0 : i32
    %2 = arith.addi %1, %c0_i32 : i32
    %c0 = arith.constant 0 : index
    %c0_0 = arith.constant 0 : index
    %3 = arith.index_cast %2 : i32 to index
    %c0_1 = arith.constant 0 : index
    %c0_2 = arith.constant 0 : index
    %4 = vector.load %arg4[%c0, %c0_0, %3, %c0_1, %c0_2] : memref<1x1x18x18x4xbf16, #tpu.memory_space<vmem>>, vector<1x1x16x16x4xbf16>
    %5 = vector.shape_cast %4 : vector<1x1x16x16x4xbf16> to vector<16x16x4xbf16>
    %6 = vector.shape_cast %5 : vector<16x16x4xbf16> to vector<256x4xbf16>
    %c0_3 = arith.constant 0 : index
    %c0_4 = arith.constant 0 : index
    %7 = vector.load %arg8[%c0_3, %c0_4] : memref<256x36xbf16, #tpu.memory_space<vmem>>, vector<256x4xbf16>
    tpu.vector_store %arg8[%c0_3, %c0_4], %6 {strides = array<i32>} : memref<256x36xbf16, #tpu.memory_space<vmem>>, vector<256x4xbf16>,
    %c0_i32_5 = arith.constant 0 : i32
    %8 = arith.addi %1, %c0_i32_5 : i32
    %c0_6 = arith.constant 0 : index
    %c0_7 = arith.constant 0 : index
    %9 = arith.index_cast %8 : i32 to index
    %c1 = arith.constant 1 : index
    %c0_8 = arith.constant 0 : index
    %10 = vector.load %arg4[%c0_6, %c0_7, %9, %c1, %c0_8] : memref<1x1x18x18x4xbf16, #tpu.memory_space<vmem>>, vector<1x1x16x16x4xbf16>
    %11 = vector.shape_cast %10 : vector<1x1x16x16x4xbf16> to vector<16x16x4xbf16>
    %12 = vector.shape_cast %11 : vector<16x16x4xbf16> to vector<256x4xbf16>
    %c0_9 = arith.constant 0 : index
    %c4 = arith.constant 4 : index
    %13 = vector.load %arg8[%c0_9, %c4] : memref<256x36xbf16, #tpu.memory_space<vmem>>, vector<256x4xbf16>
    tpu.vector_store %arg8[%c0_9, %c4], %12 {strides = array<i32>} : memref<256x36xbf16, #tpu.memory_space<vmem>>, vector<256x4xbf16>,
    %c0_i32_10 = arith.constant 0 : i32
    %14 = arith.addi %1, %c0_i32_10 : i32
    %c0_11 = arith.constant 0 : index
    %c0_12 = arith.constant 0 : index
    %15 = arith.index_cast %14 : i32 to index
    %c2 = arith.constant 2 : index
    %c0_13 = arith.constant 0 : index
    %16 = vector.load %arg4[%c0_11, %c0_12, %15, %c2, %c0_13] : memref<1x1x18x18x4xbf16, #tpu.memory_space<vmem>>, vector<1x1x16x16x4xbf16>
    %17 = vector.shape_cast %16 : vector<1x1x16x16x4xbf16> to vector<16x16x4xbf16>
    %18 = vector.shape_cast %17 : vector<16x16x4xbf16> to vector<256x4xbf16>
    %c0_14 = arith.constant 0 : index
    %c8 = arith.constant 8 : index
    %19 = vector.load %arg8[%c0_14, %c8] : memref<256x36xbf16, #tpu.memory_space<vmem>>, vector<256x4xbf16>
    tpu.vector_store %arg8[%c0_14, %c8], %18 {strides = array<i32>} : memref<256x36xbf16, #tpu.memory_space<vmem>>, vector<256x4xbf16>,
    %c1_i32 = arith.constant 1 : i32
    %20 = arith.addi %1, %c1_i32 : i32
    %c0_15 = arith.constant 0 : index
    %c0_16 = arith.constant 0 : index
    %21 = arith.index_cast %20 : i32 to index
    %c0_17 = arith.constant 0 : index
    %c0_18 = arith.constant 0 : index
    %22 = vector.load %arg4[%c0_15, %c0_16, %21, %c0_17, %c0_18] : memref<1x1x18x18x4xbf16, #tpu.memory_space<vmem>>, vector<1x1x16x16x4xbf16>
    %23 = vector.shape_cast %22 : vector<1x1x16x16x4xbf16> to vector<16x16x4xbf16>
    %24 = vector.shape_cast %23 : vector<16x16x4xbf16> to vector<256x4xbf16>
    %c0_19 = arith.constant 0 : index
    %c12 = arith.constant 12 : index
    %25 = vector.load %arg8[%c0_19, %c12] : memref<256x36xbf16, #tpu.memory_space<vmem>>, vector<256x4xbf16>
    tpu.vector_store %arg8[%c0_19, %c12], %24 {strides = array<i32>} : memref<256x36xbf16, #tpu.memory_space<vmem>>, vector<256x4xbf16>,
    %c1_i32_20 = arith.constant 1 : i32
    %26 = arith.addi %1, %c1_i32_20 : i32
    %c0_21 = arith.constant 0 : index
    %c0_22 = arith.constant 0 : index
    %27 = arith.index_cast %26 : i32 to index
    %c1_23 = arith.constant 1 : index
    %c0_24 = arith.constant 0 : index
    %28 = vector.load %arg4[%c0_21, %c0_22, %27, %c1_23, %c0_24] : memref<1x1x18x18x4xbf16, #tpu.memory_space<vmem>>, vector<1x1x16x16x4xbf16>
    %29 = vector.shape_cast %28 : vector<1x1x16x16x4xbf16> to vector<16x16x4xbf16>
    %30 = vector.shape_cast %29 : vector<16x16x4xbf16> to vector<256x4xbf16>
    %c0_25 = arith.constant 0 : index
    %c16 = arith.constant 16 : index
    %31 = vector.load %arg8[%c0_25, %c16] : memref<256x36xbf16, #tpu.memory_space<vmem>>, vector<256x4xbf16>
    tpu.vector_store %arg8[%c0_25, %c16], %30 {strides = array<i32>} : memref<256x36xbf16, #tpu.memory_space<vmem>>, vector<256x4xbf16>,
    %c1_i32_26 = arith.constant 1 : i32
    %32 = arith.addi %1, %c1_i32_26 : i32
    %c0_27 = arith.constant 0 : index
    %c0_28 = arith.constant 0 : index
    %33 = arith.index_cast %32 : i32 to index
    %c2_29 = arith.constant 2 : index
    %c0_30 = arith.constant 0 : index
    %34 = vector.load %arg4[%c0_27, %c0_28, %33, %c2_29, %c0_30] : memref<1x1x18x18x4xbf16, #tpu.memory_space<vmem>>, vector<1x1x16x16x4xbf16>
    %35 = vector.shape_cast %34 : vector<1x1x16x16x4xbf16> to vector<16x16x4xbf16>
    %36 = vector.shape_cast %35 : vector<16x16x4xbf16> to vector<256x4xbf16>
    %c0_31 = arith.constant 0 : index
    %c20 = arith.constant 20 : index
    %37 = vector.load %arg8[%c0_31, %c20] : memref<256x36xbf16, #tpu.memory_space<vmem>>, vector<256x4xbf16>
    tpu.vector_store %arg8[%c0_31, %c20], %36 {strides = array<i32>} : memref<256x36xbf16, #tpu.memory_space<vmem>>, vector<256x4xbf16>,
    %c2_i32 = arith.constant 2 : i32
    %38 = arith.addi %1, %c2_i32 : i32
    %c0_32 = arith.constant 0 : index
    %c0_33 = arith.constant 0 : index
    %39 = arith.index_cast %38 : i32 to index
    %c0_34 = arith.constant 0 : index
    %c0_35 = arith.constant 0 : index
    %40 = vector.load %arg4[%c0_32, %c0_33, %39, %c0_34, %c0_35] : memref<1x1x18x18x4xbf16, #tpu.memory_space<vmem>>, vector<1x1x16x16x4xbf16>
    %41 = vector.shape_cast %40 : vector<1x1x16x16x4xbf16> to vector<16x16x4xbf16>
    %42 = vector.shape_cast %41 : vector<16x16x4xbf16> to vector<256x4xbf16>
    %c0_36 = arith.constant 0 : index
    %c24 = arith.constant 24 : index
    %43 = vector.load %arg8[%c0_36, %c24] : memref<256x36xbf16, #tpu.memory_space<vmem>>, vector<256x4xbf16>
    tpu.vector_store %arg8[%c0_36, %c24], %42 {strides = array<i32>} : memref<256x36xbf16, #tpu.memory_space<vmem>>, vector<256x4xbf16>,
    %c2_i32_37 = arith.constant 2 : i32
    %44 = arith.addi %1, %c2_i32_37 : i32
    %c0_38 = arith.constant 0 : index
    %c0_39 = arith.constant 0 : index
    %45 = arith.index_cast %44 : i32 to index
    %c1_40 = arith.constant 1 : index
    %c0_41 = arith.constant 0 : index
    %46 = vector.load %arg4[%c0_38, %c0_39, %45, %c1_40, %c0_41] : memref<1x1x18x18x4xbf16, #tpu.memory_space<vmem>>, vector<1x1x16x16x4xbf16>
    %47 = vector.shape_cast %46 : vector<1x1x16x16x4xbf16> to vector<16x16x4xbf16>
    %48 = vector.shape_cast %47 : vector<16x16x4xbf16> to vector<256x4xbf16>
    %c0_42 = arith.constant 0 : index
    %c28 = arith.constant 28 : index
    %49 = vector.load %arg8[%c0_42, %c28] : memref<256x36xbf16, #tpu.memory_space<vmem>>, vector<256x4xbf16>
    tpu.vector_store %arg8[%c0_42, %c28], %48 {strides = array<i32>} : memref<256x36xbf16, #tpu.memory_space<vmem>>, vector<256x4xbf16>,
    %c2_i32_43 = arith.constant 2 : i32
    %50 = arith.addi %1, %c2_i32_43 : i32
    %c0_44 = arith.constant 0 : index
    %c0_45 = arith.constant 0 : index
    %51 = arith.index_cast %50 : i32 to index
    %c2_46 = arith.constant 2 : index
    %c0_47 = arith.constant 0 : index
    %52 = vector.load %arg4[%c0_44, %c0_45, %51, %c2_46, %c0_47] : memref<1x1x18x18x4xbf16, #tpu.memory_space<vmem>>, vector<1x1x16x16x4xbf16>
    %53 = vector.shape_cast %52 : vector<1x1x16x16x4xbf16> to vector<16x16x4xbf16>
    %54 = vector.shape_cast %53 : vector<16x16x4xbf16> to vector<256x4xbf16>
    %c0_48 = arith.constant 0 : index
    %c32 = arith.constant 32 : index
    %55 = vector.load %arg8[%c0_48, %c32] : memref<256x36xbf16, #tpu.memory_space<vmem>>, vector<256x4xbf16>
    tpu.vector_store %arg8[%c0_48, %c32], %54 {strides = array<i32>} : memref<256x36xbf16, #tpu.memory_space<vmem>>, vector<256x4xbf16>,
    %c0_49 = arith.constant 0 : index
    %c0_50 = arith.constant 0 : index
    %56 = vector.load %arg8[%c0_49, %c0_50] : memref<256x36xbf16, #tpu.memory_space<vmem>>, vector<256x36xbf16>
    %c0_51 = arith.constant 0 : index
    %c0_52 = arith.constant 0 : index
    %c0_53 = arith.constant 0 : index
    %57 = vector.load %arg5[%c0_51, %c0_52, %c0_53] : memref<1x36x128xbf16, #tpu.memory_space<vmem>>, vector<1x36x128xbf16>
    %58 = vector.shape_cast %57 : vector<1x36x128xbf16> to vector<36x128xbf16>
    %cst = arith.constant dense<0.000000e+00> : vector<256x128xf32>
    %59 = tpu.matmul %56, %58, %cst {dimension_numbers = #tpu.dot_dimension_numbers<[1], [0], [0], [1], [0, 0, 1, 1], [], []>} : vector<256x36xbf16>, vector<36x128xbf16>, vector<256x128xf32> -> vector<256x128xf32>
    %c0_54 = arith.constant 0 : index
    %c0_55 = arith.constant 0 : index
    %c0_56 = arith.constant 0 : index
    %60 = vector.load %arg6[%c0_54, %c0_55, %c0_56] : memref<1x1x128xf32, #tpu.memory_space<vmem>>, vector<1x1x128xf32>
    %61 = vector.shape_cast %60 : vector<1x1x128xf32> to vector<1x128xf32>
    %62 = vector.broadcast %61 : vector<1x128xf32> to vector<256x128xf32>
    %63 = arith.addf %59, %62 : vector<256x128xf32>
    %cst_57 = arith.constant 3.000000e+00 : f32
    %64 = vector.broadcast %cst_57 : f32 to vector<256x128xf32>
    %65 = arith.addf %63, %64 : vector<256x128xf32>
    %cst_58 = arith.constant 0.000000e+00 : f32
    %cst_59 = arith.constant 6.000000e+00 : f32
    %66 = vector.broadcast %cst_58 : f32 to vector<256x128xf32>
    %67 = arith.maximumf %66, %65 : vector<256x128xf32>
    %68 = vector.broadcast %cst_59 : f32 to vector<256x128xf32>
    %69 = arith.minimumf %68, %67 : vector<256x128xf32>
    %cst_60 = arith.constant 0.166666672 : f32
    %70 = vector.broadcast %cst_60 : f32 to vector<256x128xf32>
    %71 = arith.mulf %69, %70 : vector<256x128xf32>
    %72 = arith.mulf %63, %71 : vector<256x128xf32>
    %c0_61 = arith.constant 0 : index
    %c0_62 = arith.constant 0 : index
    %c0_63 = arith.constant 0 : index
    %73 = vector.load %arg7[%c0_61, %c0_62, %c0_63] : memref<1x256x128xf32, #tpu.memory_space<vmem>>, vector<1x256x128xf32>
    %74 = vector.shape_cast %73 : vector<1x256x128xf32> to vector<256x128xf32>
    %75 = vector.shape_cast %72 : vector<256x128xf32> to vector<1x256x128xf32>
    tpu.vector_store %arg7[%c0_61, %c0_62, %c0_63], %75 {strides = array<i32>} : memref<1x256x128xf32, #tpu.memory_space<vmem>>, vector<1x256x128xf32>,
    return
  }
  func.func @transform_0(%arg0: i32, %arg1: i32, %arg2: i32, %arg3: i32) -> (i32, i32, i32, i32, i32) {
    %c1_i32 = arith.constant 1 : i32
    %0 = arith.muli %arg2, %c1_i32 : i32
    %1 = arith.addi %0, %arg0 : i32
    %c0_i32 = arith.constant 0 : i32
    %c0_i32_0 = arith.constant 0 : i32
    %c0_i32_1 = arith.constant 0 : i32
    %c0_i32_2 = arith.constant 0 : i32
    %c0_i32_3 = arith.constant 0 : i32
    return %1, %c0_i32, %c0_i32_0, %c0_i32_1, %c0_i32_2 : i32, i32, i32, i32, i32
  }
  func.func @transform_1(%arg0: i32, %arg1: i32, %arg2: i32, %arg3: i32) -> (i32, i32, i32) {
    %c0_i32 = arith.constant 0 : i32
    %c0_i32_0 = arith.constant 0 : i32
    return %arg0, %c0_i32, %arg1 : i32, i32, i32
  }
  func.func @transform_2(%arg0: i32, %arg1: i32, %arg2: i32, %arg3: i32) -> (i32, i32, i32) {
    %c0_i32 = arith.constant 0 : i32
    %c0_i32_0 = arith.constant 0 : i32
    return %arg0, %c0_i32, %arg1 : i32, i32, i32
  }
  func.func @transform_3(%arg0: i32, %arg1: i32, %arg2: i32, %arg3: i32) -> (i32, i32, i32) {
    %c1_i32 = arith.constant 1 : i32
    %0 = arith.muli %arg2, %c1_i32 : i32
    %1 = arith.addi %0, %arg0 : i32
    %c0_i32 = arith.constant 0 : i32
    return %1, %arg3, %arg1 : i32, i32, i32
  }
}

</mosaic_0001>

<llo_original>
// kernel: tpu_custom_call.1
$region0: #{tpu_custom_call.1}
  #allocation0 [shape = 'u32[]', space=smem, size = 0x4, offset = 0x4, fixed_abs, tag = 'smem constant byte address 0x4 - core index']
  #allocation1 [shape = 'u32[72,128]{1,0:T(1,128)}', space=vmem, size = 0x9000, scoped, tag = 'internal scratch']
  #allocation2 [shape = 'bf16[256,36]{1,0:T(8,128)(2,1)}', space=vmem, size = 0x10000, scoped, tag = 'scratch operand']
  %s0 = inlined_call_operand.vmem [shape: bf16[2,1,18,18,4], index: 0, kind: input, shape index: {}]
  %s1 = inlined_call_operand.vmem [shape: bf16[1,36,128], index: 1, kind: input, shape index: {}]
  %s2 = inlined_call_operand.vmem [shape: f32[1,1,128], index: 2, kind: input, shape index: {}]
  %s3 = inlined_call_operand.hbm [shape: f32[2,256,128], index: 3, kind: output, shape index: {}]
  %s4 = sld [smem:[#allocation0]]
  $region45: #{tpu_custom_call.1} parent=0
    _
  %s6 = ssub.s32 1, %s4
  %s7 = scalar_select 0, %s6, %s4
  $region1: #{tpu_custom_call.1} parent=0
    #allocation3 [shape = 'u8[262144]{0}', space=vmem, size = 0x40000, scoped, tag = 'output window, operand 0']
    #allocation4 [shape = 's32[2]{0}', space=sflag, size = 0x8, scoped, tag = 'scoped memory for tpu_custom_call.1']
    %8 = vsyncpa [#allocation4], 0
    %s9 = scalar_lea.sflag [#allocation4], 1
    %10 = vsyncpa %s9, 0
    loop: start=0, step=1, limit=4
    $region2: #{tpu_custom_call.1} parent=1 // loop_pre_header
      _
    $region3: #{tpu_custom_call.1} parent=1 // loop_header
      %s12 = sphi 0, %s16
      %p13 = scmp.ge.s32.totalorder %s12, 4
      %s19 = sphi 0, %s45
      %s20 = sphi 0, %s41
      %s21 = sphi 0, %s37
      %s22 = sphi 0, %s33
      %s23 = sphi 0, %s19
      %s24 = sphi 0, %s20
      %s25 = sphi 0, %s21
      %s26 = sphi 0, %s22
      %s27 = sphi 0, %s23
      %s28 = sphi 0, %s24
      %s29 = sphi 0, %s25
      %s30 = sphi 0, %s26
      %s50 = sphi 0, %s52
      %s53 = sphi 0, %s50
      %s54 = sphi 0, %s53
      %s70 = sphi 0, %s54
      %s78 = sphi 0, %s80
      %s81 = sphi 0, %s78
      %s82 = sphi 0, %s81
      %s98 = sphi 0, %s82
      %s106 = sphi 0, %s108
      %s109 = sphi 0, %s106
      %s110 = sphi 0, %s109
      %s126 = sphi 0, %s110
      %s138 = sphi 0, %s140
      %s141 = sphi 0, %s138
      %s142 = sphi 0, %s141
      %s158 = sphi 0, %s142
    $region4: #{tpu_custom_call.1} parent=1 // loop_header_branch
      %15 = sbr.rel (%p13) target = $region8
    $region5: #{tpu_custom_call.1} parent=1 // loop_body
      %s17 = ssub.s32 %s12, 1
      %s18 = ssub.s32 %s12, 2
      %s31 = sadd.s32 1, %s22
      %p32 = scmp.ge.s32.totalorder %s31, 1
      %s33 = scalar_select %p32, 0, %s31
      %s34 = sadd.s32 1, %s21
      %s35 = scalar_select %p32, %s34, %s21
      %p36 = scmp.ge.s32.totalorder %s35, 2
      %s37 = scalar_select %p36, 0, %s35
      %s38 = sadd.s32 1, %s20
      %s39 = scalar_select %p36, %s38, %s20
      %p40 = scmp.ge.s32.totalorder %s39, 1
      %s41 = scalar_select %p40, 0, %s39
      %s42 = sadd.s32 1, %s19
      %s43 = scalar_select %p40, %s42, %s19
      %p44 = scmp.ge.s32.totalorder %s43, 1
      %s45 = scalar_select %p44, 0, %s43
      %s46 = sadd.s32 %s21, %s19
      %s47 = sadd.s32 %s37, %s45
      %s48 = ssub.s32 %s46, %s47
      %p49 = scmp.eq.s32.totalorder %s48, 0
      %s51 = sadd.s32 %s50, 1
      %s52 = scalar_select %p49, %s50, %s51
      %p55 = pneg %p49
      %p56 = scmp.eq.s32.totalorder %s12, 1
      %p57 = por %p55, %p56
      %p58 = scmp.ne.s32.totalorder %s50, %s53
      %p59 = scmp.eq.s32.totalorder %s12, 0
      %p60 = por %p58, %p59
      %p61 = scmp.ne.s32.totalorder %s50, %s53
      %p62 = scmp.eq.s32.totalorder %s17, 1
      %p63 = por %p61, %p62
      %p64 = scmp.ne.s32.totalorder %s53, %s54
      %p65 = scmp.eq.s32.totalorder %s17, 0
      %p66 = por %p64, %p65
      %p67 = scmp.ne.s32.totalorder %s53, %s54
      %p68 = scmp.eq.s32.totalorder %s18, 1
      %p69 = por %p67, %p68
      %p71 = scmp.ne.s32.totalorder %s54, %s70
      %p72 = scmp.eq.s32.totalorder %s18, 0
      %p73 = por %p71, %p72
      %s74 = ssub.s32 %s19, %s45
      %s75 = ssub.s32 %s20, %s41
      %s76 = sor.u32 %s74, %s75
      %p77 = scmp.eq.s32.totalorder %s76, 0
      %s79 = sadd.s32 %s78, 1
      %s80 = scalar_select %p77, %s78, %s79
      %p83 = pneg %p77
      %p84 = scmp.eq.s32.totalorder %s12, 1
      %p85 = por %p83, %p84
      %p86 = scmp.ne.s32.totalorder %s78, %s81
      %p87 = scmp.eq.s32.totalorder %s12, 0
      %p88 = por %p86, %p87
      %p89 = scmp.ne.s32.totalorder %s78, %s81
      %p90 = scmp.eq.s32.totalorder %s17, 1
      %p91 = por %p89, %p90
      %p92 = scmp.ne.s32.totalorder %s81, %s82
      %p93 = scmp.eq.s32.totalorder %s17, 0
      %p94 = por %p92, %p93
      %p95 = scmp.ne.s32.totalorder %s81, %s82
      %p96 = scmp.eq.s32.totalorder %s18, 1
      %p97 = por %p95, %p96
      %p99 = scmp.ne.s32.totalorder %s82, %s98
      %p100 = scmp.eq.s32.totalorder %s18, 0
      %p101 = por %p99, %p100
      %s102 = ssub.s32 %s19, %s45
      %s103 = ssub.s32 %s20, %s41
      %s104 = sor.u32 %s102, %s103
      %p105 = scmp.eq.s32.totalorder %s104, 0
      %s107 = sadd.s32 %s106, 1
      %s108 = scalar_select %p105, %s106, %s107
      %p111 = pneg %p105
      %p112 = scmp.eq.s32.totalorder %s12, 1
      %p113 = por %p111, %p112
      %p114 = scmp.ne.s32.totalorder %s106, %s109
      %p115 = scmp.eq.s32.totalorder %s12, 0
      %p116 = por %p114, %p115
      %p117 = scmp.ne.s32.totalorder %s106, %s109
      %p118 = scmp.eq.s32.totalorder %s17, 1
      %p119 = por %p117, %p118
      %p120 = scmp.ne.s32.totalorder %s109, %s110
      %p121 = scmp.eq.s32.totalorder %s17, 0
      %p122 = por %p120, %p121
      %p123 = scmp.ne.s32.totalorder %s109, %s110
      %p124 = scmp.eq.s32.totalorder %s18, 1
      %p125 = por %p123, %p124
      %p127 = scmp.ne.s32.totalorder %s110, %s126
      %p128 = scmp.eq.s32.totalorder %s18, 0
      %p129 = por %p127, %p128
      %s130 = sadd.s32 %s21, %s19
      %s131 = sadd.s32 %s37, %s45
      %s132 = ssub.s32 %s130, %s131
      %s133 = ssub.s32 %s22, %s33
      %s134 = sor.u32 %s132, %s133
      %s135 = ssub.s32 %s20, %s41
      %s136 = sor.u32 %s134, %s135
      %p137 = scmp.eq.s32.totalorder %s136, 0
      %s139 = sadd.s32 %s138, 1
      %s140 = scalar_select %p137, %s138, %s139
      %p143 = pneg %p137
      %p144 = scmp.eq.s32.totalorder %s12, 1
      %p145 = por %p143, %p144
      %p146 = scmp.ne.s32.totalorder %s138, %s141
      %p147 = scmp.eq.s32.totalorder %s12, 0
      %p148 = por %p146, %p147
      %p149 = scmp.ne.s32.totalorder %s138, %s141
      %p150 = scmp.eq.s32.totalorder %s17, 1
      %p151 = por %p149, %p150
      %p152 = scmp.ne.s32.totalorder %s141, %s142
      %p153 = scmp.eq.s32.totalorder %s17, 0
      %p154 = por %p152, %p153
      %p155 = scmp.ne.s32.totalorder %s141, %s142
      %p156 = scmp.eq.s32.totalorder %s18, 1
      %p157 = por %p155, %p156
      %p159 = scmp.ne.s32.totalorder %s142, %s158
      %p160 = scmp.eq.s32.totalorder %s18, 0
      %p161 = por %p159, %p160
      %p162 = scmp.le.s32.totalorder 1, %s12
      %p163 = scmp.lt.s32.totalorder %s12, 3
      %p164 = pnand %p162, %p163
      %p165 = pneg %p164
      // Predicated region
      $region9: #{tpu_custom_call.1} parent=5 // pred_check
        _
      $region10: #{tpu_custom_call.1} parent=5 // pred_check_branch
        %167 = sbr.rel (%p164) target = $region12
      $region11: #{tpu_custom_call.1} parent=5 // pred_region
        %s168 = ssub.s32 %s12, 1
        // Predicated region
        $region13: #{tpu_custom_call.1} parent=11 // pred_check
          %p169 = pneg %p94
        $region14: #{tpu_custom_call.1} parent=11 // pred_check_branch
          %171 = sbr.rel (%p169) target = $region16
        $region15: #{tpu_custom_call.1} parent=11 // pred_region
          %p172 = scmp.lt.s32.totalorder %s23, 0
          %s173 = scalar_select %p172, %s23, 0
          %p174 = scmp.lt.s32.totalorder %s24, 0
          %s175 = scalar_select %p174, %s24, 0
          %s176 = smul.addr %s173, 5
          %s177 = sadd.s32 %s175, %s176
          %s178 = smul.addr %s177, 4
          %s179 = scalar_lea.vmem %s1, %s178
        $region16: #{tpu_custom_call.1} parent=11 // pred_fallthru
          _
        // Predicated region
        $region17: #{tpu_custom_call.1} parent=11 // pred_check
          %p180 = pneg %p122
        $region18: #{tpu_custom_call.1} parent=11 // pred_check_branch
          %182 = sbr.rel (%p180) target = $region20
        $region19: #{tpu_custom_call.1} parent=11 // pred_region
          %p183 = scmp.lt.s32.totalorder %s23, 0
          %s184 = scalar_select %p183, %s23, 0
          %p185 = scmp.lt.s32.totalorder %s24, 0
          %s186 = scalar_select %p185, %s24, 0
          %s187 = sadd.s32 %s186, %s184
          %s188 = scalar_lea.vmem %s2, %s187
        $region20: #{tpu_custom_call.1} parent=11 // pred_fallthru
          _
      $region12: #{tpu_custom_call.1} parent=5 // pred_fallthru
        _
      %p189 = scmp.lt.s32.totalorder %s12, 2
      // Predicated region
      $region21: #{tpu_custom_call.1} parent=5 // pred_check
        %p190 = pneg %p189
      $region22: #{tpu_custom_call.1} parent=5 // pred_check_branch
        %192 = sbr.rel (%p190) target = $region24
      $region23: #{tpu_custom_call.1} parent=5 // pred_region
        // Predicated region
        $region25: #{tpu_custom_call.1} parent=23 // pred_check
          %p193 = pneg %p60
        $region26: #{tpu_custom_call.1} parent=23 // pred_check_branch
          %195 = sbr.rel (%p193) target = $region28
        $region27: #{tpu_custom_call.1} parent=23 // pred_region
          %s196 = sadd.s32 %s21, %s19
          %p197 = scmp.lt.s32.totalorder %s196, 1
          %s198 = scalar_select %p197, %s196, 1
          %s199 = smul.addr %s198, 54
          %s200 = smul.addr %s199, 4
          %s201 = scalar_lea.vmem %s0, %s200
          %s202 = sadd.s32 %s21, %s19
        $region28: #{tpu_custom_call.1} parent=23 // pred_fallthru
          _
      $region24: #{tpu_custom_call.1} parent=5 // pred_fallthru
        _
      %p203 = scmp.le.s32.totalorder 1, %s12
      %p204 = scmp.lt.s32.totalorder %s12, 3
      %p205 = pnand %p203, %p204
      %p206 = pneg %p205
      // Predicated region
      $region29: #{tpu_custom_call.1} parent=5 // pred_check
        _
      $region30: #{tpu_custom_call.1} parent=5 // pred_check_branch
        %208 = sbr.rel (%p205) target = $region32
      $region31: #{tpu_custom_call.1} parent=5 // pred_region
        %s209 = ssub.s32 %s12, 1
        %s210 = sadd.s32 %s25, %s23
        %p211 = scmp.lt.s32.totalorder %s210, 1
        %s212 = scalar_select %p211, %s210, 1
        %s213 = smul.addr %s212, 54
        %s214 = smul.addr %s213, 4
        %s215 = scalar_lea.vmem %s0, %s214
        %p216 = pneg %p66
        %p217 = pneg %p63
        %p218 = scmp.lt.s32.totalorder %s23, 0
        %s219 = scalar_select %p218, %s23, 0
        %p220 = scmp.lt.s32.totalorder %s24, 0
        %s221 = scalar_select %p220, %s24, 0
        %s222 = smul.addr %s219, 5
        %s223 = sadd.s32 %s221, %s222
        %s224 = smul.addr %s223, 4
        %s225 = scalar_lea.vmem %s1, %s224
        %p226 = pneg %p94
        %p227 = pneg %p91
        %p228 = scmp.lt.s32.totalorder %s23, 0
        %s229 = scalar_select %p228, %s23, 0
        %p230 = scmp.lt.s32.totalorder %s24, 0
        %s231 = scalar_select %p230, %s24, 0
        %s232 = sadd.s32 %s231, %s229
        %s233 = scalar_lea.vmem %s2, %s232
        %p234 = pneg %p122
        %p235 = pneg %p119
        %p236 = pneg %p154
        %p237 = pneg %p151
        %s238 = sand.u32 %s141, 1
        %s239 = scalar_lea.sflag [#allocation4], %s238
        %s240 = sand.u32 %s141, 1
        %s241 = smul.addr %s240, 256
        %s242 = scalar_lea.vmem [#allocation3], %s241
        %s243 = sadd.s32 %s25, %s23
        %p244 = scmp.lt.s32.totalorder %s243, 1
        %s245 = scalar_select %p244, %s243, 1
        %s246 = smul.addr %s245, 54
        %s247 = smul.addr %s246, 4
        %s248 = scalar_lea.vmem %s0, %s247
        %s249 = sadd.s32 %s25, %s23
        %p250 = scmp.lt.s32.totalorder %s23, 0
        %s251 = scalar_select %p250, %s23, 0
        %p252 = scmp.lt.s32.totalorder %s24, 0
        %s253 = scalar_select %p252, %s24, 0
        %s254 = smul.addr %s251, 5
        %s255 = sadd.s32 %s253, %s254
        %s256 = smul.addr %s255, 4
        %s257 = scalar_lea.vmem %s1, %s256
        %p258 = scmp.lt.s32.totalorder %s23, 0
        %s259 = scalar_select %p258, %s23, 0
        %p260 = scmp.lt.s32.totalorder %s24, 0
        %s261 = scalar_select %p260, %s24, 0
        %s262 = sadd.s32 %s261, %s259
        %s263 = scalar_lea.vmem %s2, %s262
        %s264 = sadd.s32 %s25, %s23
        %s265 = smul.u32 32, %s26
        %s267 = smul.u32 %s26, 16
        %s268 = smul.u32 %s267, 3
        %s269 = smul.addr %s268, 4
        %s270 = scalar_lea.vmem %s248, %s269
        %v271 = vld [vmem:[%s270] sm:$0xf]
        %v272 = vld [vmem:[%s270 + $0x4] sm:$0xf]
        %v273 = vld [vmem:[%s270 + $0xc] sm:$0xf]
        %v274 = vld [vmem:[%s270 + $0x10] sm:$0xf]
        %v275 = vld [vmem:[%s270 + $0x18] sm:$0xf]
        %v276 = vld [vmem:[%s270 + $0x1c] sm:$0xf]
        %v277 = vld [vmem:[%s270 + $0x24] sm:$0xf]
        %v278 = vld [vmem:[%s270 + $0x28] sm:$0xf]
        %v279 = vld [vmem:[%s270 + $0x30] sm:$0xf]
        %v280 = vld [vmem:[%s270 + $0x34] sm:$0xf]
        %v281 = vld [vmem:[%s270 + $0x3c] sm:$0xf]
        %v282 = vld [vmem:[%s270 + $0x40] sm:$0xf]
        %v283 = vld [vmem:[%s270 + $0x48] sm:$0xf]
        %v284 = vld [vmem:[%s270 + $0x4c] sm:$0xf]
        %v285 = vld [vmem:[%s270 + $0x54] sm:$0xf]
        %v286 = vld [vmem:[%s270 + $0x58] sm:$0xf]
        %v287 = vld [vmem:[%s270 + $0x60] sm:$0xf]
        %v288 = vld [vmem:[%s270 + $0x64] sm:$0xf]
        %v289 = vld [vmem:[%s270 + $0x6c] sm:$0xf]
        %v290 = vld [vmem:[%s270 + $0x70] sm:$0xf]
        %v291 = vld [vmem:[%s270 + $0x78] sm:$0xf]
        %v292 = vld [vmem:[%s270 + $0x7c] sm:$0xf]
        %v293 = vld [vmem:[%s270 + $0x84] sm:$0xf]
        %v294 = vld [vmem:[%s270 + $0x88] sm:$0xf]
        %v295 = vld [vmem:[%s270 + $0x90] sm:$0xf]
        %v296 = vld [vmem:[%s270 + $0x94] sm:$0xf]
        %v297 = vld [vmem:[%s270 + $0x9c] sm:$0xf]
        %v298 = vld [vmem:[%s270 + $0xa0] sm:$0xf]
        %v299 = vld [vmem:[%s270 + $0xa8] sm:$0xf]
        %v300 = vld [vmem:[%s270 + $0xac] sm:$0xf]
        %v301 = vld [vmem:[%s270 + $0xb4] sm:$0xf]
        %v302 = vld [vmem:[%s270 + $0xb8] sm:$0xf]
        %vm303 = vcmask 27648
        %304 = vst.msk [vmem:[#allocation2] sm:$0xf] %vm303, %v271
        %305 = vst.msk [vmem:[#allocation2 + $0x4] sm:$0xf] %vm303, %v272
        %306 = vst.msk [vmem:[#allocation2 + $0x8] sm:$0xf] %vm303, %v273
        %307 = vst.msk [vmem:[#allocation2 + $0xc] sm:$0xf] %vm303, %v274
        %308 = vst.msk [vmem:[#allocation2 + $0x10] sm:$0xf] %vm303, %v275
        %309 = vst.msk [vmem:[#allocation2 + $0x14] sm:$0xf] %vm303, %v276
        %310 = vst.msk [vmem:[#allocation2 + $0x18] sm:$0xf] %vm303, %v277
        %311 = vst.msk [vmem:[#allocation2 + $0x1c] sm:$0xf] %vm303, %v278
        %312 = vst.msk [vmem:[#allocation2 + $0x20] sm:$0xf] %vm303, %v279
        %313 = vst.msk [vmem:[#allocation2 + $0x24] sm:$0xf] %vm303, %v280
        %314 = vst.msk [vmem:[#allocation2 + $0x28] sm:$0xf] %vm303, %v281
        %315 = vst.msk [vmem:[#allocation2 + $0x2c] sm:$0xf] %vm303, %v282
        %316 = vst.msk [vmem:[#allocation2 + $0x30] sm:$0xf] %vm303, %v283
        %317 = vst.msk [vmem:[#allocation2 + $0x34] sm:$0xf] %vm303, %v284
        %318 = vst.msk [vmem:[#allocation2 + $0x38] sm:$0xf] %vm303, %v285
        %319 = vst.msk [vmem:[#allocation2 + $0x3c] sm:$0xf] %vm303, %v286
        %320 = vst.msk [vmem:[#allocation2 + $0x40] sm:$0xf] %vm303, %v287
        %321 = vst.msk [vmem:[#allocation2 + $0x44] sm:$0xf] %vm303, %v288
        %322 = vst.msk [vmem:[#allocation2 + $0x48] sm:$0xf] %vm303, %v289
        %323 = vst.msk [vmem:[#allocation2 + $0x4c] sm:$0xf] %vm303, %v290
        %324 = vst.msk [vmem:[#allocation2 + $0x50] sm:$0xf] %vm303, %v291
        %325 = vst.msk [vmem:[#allocation2 + $0x54] sm:$0xf] %vm303, %v292
        %326 = vst.msk [vmem:[#allocation2 + $0x58] sm:$0xf] %vm303, %v293
        %327 = vst.msk [vmem:[#allocation2 + $0x5c] sm:$0xf] %vm303, %v294
        %328 = vst.msk [vmem:[#allocation2 + $0x60] sm:$0xf] %vm303, %v295
        %329 = vst.msk [vmem:[#allocation2 + $0x64] sm:$0xf] %vm303, %v296
        %330 = vst.msk [vmem:[#allocation2 + $0x68] sm:$0xf] %vm303, %v297
        %331 = vst.msk [vmem:[#allocation2 + $0x6c] sm:$0xf] %vm303, %v298
        %332 = vst.msk [vmem:[#allocation2 + $0x70] sm:$0xf] %vm303, %v299
        %333 = vst.msk [vmem:[#allocation2 + $0x74] sm:$0xf] %vm303, %v300
        %334 = vst.msk [vmem:[#allocation2 + $0x78] sm:$0xf] %vm303, %v301
        %335 = vst.msk [vmem:[#allocation2 + $0x7c] sm:$0xf] %vm303, %v302
        %v336 = vld [vmem:[%s270] sm:$0xf]
        %v337 = vld [vmem:[%s270 + $0x4] sm:$0xf]
        %v338 = vld [vmem:[%s270 + $0x8] sm:$0x1]
        %v339 = vld [vmem:[%s270 + $0xc] sm:$0xf]
        %v340 = vld [vmem:[%s270 + $0x10] sm:$0xf]
        %v341 = vld [vmem:[%s270 + $0x14] sm:$0x1]
        %v342 = vld [vmem:[%s270 + $0x18] sm:$0xf]
        %v343 = vld [vmem:[%s270 + $0x1c] sm:$0xf]
        %v344 = vld [vmem:[%s270 + $0x20] sm:$0x1]
        %v345 = vld [vmem:[%s270 + $0x24] sm:$0xf]
        %v346 = vld [vmem:[%s270 + $0x28] sm:$0xf]
        %v347 = vld [vmem:[%s270 + $0x2c] sm:$0x1]
        %v348 = vld [vmem:[%s270 + $0x30] sm:$0xf]
        %v349 = vld [vmem:[%s270 + $0x34] sm:$0xf]
        %v350 = vld [vmem:[%s270 + $0x38] sm:$0x1]
        %v351 = vld [vmem:[%s270 + $0x3c] sm:$0xf]
        %v352 = vld [vmem:[%s270 + $0x40] sm:$0xf]
        %v353 = vld [vmem:[%s270 + $0x44] sm:$0x1]
        %v354 = vld [vmem:[%s270 + $0x48] sm:$0xf]
        %v355 = vld [vmem:[%s270 + $0x4c] sm:$0xf]
        %v356 = vld [vmem:[%s270 + $0x50] sm:$0x1]
        %v357 = vld [vmem:[%s270 + $0x54] sm:$0xf]
        %v358 = vld [vmem:[%s270 + $0x58] sm:$0xf]
        %v359 = vld [vmem:[%s270 + $0x5c] sm:$0x1]
        %v360 = vld [vmem:[%s270 + $0x60] sm:$0xf]
        %v361 = vld [vmem:[%s270 + $0x64] sm:$0xf]
        %v362 = vld [vmem:[%s270 + $0x68] sm:$0x1]
        %v363 = vld [vmem:[%s270 + $0x6c] sm:$0xf]
        %v364 = vld [vmem:[%s270 + $0x70] sm:$0xf]
        %v365 = vld [vmem:[%s270 + $0x74] sm:$0x1]
        %v366 = vld [vmem:[%s270 + $0x78] sm:$0xf]
        %v367 = vld [vmem:[%s270 + $0x7c] sm:$0xf]
        %v368 = vld [vmem:[%s270 + $0x80] sm:$0x1]
        %v369 = vld [vmem:[%s270 + $0x84] sm:$0xf]
        %v370 = vld [vmem:[%s270 + $0x88] sm:$0xf]
        %v371 = vld [vmem:[%s270 + $0x8c] sm:$0x1]
        %v372 = vld [vmem:[%s270 + $0x90] sm:$0xf]
        %v373 = vld [vmem:[%s270 + $0x94] sm:$0xf]
        %v374 = vld [vmem:[%s270 + $0x98] sm:$0x1]
        %v375 = vld [vmem:[%s270 + $0x9c] sm:$0xf]
        %v376 = vld [vmem:[%s270 + $0xa0] sm:$0xf]
        %v377 = vld [vmem:[%s270 + $0xa4] sm:$0x1]
        %v378 = vld [vmem:[%s270 + $0xa8] sm:$0xf]
        %v379 = vld [vmem:[%s270 + $0xac] sm:$0xf]
        %v380 = vld [vmem:[%s270 + $0xb0] sm:$0x1]
        %v381 = vld [vmem:[%s270 + $0xb4] sm:$0xf]
        %v382 = vld [vmem:[%s270 + $0xb8] sm:$0xf]
        %v383 = vld [vmem:[%s270 + $0xbc] sm:$0x1]
        %vm384 = vsmask.f32 3328
        %vm385 = vsmask.f32 7440
        %vm386 = vmor %vm384, %vm385
        %v388 = vshrl.u32 %v336, 16
        %v390 = vrot.slane %v388, 4
        %v391 = vshll.u32 %v336, 16
        %v393 = vrot.slane %v391, 5
        %v394 = vor.u32 %v390, %v393
        %v395 = vrot.slane %v394, 4
        %v397 = vshll.u32 %v337, 16
        %v399 = vrot.slane %v397, 5
        %v400 = vsel %vm386, %v395, %v399
        %v401 = vshrl.u32 %v337, 16
        %v403 = vrot.slane %v401, 4
        %v404 = vor.u32 %v403, %v399
        %v405 = vrot.slane %v404, 4
        %v407 = vshll.u32 %v338, 16
        %v409 = vrot.slane %v407, 5
        %v410 = vsel %vm386, %v405, %v409
        %v412 = vshrl.u32 %v339, 16
        %v414 = vrot.slane %v412, 4
        %v415 = vshll.u32 %v339, 16
        %v417 = vrot.slane %v415, 5
        %v418 = vor.u32 %v414, %v417
        %v419 = vrot.slane %v418, 4
        %v421 = vshll.u32 %v340, 16
        %v423 = vrot.slane %v421, 5
        %v424 = vsel %vm386, %v419, %v423
        %v425 = vshrl.u32 %v340, 16
        %v427 = vrot.slane %v425, 4
        %v428 = vor.u32 %v427, %v423
        %v429 = vrot.slane %v428, 4
        %v431 = vshll.u32 %v341, 16
        %v433 = vrot.slane %v431, 5
        %v434 = vsel %vm386, %v429, %v433
        %v436 = vshrl.u32 %v342, 16
        %v438 = vrot.slane %v436, 4
        %v439 = vshll.u32 %v342, 16
        %v441 = vrot.slane %v439, 5
        %v442 = vor.u32 %v438, %v441
        %v443 = vrot.slane %v442, 4
        %v445 = vshll.u32 %v343, 16
        %v447 = vrot.slane %v445, 5
        %v448 = vsel %vm386, %v443, %v447
        %v449 = vshrl.u32 %v343, 16
        %v451 = vrot.slane %v449, 4
        %v452 = vor.u32 %v451, %v447
        %v453 = vrot.slane %v452, 4
        %v455 = vshll.u32 %v344, 16
        %v457 = vrot.slane %v455, 5
        %v458 = vsel %vm386, %v453, %v457
        %v460 = vshrl.u32 %v345, 16
        %v462 = vrot.slane %v460, 4
        %v463 = vshll.u32 %v345, 16
        %v465 = vrot.slane %v463, 5
        %v466 = vor.u32 %v462, %v465
        %v467 = vrot.slane %v466, 4
        %v469 = vshll.u32 %v346, 16
        %v471 = vrot.slane %v469, 5
        %v472 = vsel %vm386, %v467, %v471
        %v473 = vshrl.u32 %v346, 16
        %v475 = vrot.slane %v473, 4
        %v476 = vor.u32 %v475, %v471
        %v477 = vrot.slane %v476, 4
        %v479 = vshll.u32 %v347, 16
        %v481 = vrot.slane %v479, 5
        %v482 = vsel %vm386, %v477, %v481
        %v484 = vshrl.u32 %v348, 16
        %v486 = vrot.slane %v484, 4
        %v487 = vshll.u32 %v348, 16
        %v489 = vrot.slane %v487, 5
        %v490 = vor.u32 %v486, %v489
        %v491 = vrot.slane %v490, 4
        %v493 = vshll.u32 %v349, 16
        %v495 = vrot.slane %v493, 5
        %v496 = vsel %vm386, %v491, %v495
        %v497 = vshrl.u32 %v349, 16
        %v499 = vrot.slane %v497, 4
        %v500 = vor.u32 %v499, %v495
        %v501 = vrot.slane %v500, 4
        %v503 = vshll.u32 %v350, 16
        %v505 = vrot.slane %v503, 5
        %v506 = vsel %vm386, %v501, %v505
        %v508 = vshrl.u32 %v351, 16
        %v510 = vrot.slane %v508, 4
        %v511 = vshll.u32 %v351, 16
        %v513 = vrot.slane %v511, 5
        %v514 = vor.u32 %v510, %v513
        %v515 = vrot.slane %v514, 4
        %v517 = vshll.u32 %v352, 16
        %v519 = vrot.slane %v517, 5
        %v520 = vsel %vm386, %v515, %v519
        %v521 = vshrl.u32 %v352, 16
        %v523 = vrot.slane %v521, 4
        %v524 = vor.u32 %v523, %v519
        %v525 = vrot.slane %v524, 4
        %v527 = vshll.u32 %v353, 16
        %v529 = vrot.slane %v527, 5
        %v530 = vsel %vm386, %v525, %v529
        %v532 = vshrl.u32 %v354, 16
        %v534 = vrot.slane %v532, 4
        %v535 = vshll.u32 %v354, 16
        %v537 = vrot.slane %v535, 5
        %v538 = vor.u32 %v534, %v537
        %v539 = vrot.slane %v538, 4
        %v541 = vshll.u32 %v355, 16
        %v543 = vrot.slane %v541, 5
        %v544 = vsel %vm386, %v539, %v543
        %v545 = vshrl.u32 %v355, 16
        %v547 = vrot.slane %v545, 4
        %v548 = vor.u32 %v547, %v543
        %v549 = vrot.slane %v548, 4
        %v551 = vshll.u32 %v356, 16
        %v553 = vrot.slane %v551, 5
        %v554 = vsel %vm386, %v549, %v553
        %v556 = vshrl.u32 %v357, 16
        %v558 = vrot.slane %v556, 4
        %v559 = vshll.u32 %v357, 16
        %v561 = vrot.slane %v559, 5
        %v562 = vor.u32 %v558, %v561
        %v563 = vrot.slane %v562, 4
        %v565 = vshll.u32 %v358, 16
        %v567 = vrot.slane %v565, 5
        %v568 = vsel %vm386, %v563, %v567
        %v569 = vshrl.u32 %v358, 16
        %v571 = vrot.slane %v569, 4
        %v572 = vor.u32 %v571, %v567
        %v573 = vrot.slane %v572, 4
        %v575 = vshll.u32 %v359, 16
        %v577 = vrot.slane %v575, 5
        %v578 = vsel %vm386, %v573, %v577
        %v580 = vshrl.u32 %v360, 16
        %v582 = vrot.slane %v580, 4
        %v583 = vshll.u32 %v360, 16
        %v585 = vrot.slane %v583, 5
        %v586 = vor.u32 %v582, %v585
        %v587 = vrot.slane %v586, 4
        %v589 = vshll.u32 %v361, 16
        %v591 = vrot.slane %v589, 5
        %v592 = vsel %vm386, %v587, %v591
        %v593 = vshrl.u32 %v361, 16
        %v595 = vrot.slane %v593, 4
        %v596 = vor.u32 %v595, %v591
        %v597 = vrot.slane %v596, 4
        %v599 = vshll.u32 %v362, 16
        %v601 = vrot.slane %v599, 5
        %v602 = vsel %vm386, %v597, %v601
        %v604 = vshrl.u32 %v363, 16
        %v606 = vrot.slane %v604, 4
        %v607 = vshll.u32 %v363, 16
        %v609 = vrot.slane %v607, 5
        %v610 = vor.u32 %v606, %v609
        %v611 = vrot.slane %v610, 4
        %v613 = vshll.u32 %v364, 16
        %v615 = vrot.slane %v613, 5
        %v616 = vsel %vm386, %v611, %v615
        %v617 = vshrl.u32 %v364, 16
        %v619 = vrot.slane %v617, 4
        %v620 = vor.u32 %v619, %v615
        %v621 = vrot.slane %v620, 4
        %v623 = vshll.u32 %v365, 16
        %v625 = vrot.slane %v623, 5
        %v626 = vsel %vm386, %v621, %v625
        %v628 = vshrl.u32 %v366, 16
        %v630 = vrot.slane %v628, 4
        %v631 = vshll.u32 %v366, 16
        %v633 = vrot.slane %v631, 5
        %v634 = vor.u32 %v630, %v633
        %v635 = vrot.slane %v634, 4
        %v637 = vshll.u32 %v367, 16
        %v639 = vrot.slane %v637, 5
        %v640 = vsel %vm386, %v635, %v639
        %v641 = vshrl.u32 %v367, 16
        %v643 = vrot.slane %v641, 4
        %v644 = vor.u32 %v643, %v639
        %v645 = vrot.slane %v644, 4
        %v647 = vshll.u32 %v368, 16
        %v649 = vrot.slane %v647, 5
        %v650 = vsel %vm386, %v645, %v649
        %v652 = vshrl.u32 %v369, 16
        %v654 = vrot.slane %v652, 4
        %v655 = vshll.u32 %v369, 16
        %v657 = vrot.slane %v655, 5
        %v658 = vor.u32 %v654, %v657
        %v659 = vrot.slane %v658, 4
        %v661 = vshll.u32 %v370, 16
        %v663 = vrot.slane %v661, 5
        %v664 = vsel %vm386, %v659, %v663
        %v665 = vshrl.u32 %v370, 16
        %v667 = vrot.slane %v665, 4
        %v668 = vor.u32 %v667, %v663
        %v669 = vrot.slane %v668, 4
        %v671 = vshll.u32 %v371, 16
        %v673 = vrot.slane %v671, 5
        %v674 = vsel %vm386, %v669, %v673
        %v676 = vshrl.u32 %v372, 16
        %v678 = vrot.slane %v676, 4
        %v679 = vshll.u32 %v372, 16
        %v681 = vrot.slane %v679, 5
        %v682 = vor.u32 %v678, %v681
        %v683 = vrot.slane %v682, 4
        %v685 = vshll.u32 %v373, 16
        %v687 = vrot.slane %v685, 5
        %v688 = vsel %vm386, %v683, %v687
        %v689 = vshrl.u32 %v373, 16
        %v691 = vrot.slane %v689, 4
        %v692 = vor.u32 %v691, %v687
        %v693 = vrot.slane %v692, 4
        %v695 = vshll.u32 %v374, 16
        %v697 = vrot.slane %v695, 5
        %v698 = vsel %vm386, %v693, %v697
        %v700 = vshrl.u32 %v375, 16
        %v702 = vrot.slane %v700, 4
        %v703 = vshll.u32 %v375, 16
        %v705 = vrot.slane %v703, 5
        %v706 = vor.u32 %v702, %v705
        %v707 = vrot.slane %v706, 4
        %v709 = vshll.u32 %v376, 16
        %v711 = vrot.slane %v709, 5
        %v712 = vsel %vm386, %v707, %v711
        %v713 = vshrl.u32 %v376, 16
        %v715 = vrot.slane %v713, 4
        %v716 = vor.u32 %v715, %v711
        %v717 = vrot.slane %v716, 4
        %v719 = vshll.u32 %v377, 16
        %v721 = vrot.slane %v719, 5
        %v722 = vsel %vm386, %v717, %v721
        %v724 = vshrl.u32 %v378, 16
        %v726 = vrot.slane %v724, 4
        %v727 = vshll.u32 %v378, 16
        %v729 = vrot.slane %v727, 5
        %v730 = vor.u32 %v726, %v729
        %v731 = vrot.slane %v730, 4
        %v733 = vshll.u32 %v379, 16
        %v735 = vrot.slane %v733, 5
        %v736 = vsel %vm386, %v731, %v735
        %v737 = vshrl.u32 %v379, 16
        %v739 = vrot.slane %v737, 4
        %v740 = vor.u32 %v739, %v735
        %v741 = vrot.slane %v740, 4
        %v743 = vshll.u32 %v380, 16
        %v745 = vrot.slane %v743, 5
        %v746 = vsel %vm386, %v741, %v745
        %v748 = vshrl.u32 %v381, 16
        %v750 = vrot.slane %v748, 4
        %v751 = vshll.u32 %v381, 16
        %v753 = vrot.slane %v751, 5
        %v754 = vor.u32 %v750, %v753
        %v755 = vrot.slane %v754, 4
        %v757 = vshll.u32 %v382, 16
        %v759 = vrot.slane %v757, 5
        %v760 = vsel %vm386, %v755, %v759
        %v761 = vshrl.u32 %v382, 16
        %v763 = vrot.slane %v761, 4
        %v764 = vor.u32 %v763, %v759
        %v765 = vrot.slane %v764, 4
        %v767 = vshll.u32 %v383, 16
        %v769 = vrot.slane %v767, 5
        %v770 = vsel %vm386, %v765, %v769
        %771 = vrot.lane.b32.xlu0 %v400, 4
        %v772 = vpop.permute.xlu0 %771
        %773 = vrot.lane.b32.xlu0 %v410, 4
        %v774 = vpop.permute.xlu0 %773
        %775 = vrot.lane.b32.xlu0 %v424, 4
        %v776 = vpop.permute.xlu0 %775
        %777 = vrot.lane.b32.xlu0 %v434, 4
        %v778 = vpop.permute.xlu0 %777
        %779 = vrot.lane.b32.xlu0 %v448, 4
        %v780 = vpop.permute.xlu0 %779
        %781 = vrot.lane.b32.xlu0 %v458, 4
        %v782 = vpop.permute.xlu0 %781
        %783 = vrot.lane.b32.xlu0 %v472, 4
        %v784 = vpop.permute.xlu0 %783
        %785 = vrot.lane.b32.xlu0 %v482, 4
        %v786 = vpop.permute.xlu0 %785
        %787 = vrot.lane.b32.xlu0 %v496, 4
        %v788 = vpop.permute.xlu0 %787
        %789 = vrot.lane.b32.xlu0 %v506, 4
        %v790 = vpop.permute.xlu0 %789
        %791 = vrot.lane.b32.xlu0 %v520, 4
        %v792 = vpop.permute.xlu0 %791
        %793 = vrot.lane.b32.xlu0 %v530, 4
        %v794 = vpop.permute.xlu0 %793
        %795 = vrot.lane.b32.xlu0 %v544, 4
        %v796 = vpop.permute.xlu0 %795
        %797 = vrot.lane.b32.xlu0 %v554, 4
        %v798 = vpop.permute.xlu0 %797
        %799 = vrot.lane.b32.xlu0 %v568, 4
        %v800 = vpop.permute.xlu0 %799
        %801 = vrot.lane.b32.xlu0 %v578, 4
        %v802 = vpop.permute.xlu0 %801
        %803 = vrot.lane.b32.xlu0 %v592, 4
        %v804 = vpop.permute.xlu0 %803
        %805 = vrot.lane.b32.xlu0 %v602, 4
        %v806 = vpop.permute.xlu0 %805
        %807 = vrot.lane.b32.xlu0 %v616, 4
        %v808 = vpop.permute.xlu0 %807
        %809 = vrot.lane.b32.xlu0 %v626, 4
        %v810 = vpop.permute.xlu0 %809
        %811 = vrot.lane.b32.xlu0 %v640, 4
        %v812 = vpop.permute.xlu0 %811
        %813 = vrot.lane.b32.xlu0 %v650, 4
        %v814 = vpop.permute.xlu0 %813
        %815 = vrot.lane.b32.xlu0 %v664, 4
        %v816 = vpop.permute.xlu0 %815
        %817 = vrot.lane.b32.xlu0 %v674, 4
        %v818 = vpop.permute.xlu0 %817
        %819 = vrot.lane.b32.xlu0 %v688, 4
        %v820 = vpop.permute.xlu0 %819
        %821 = vrot.lane.b32.xlu0 %v698, 4
        %v822 = vpop.permute.xlu0 %821
        %823 = vrot.lane.b32.xlu0 %v712, 4
        %v824 = vpop.permute.xlu0 %823
        %825 = vrot.lane.b32.xlu0 %v722, 4
        %v826 = vpop.permute.xlu0 %825
        %827 = vrot.lane.b32.xlu0 %v736, 4
        %v828 = vpop.permute.xlu0 %827
        %829 = vrot.lane.b32.xlu0 %v746, 4
        %v830 = vpop.permute.xlu0 %829
        %831 = vrot.lane.b32.xlu0 %v760, 4
        %v832 = vpop.permute.xlu0 %831
        %833 = vrot.lane.b32.xlu0 %v770, 4
        %v834 = vpop.permute.xlu0 %833
        %vm867 = vcmask 60448
        %868 = vst.msk [vmem:[#allocation2] sm:$0xf] %vm867, %v772
        %869 = vst.msk [vmem:[#allocation2 + $0x4] sm:$0xf] %vm867, %v774
        %870 = vst.msk [vmem:[#allocation2 + $0x8] sm:$0xf] %vm867, %v776
        %871 = vst.msk [vmem:[#allocation2 + $0xc] sm:$0xf] %vm867, %v778
        %872 = vst.msk [vmem:[#allocation2 + $0x10] sm:$0xf] %vm867, %v780
        %873 = vst.msk [vmem:[#allocation2 + $0x14] sm:$0xf] %vm867, %v782
        %874 = vst.msk [vmem:[#allocation2 + $0x18] sm:$0xf] %vm867, %v784
        %875 = vst.msk [vmem:[#allocation2 + $0x1c] sm:$0xf] %vm867, %v786
        %876 = vst.msk [vmem:[#allocation2 + $0x20] sm:$0xf] %vm867, %v788
        %877 = vst.msk [vmem:[#allocation2 + $0x24] sm:$0xf] %vm867, %v790
        %878 = vst.msk [vmem:[#allocation2 + $0x28] sm:$0xf] %vm867, %v792
        %879 = vst.msk [vmem:[#allocation2 + $0x2c] sm:$0xf] %vm867, %v794
        %880 = vst.msk [vmem:[#allocation2 + $0x30] sm:$0xf] %vm867, %v796
        %881 = vst.msk [vmem:[#allocation2 + $0x34] sm:$0xf] %vm867, %v798
        %882 = vst.msk [vmem:[#allocation2 + $0x38] sm:$0xf] %vm867, %v800
        %883 = vst.msk [vmem:[#allocation2 + $0x3c] sm:$0xf] %vm867, %v802
        %884 = vst.msk [vmem:[#allocation2 + $0x40] sm:$0xf] %vm867, %v804
        %885 = vst.msk [vmem:[#allocation2 + $0x44] sm:$0xf] %vm867, %v806
        %886 = vst.msk [vmem:[#allocation2 + $0x48] sm:$0xf] %vm867, %v808
        %887 = vst.msk [vmem:[#allocation2 + $0x4c] sm:$0xf] %vm867, %v810
        %888 = vst.msk [vmem:[#allocation2 + $0x50] sm:$0xf] %vm867, %v812
        %889 = vst.msk [vmem:[#allocation2 + $0x54] sm:$0xf] %vm867, %v814
        %890 = vst.msk [vmem:[#allocation2 + $0x58] sm:$0xf] %vm867, %v816
        %891 = vst.msk [vmem:[#allocation2 + $0x5c] sm:$0xf] %vm867, %v818
        %892 = vst.msk [vmem:[#allocation2 + $0x60] sm:$0xf] %vm867, %v820
        %893 = vst.msk [vmem:[#allocation2 + $0x64] sm:$0xf] %vm867, %v822
        %894 = vst.msk [vmem:[#allocation2 + $0x68] sm:$0xf] %vm867, %v824
        %895 = vst.msk [vmem:[#allocation2 + $0x6c] sm:$0xf] %vm867, %v826
        %896 = vst.msk [vmem:[#allocation2 + $0x70] sm:$0xf] %vm867, %v828
        %897 = vst.msk [vmem:[#allocation2 + $0x74] sm:$0xf] %vm867, %v830
        %898 = vst.msk [vmem:[#allocation2 + $0x78] sm:$0xf] %vm867, %v832
        %899 = vst.msk [vmem:[#allocation2 + $0x7c] sm:$0xf] %vm867, %v834
        %v900 = vld [vmem:[%s270] sm:$0xe]
        %v901 = vld [vmem:[%s270 + $0x4] sm:$0xf]
        %v902 = vld [vmem:[%s270 + $0x8] sm:$0x1]
        %v903 = vld [vmem:[%s270 + $0xc] sm:$0xe]
        %v904 = vld [vmem:[%s270 + $0x10] sm:$0xf]
        %v905 = vld [vmem:[%s270 + $0x14] sm:$0x1]
        %v906 = vld [vmem:[%s270 + $0x18] sm:$0xe]
        %v907 = vld [vmem:[%s270 + $0x1c] sm:$0xf]
        %v908 = vld [vmem:[%s270 + $0x20] sm:$0x1]
        %v909 = vld [vmem:[%s270 + $0x24] sm:$0xe]
        %v910 = vld [vmem:[%s270 + $0x28] sm:$0xf]
        %v911 = vld [vmem:[%s270 + $0x2c] sm:$0x1]
        %v912 = vld [vmem:[%s270 + $0x30] sm:$0xe]
        %v913 = vld [vmem:[%s270 + $0x34] sm:$0xf]
        %v914 = vld [vmem:[%s270 + $0x38] sm:$0x1]
        %v915 = vld [vmem:[%s270 + $0x3c] sm:$0xe]
        %v916 = vld [vmem:[%s270 + $0x40] sm:$0xf]
        %v917 = vld [vmem:[%s270 + $0x44] sm:$0x1]
        %v918 = vld [vmem:[%s270 + $0x48] sm:$0xe]
        %v919 = vld [vmem:[%s270 + $0x4c] sm:$0xf]
        %v920 = vld [vmem:[%s270 + $0x50] sm:$0x1]
        %v921 = vld [vmem:[%s270 + $0x54] sm:$0xe]
        %v922 = vld [vmem:[%s270 + $0x58] sm:$0xf]
        %v923 = vld [vmem:[%s270 + $0x5c] sm:$0x1]
        %v924 = vld [vmem:[%s270 + $0x60] sm:$0xe]
        %v925 = vld [vmem:[%s270 + $0x64] sm:$0xf]
        %v926 = vld [vmem:[%s270 + $0x68] sm:$0x1]
        %v927 = vld [vmem:[%s270 + $0x6c] sm:$0xe]
        %v928 = vld [vmem:[%s270 + $0x70] sm:$0xf]
        %v929 = vld [vmem:[%s270 + $0x74] sm:$0x1]
        %v930 = vld [vmem:[%s270 + $0x78] sm:$0xe]
        %v931 = vld [vmem:[%s270 + $0x7c] sm:$0xf]
        %v932 = vld [vmem:[%s270 + $0x80] sm:$0x1]
        %v933 = vld [vmem:[%s270 + $0x84] sm:$0xe]
        %v934 = vld [vmem:[%s270 + $0x88] sm:$0xf]
        %v935 = vld [vmem:[%s270 + $0x8c] sm:$0x1]
        %v936 = vld [vmem:[%s270 + $0x90] sm:$0xe]
        %v937 = vld [vmem:[%s270 + $0x94] sm:$0xf]
        %v938 = vld [vmem:[%s270 + $0x98] sm:$0x1]
        %v939 = vld [vmem:[%s270 + $0x9c] sm:$0xe]
        %v940 = vld [vmem:[%s270 + $0xa0] sm:$0xf]
        %v941 = vld [vmem:[%s270 + $0xa4] sm:$0x1]
        %v942 = vld [vmem:[%s270 + $0xa8] sm:$0xe]
        %v943 = vld [vmem:[%s270 + $0xac] sm:$0xf]
        %v944 = vld [vmem:[%s270 + $0xb0] sm:$0x1]
        %v945 = vld [vmem:[%s270 + $0xb4] sm:$0xe]
        %v946 = vld [vmem:[%s270 + $0xb8] sm:$0xf]
        %v947 = vld [vmem:[%s270 + $0xbc] sm:$0x1]
        %vm996 = vcmask 1042432
        %vm997 = vcmask 1046532
        %vm998 = vmor %vm996, %vm997
        %v999 = vrot.slane %v900, 5
        %v1000 = vrot.slane %v999, 4
        %v1001 = vrot.slane %v901, 5
        %v1002 = vsel %vm998, %v1000, %v1001
        %v1003 = vrot.slane %v1001, 4
        %v1004 = vrot.slane %v902, 5
        %v1005 = vsel %vm998, %v1003, %v1004
        %v1006 = vrot.slane %v903, 5
        %v1007 = vrot.slane %v1006, 4
        %v1008 = vrot.slane %v904, 5
        %v1009 = vsel %vm998, %v1007, %v1008
        %v1010 = vrot.slane %v1008, 4
        %v1011 = vrot.slane %v905, 5
        %v1012 = vsel %vm998, %v1010, %v1011
        %v1013 = vrot.slane %v906, 5
        %v1014 = vrot.slane %v1013, 4
        %v1015 = vrot.slane %v907, 5
        %v1016 = vsel %vm998, %v1014, %v1015
        %v1017 = vrot.slane %v1015, 4
        %v1018 = vrot.slane %v908, 5
        %v1019 = vsel %vm998, %v1017, %v1018
        %v1020 = vrot.slane %v909, 5
        %v1021 = vrot.slane %v1020, 4
        %v1022 = vrot.slane %v910, 5
        %v1023 = vsel %vm998, %v1021, %v1022
        %v1024 = vrot.slane %v1022, 4
        %v1025 = vrot.slane %v911, 5
        %v1026 = vsel %vm998, %v1024, %v1025
        %v1027 = vrot.slane %v912, 5
        %v1028 = vrot.slane %v1027, 4
        %v1029 = vrot.slane %v913, 5
        %v1030 = vsel %vm998, %v1028, %v1029
        %v1031 = vrot.slane %v1029, 4
        %v1032 = vrot.slane %v914, 5
        %v1033 = vsel %vm998, %v1031, %v1032
        %v1034 = vrot.slane %v915, 5
        %v1035 = vrot.slane %v1034, 4
        %v1036 = vrot.slane %v916, 5
        %v1037 = vsel %vm998, %v1035, %v1036
        %v1038 = vrot.slane %v1036, 4
        %v1039 = vrot.slane %v917, 5
        %v1040 = vsel %vm998, %v1038, %v1039
        %v1041 = vrot.slane %v918, 5
        %v1042 = vrot.slane %v1041, 4
        %v1043 = vrot.slane %v919, 5
        %v1044 = vsel %vm998, %v1042, %v1043
        %v1045 = vrot.slane %v1043, 4
        %v1046 = vrot.slane %v920, 5
        %v1047 = vsel %vm998, %v1045, %v1046
        %v1048 = vrot.slane %v921, 5
        %v1049 = vrot.slane %v1048, 4
        %v1050 = vrot.slane %v922, 5
        %v1051 = vsel %vm998, %v1049, %v1050
        %v1052 = vrot.slane %v1050, 4
        %v1053 = vrot.slane %v923, 5
        %v1054 = vsel %vm998, %v1052, %v1053
        %v1055 = vrot.slane %v924, 5
        %v1056 = vrot.slane %v1055, 4
        %v1057 = vrot.slane %v925, 5
        %v1058 = vsel %vm998, %v1056, %v1057
        %v1059 = vrot.slane %v1057, 4
        %v1060 = vrot.slane %v926, 5
        %v1061 = vsel %vm998, %v1059, %v1060
        %v1062 = vrot.slane %v927, 5
        %v1063 = vrot.slane %v1062, 4
        %v1064 = vrot.slane %v928, 5
        %v1065 = vsel %vm998, %v1063, %v1064
        %v1066 = vrot.slane %v1064, 4
        %v1067 = vrot.slane %v929, 5
        %v1068 = vsel %vm998, %v1066, %v1067
        %v1069 = vrot.slane %v930, 5
        %v1070 = vrot.slane %v1069, 4
        %v1071 = vrot.slane %v931, 5
        %v1072 = vsel %vm998, %v1070, %v1071
        %v1073 = vrot.slane %v1071, 4
        %v1074 = vrot.slane %v932, 5
        %v1075 = vsel %vm998, %v1073, %v1074
        %v1076 = vrot.slane %v933, 5
        %v1077 = vrot.slane %v1076, 4
        %v1078 = vrot.slane %v934, 5
        %v1079 = vsel %vm998, %v1077, %v1078
        %v1080 = vrot.slane %v1078, 4
        %v1081 = vrot.slane %v935, 5
        %v1082 = vsel %vm998, %v1080, %v1081
        %v1083 = vrot.slane %v936, 5
        %v1084 = vrot.slane %v1083, 4
        %v1085 = vrot.slane %v937, 5
        %v1086 = vsel %vm998, %v1084, %v1085
        %v1087 = vrot.slane %v1085, 4
        %v1088 = vrot.slane %v938, 5
        %v1089 = vsel %vm998, %v1087, %v1088
        %v1090 = vrot.slane %v939, 5
        %v1091 = vrot.slane %v1090, 4
        %v1092 = vrot.slane %v940, 5
        %v1093 = vsel %vm998, %v1091, %v1092
        %v1094 = vrot.slane %v1092, 4
        %v1095 = vrot.slane %v941, 5
        %v1096 = vsel %vm998, %v1094, %v1095
        %v1097 = vrot.slane %v942, 5
        %v1098 = vrot.slane %v1097, 4
        %v1099 = vrot.slane %v943, 5
        %v1100 = vsel %vm998, %v1098, %v1099
        %v1101 = vrot.slane %v1099, 4
        %v1102 = vrot.slane %v944, 5
        %v1103 = vsel %vm998, %v1101, %v1102
        %v1104 = vrot.slane %v945, 5
        %v1105 = vrot.slane %v1104, 4
        %v1106 = vrot.slane %v946, 5
        %v1107 = vsel %vm998, %v1105, %v1106
        %v1108 = vrot.slane %v1106, 4
        %v1109 = vrot.slane %v947, 5
        %v1110 = vsel %vm998, %v1108, %v1109
        %1111 = vrot.lane.b32.xlu0 %v1002, 8
        %v1112 = vpop.permute.xlu0 %1111
        %1113 = vrot.lane.b32.xlu0 %v1005, 8
        %v1114 = vpop.permute.xlu0 %1113
        %1115 = vrot.lane.b32.xlu0 %v1009, 8
        %v1116 = vpop.permute.xlu0 %1115
        %1117 = vrot.lane.b32.xlu0 %v1012, 8
        %v1118 = vpop.permute.xlu0 %1117
        %1119 = vrot.lane.b32.xlu0 %v1016, 8
        %v1120 = vpop.permute.xlu0 %1119
        %1121 = vrot.lane.b32.xlu0 %v1019, 8
        %v1122 = vpop.permute.xlu0 %1121
        %1123 = vrot.lane.b32.xlu0 %v1023, 8
        %v1124 = vpop.permute.xlu0 %1123
        %1125 = vrot.lane.b32.xlu0 %v1026, 8
        %v1126 = vpop.permute.xlu0 %1125
        %1127 = vrot.lane.b32.xlu0 %v1030, 8
        %v1128 = vpop.permute.xlu0 %1127
        %1129 = vrot.lane.b32.xlu0 %v1033, 8
        %v1130 = vpop.permute.xlu0 %1129
        %1131 = vrot.lane.b32.xlu0 %v1037, 8
        %v1132 = vpop.permute.xlu0 %1131
        %1133 = vrot.lane.b32.xlu0 %v1040, 8
        %v1134 = vpop.permute.xlu0 %1133
        %1135 = vrot.lane.b32.xlu0 %v1044, 8
        %v1136 = vpop.permute.xlu0 %1135
        %1137 = vrot.lane.b32.xlu0 %v1047, 8
        %v1138 = vpop.permute.xlu0 %1137
        %1139 = vrot.lane.b32.xlu0 %v1051, 8
        %v1140 = vpop.permute.xlu0 %1139
        %1141 = vrot.lane.b32.xlu0 %v1054, 8
        %v1142 = vpop.permute.xlu0 %1141
        %1143 = vrot.lane.b32.xlu0 %v1058, 8
        %v1144 = vpop.permute.xlu0 %1143
        %1145 = vrot.lane.b32.xlu0 %v1061, 8
        %v1146 = vpop.permute.xlu0 %1145
        %1147 = vrot.lane.b32.xlu0 %v1065, 8
        %v1148 = vpop.permute.xlu0 %1147
        %1149 = vrot.lane.b32.xlu0 %v1068, 8
        %v1150 = vpop.permute.xlu0 %1149
        %1151 = vrot.lane.b32.xlu0 %v1072, 8
        %v1152 = vpop.permute.xlu0 %1151
        %1153 = vrot.lane.b32.xlu0 %v1075, 8
        %v1154 = vpop.permute.xlu0 %1153
        %1155 = vrot.lane.b32.xlu0 %v1079, 8
        %v1156 = vpop.permute.xlu0 %1155
        %1157 = vrot.lane.b32.xlu0 %v1082, 8
        %v1158 = vpop.permute.xlu0 %1157
        %1159 = vrot.lane.b32.xlu0 %v1086, 8
        %v1160 = vpop.permute.xlu0 %1159
        %1161 = vrot.lane.b32.xlu0 %v1089, 8
        %v1162 = vpop.permute.xlu0 %1161
        %1163 = vrot.lane.b32.xlu0 %v1093, 8
        %v1164 = vpop.permute.xlu0 %1163
        %1165 = vrot.lane.b32.xlu0 %v1096, 8
        %v1166 = vpop.permute.xlu0 %1165
        %1167 = vrot.lane.b32.xlu0 %v1100, 8
        %v1168 = vpop.permute.xlu0 %1167
        %1169 = vrot.lane.b32.xlu0 %v1103, 8
        %v1170 = vpop.permute.xlu0 %1169
        %1171 = vrot.lane.b32.xlu0 %v1107, 8
        %v1172 = vpop.permute.xlu0 %1171
        %1173 = vrot.lane.b32.xlu0 %v1110, 8
        %v1174 = vpop.permute.xlu0 %1173
        %vm1207 = vcmask 93248
        %1208 = vst.msk [vmem:[#allocation2] sm:$0xf] %vm1207, %v1112
        %1209 = vst.msk [vmem:[#allocation2 + $0x4] sm:$0xf] %vm1207, %v1114
        %1210 = vst.msk [vmem:[#allocation2 + $0x8] sm:$0xf] %vm1207, %v1116
        %1211 = vst.msk [vmem:[#allocation2 + $0xc] sm:$0xf] %vm1207, %v1118
        %1212 = vst.msk [vmem:[#allocation2 + $0x10] sm:$0xf] %vm1207, %v1120
        %1213 = vst.msk [vmem:[#allocation2 + $0x14] sm:$0xf] %vm1207, %v1122
        %1214 = vst.msk [vmem:[#allocation2 + $0x18] sm:$0xf] %vm1207, %v1124
        %1215 = vst.msk [vmem:[#allocation2 + $0x1c] sm:$0xf] %vm1207, %v1126
        %1216 = vst.msk [vmem:[#allocation2 + $0x20] sm:$0xf] %vm1207, %v1128
        %1217 = vst.msk [vmem:[#allocation2 + $0x24] sm:$0xf] %vm1207, %v1130
        %1218 = vst.msk [vmem:[#allocation2 + $0x28] sm:$0xf] %vm1207, %v1132
        %1219 = vst.msk [vmem:[#allocation2 + $0x2c] sm:$0xf] %vm1207, %v1134
        %1220 = vst.msk [vmem:[#allocation2 + $0x30] sm:$0xf] %vm1207, %v1136
        %1221 = vst.msk [vmem:[#allocation2 + $0x34] sm:$0xf] %vm1207, %v1138
        %1222 = vst.msk [vmem:[#allocation2 + $0x38] sm:$0xf] %vm1207, %v1140
        %1223 = vst.msk [vmem:[#allocation2 + $0x3c] sm:$0xf] %vm1207, %v1142
        %1224 = vst.msk [vmem:[#allocation2 + $0x40] sm:$0xf] %vm1207, %v1144
        %1225 = vst.msk [vmem:[#allocation2 + $0x44] sm:$0xf] %vm1207, %v1146
        %1226 = vst.msk [vmem:[#allocation2 + $0x48] sm:$0xf] %vm1207, %v1148
        %1227 = vst.msk [vmem:[#allocation2 + $0x4c] sm:$0xf] %vm1207, %v1150
        %1228 = vst.msk [vmem:[#allocation2 + $0x50] sm:$0xf] %vm1207, %v1152
        %1229 = vst.msk [vmem:[#allocation2 + $0x54] sm:$0xf] %vm1207, %v1154
        %1230 = vst.msk [vmem:[#allocation2 + $0x58] sm:$0xf] %vm1207, %v1156
        %1231 = vst.msk [vmem:[#allocation2 + $0x5c] sm:$0xf] %vm1207, %v1158
        %1232 = vst.msk [vmem:[#allocation2 + $0x60] sm:$0xf] %vm1207, %v1160
        %1233 = vst.msk [vmem:[#allocation2 + $0x64] sm:$0xf] %vm1207, %v1162
        %1234 = vst.msk [vmem:[#allocation2 + $0x68] sm:$0xf] %vm1207, %v1164
        %1235 = vst.msk [vmem:[#allocation2 + $0x6c] sm:$0xf] %vm1207, %v1166
        %1236 = vst.msk [vmem:[#allocation2 + $0x70] sm:$0xf] %vm1207, %v1168
        %1237 = vst.msk [vmem:[#allocation2 + $0x74] sm:$0xf] %vm1207, %v1170
        %1238 = vst.msk [vmem:[#allocation2 + $0x78] sm:$0xf] %vm1207, %v1172
        %1239 = vst.msk [vmem:[#allocation2 + $0x7c] sm:$0xf] %vm1207, %v1174
        %s1240 = sadd.s32 %s267, 1
        %s1241 = smul.u32 %s1240, 3
        %s1242 = smul.addr %s1241, 4
        %s1243 = scalar_lea.vmem %s248, %s1242
        %v1244 = vld [vmem:[%s1243] sm:$0xf]
        %v1245 = vld [vmem:[%s1243 + $0x4] sm:$0xf]
        %v1246 = vld [vmem:[%s1243 + $0xc] sm:$0xf]
        %v1247 = vld [vmem:[%s1243 + $0x10] sm:$0xf]
        %v1248 = vld [vmem:[%s1243 + $0x18] sm:$0xf]
        %v1249 = vld [vmem:[%s1243 + $0x1c] sm:$0xf]
        %v1250 = vld [vmem:[%s1243 + $0x24] sm:$0xf]
        %v1251 = vld [vmem:[%s1243 + $0x28] sm:$0xf]
        %v1252 = vld [vmem:[%s1243 + $0x30] sm:$0xf]
        %v1253 = vld [vmem:[%s1243 + $0x34] sm:$0xf]
        %v1254 = vld [vmem:[%s1243 + $0x3c] sm:$0xf]
        %v1255 = vld [vmem:[%s1243 + $0x40] sm:$0xf]
        %v1256 = vld [vmem:[%s1243 + $0x48] sm:$0xf]
        %v1257 = vld [vmem:[%s1243 + $0x4c] sm:$0xf]
        %v1258 = vld [vmem:[%s1243 + $0x54] sm:$0xf]
        %v1259 = vld [vmem:[%s1243 + $0x58] sm:$0xf]
        %v1260 = vld [vmem:[%s1243 + $0x60] sm:$0xf]
        %v1261 = vld [vmem:[%s1243 + $0x64] sm:$0xf]
        %v1262 = vld [vmem:[%s1243 + $0x6c] sm:$0xf]
        %v1263 = vld [vmem:[%s1243 + $0x70] sm:$0xf]
        %v1264 = vld [vmem:[%s1243 + $0x78] sm:$0xf]
        %v1265 = vld [vmem:[%s1243 + $0x7c] sm:$0xf]
        %v1266 = vld [vmem:[%s1243 + $0x84] sm:$0xf]
        %v1267 = vld [vmem:[%s1243 + $0x88] sm:$0xf]
        %v1268 = vld [vmem:[%s1243 + $0x90] sm:$0xf]
        %v1269 = vld [vmem:[%s1243 + $0x94] sm:$0xf]
        %v1270 = vld [vmem:[%s1243 + $0x9c] sm:$0xf]
        %v1271 = vld [vmem:[%s1243 + $0xa0] sm:$0xf]
        %v1272 = vld [vmem:[%s1243 + $0xa8] sm:$0xf]
        %v1273 = vld [vmem:[%s1243 + $0xac] sm:$0xf]
        %v1274 = vld [vmem:[%s1243 + $0xb4] sm:$0xf]
        %v1275 = vld [vmem:[%s1243 + $0xb8] sm:$0xf]
        %1308 = vrot.lane.b32.xlu0 %v1244, 12
        %v1309 = vpop.permute.xlu0 %1308
        %1310 = vrot.lane.b32.xlu0 %v1245, 12
        %v1311 = vpop.permute.xlu0 %1310
        %1312 = vrot.lane.b32.xlu0 %v1246, 12
        %v1313 = vpop.permute.xlu0 %1312
        %1314 = vrot.lane.b32.xlu0 %v1247, 12
        %v1315 = vpop.permute.xlu0 %1314
        %1316 = vrot.lane.b32.xlu0 %v1248, 12
        %v1317 = vpop.permute.xlu0 %1316
        %1318 = vrot.lane.b32.xlu0 %v1249, 12
        %v1319 = vpop.permute.xlu0 %1318
        %1320 = vrot.lane.b32.xlu0 %v1250, 12
        %v1321 = vpop.permute.xlu0 %1320
        %1322 = vrot.lane.b32.xlu0 %v1251, 12
        %v1323 = vpop.permute.xlu0 %1322
        %1324 = vrot.lane.b32.xlu0 %v1252, 12
        %v1325 = vpop.permute.xlu0 %1324
        %1326 = vrot.lane.b32.xlu0 %v1253, 12
        %v1327 = vpop.permute.xlu0 %1326
        %1328 = vrot.lane.b32.xlu0 %v1254, 12
        %v1329 = vpop.permute.xlu0 %1328
        %1330 = vrot.lane.b32.xlu0 %v1255, 12
        %v1331 = vpop.permute.xlu0 %1330
        %1332 = vrot.lane.b32.xlu0 %v1256, 12
        %v1333 = vpop.permute.xlu0 %1332
        %1334 = vrot.lane.b32.xlu0 %v1257, 12
        %v1335 = vpop.permute.xlu0 %1334
        %1336 = vrot.lane.b32.xlu0 %v1258, 12
        %v1337 = vpop.permute.xlu0 %1336
        %1338 = vrot.lane.b32.xlu0 %v1259, 12
        %v1339 = vpop.permute.xlu0 %1338
        %1340 = vrot.lane.b32.xlu0 %v1260, 12
        %v1341 = vpop.permute.xlu0 %1340
        %1342 = vrot.lane.b32.xlu0 %v1261, 12
        %v1343 = vpop.permute.xlu0 %1342
        %1344 = vrot.lane.b32.xlu0 %v1262, 12
        %v1345 = vpop.permute.xlu0 %1344
        %1346 = vrot.lane.b32.xlu0 %v1263, 12
        %v1347 = vpop.permute.xlu0 %1346
        %1348 = vrot.lane.b32.xlu0 %v1264, 12
        %v1349 = vpop.permute.xlu0 %1348
        %1350 = vrot.lane.b32.xlu0 %v1265, 12
        %v1351 = vpop.permute.xlu0 %1350
        %1352 = vrot.lane.b32.xlu0 %v1266, 12
        %v1353 = vpop.permute.xlu0 %1352
        %1354 = vrot.lane.b32.xlu0 %v1267, 12
        %v1355 = vpop.permute.xlu0 %1354
        %1356 = vrot.lane.b32.xlu0 %v1268, 12
        %v1357 = vpop.permute.xlu0 %1356
        %1358 = vrot.lane.b32.xlu0 %v1269, 12
        %v1359 = vpop.permute.xlu0 %1358
        %1360 = vrot.lane.b32.xlu0 %v1270, 12
        %v1361 = vpop.permute.xlu0 %1360
        %1362 = vrot.lane.b32.xlu0 %v1271, 12
        %v1363 = vpop.permute.xlu0 %1362
        %1364 = vrot.lane.b32.xlu0 %v1272, 12
        %v1365 = vpop.permute.xlu0 %1364
        %1366 = vrot.lane.b32.xlu0 %v1273, 12
        %v1367 = vpop.permute.xlu0 %1366
        %1368 = vrot.lane.b32.xlu0 %v1274, 12
        %v1369 = vpop.permute.xlu0 %1368
        %1370 = vrot.lane.b32.xlu0 %v1275, 12
        %v1371 = vpop.permute.xlu0 %1370
        %vm1404 = vcmask 126048
        %1405 = vst.msk [vmem:[#allocation2] sm:$0xf] %vm1404, %v1309
        %1406 = vst.msk [vmem:[#allocation2 + $0x4] sm:$0xf] %vm1404, %v1311
        %1407 = vst.msk [vmem:[#allocation2 + $0x8] sm:$0xf] %vm1404, %v1313
        %1408 = vst.msk [vmem:[#allocation2 + $0xc] sm:$0xf] %vm1404, %v1315
        %1409 = vst.msk [vmem:[#allocation2 + $0x10] sm:$0xf] %vm1404, %v1317
        %1410 = vst.msk [vmem:[#allocation2 + $0x14] sm:$0xf] %vm1404, %v1319
        %1411 = vst.msk [vmem:[#allocation2 + $0x18] sm:$0xf] %vm1404, %v1321
        %1412 = vst.msk [vmem:[#allocation2 + $0x1c] sm:$0xf] %vm1404, %v1323
        %1413 = vst.msk [vmem:[#allocation2 + $0x20] sm:$0xf] %vm1404, %v1325
        %1414 = vst.msk [vmem:[#allocation2 + $0x24] sm:$0xf] %vm1404, %v1327
        %1415 = vst.msk [vmem:[#allocation2 + $0x28] sm:$0xf] %vm1404, %v1329
        %1416 = vst.msk [vmem:[#allocation2 + $0x2c] sm:$0xf] %vm1404, %v1331
        %1417 = vst.msk [vmem:[#allocation2 + $0x30] sm:$0xf] %vm1404, %v1333
        %1418 = vst.msk [vmem:[#allocation2 + $0x34] sm:$0xf] %vm1404, %v1335
        %1419 = vst.msk [vmem:[#allocation2 + $0x38] sm:$0xf] %vm1404, %v1337
        %1420 = vst.msk [vmem:[#allocation2 + $0x3c] sm:$0xf] %vm1404, %v1339
        %1421 = vst.msk [vmem:[#allocation2 + $0x40] sm:$0xf] %vm1404, %v1341
        %1422 = vst.msk [vmem:[#allocation2 + $0x44] sm:$0xf] %vm1404, %v1343
        %1423 = vst.msk [vmem:[#allocation2 + $0x48] sm:$0xf] %vm1404, %v1345
        %1424 = vst.msk [vmem:[#allocation2 + $0x4c] sm:$0xf] %vm1404, %v1347
        %1425 = vst.msk [vmem:[#allocation2 + $0x50] sm:$0xf] %vm1404, %v1349
        %1426 = vst.msk [vmem:[#allocation2 + $0x54] sm:$0xf] %vm1404, %v1351
        %1427 = vst.msk [vmem:[#allocation2 + $0x58] sm:$0xf] %vm1404, %v1353
        %1428 = vst.msk [vmem:[#allocation2 + $0x5c] sm:$0xf] %vm1404, %v1355
        %1429 = vst.msk [vmem:[#allocation2 + $0x60] sm:$0xf] %vm1404, %v1357
        %1430 = vst.msk [vmem:[#allocation2 + $0x64] sm:$0xf] %vm1404, %v1359
        %1431 = vst.msk [vmem:[#allocation2 + $0x68] sm:$0xf] %vm1404, %v1361
        %1432 = vst.msk [vmem:[#allocation2 + $0x6c] sm:$0xf] %vm1404, %v1363
        %1433 = vst.msk [vmem:[#allocation2 + $0x70] sm:$0xf] %vm1404, %v1365
        %1434 = vst.msk [vmem:[#allocation2 + $0x74] sm:$0xf] %vm1404, %v1367
        %1435 = vst.msk [vmem:[#allocation2 + $0x78] sm:$0xf] %vm1404, %v1369
        %1436 = vst.msk [vmem:[#allocation2 + $0x7c] sm:$0xf] %vm1404, %v1371
        %v1437 = vld [vmem:[%s1243] sm:$0xf]
        %v1438 = vld [vmem:[%s1243 + $0x4] sm:$0xf]
        %v1439 = vld [vmem:[%s1243 + $0x8] sm:$0x1]
        %v1440 = vld [vmem:[%s1243 + $0xc] sm:$0xf]
        %v1441 = vld [vmem:[%s1243 + $0x10] sm:$0xf]
        %v1442 = vld [vmem:[%s1243 + $0x14] sm:$0x1]
        %v1443 = vld [vmem:[%s1243 + $0x18] sm:$0xf]
        %v1444 = vld [vmem:[%s1243 + $0x1c] sm:$0xf]
        %v1445 = vld [vmem:[%s1243 + $0x20] sm:$0x1]
        %v1446 = vld [vmem:[%s1243 + $0x24] sm:$0xf]
        %v1447 = vld [vmem:[%s1243 + $0x28] sm:$0xf]
        %v1448 = vld [vmem:[%s1243 + $0x2c] sm:$0x1]
        %v1449 = vld [vmem:[%s1243 + $0x30] sm:$0xf]
        %v1450 = vld [vmem:[%s1243 + $0x34] sm:$0xf]
        %v1451 = vld [vmem:[%s1243 + $0x38] sm:$0x1]
        %v1452 = vld [vmem:[%s1243 + $0x3c] sm:$0xf]
        %v1453 = vld [vmem:[%s1243 + $0x40] sm:$0xf]
        %v1454 = vld [vmem:[%s1243 + $0x44] sm:$0x1]
        %v1455 = vld [vmem:[%s1243 + $0x48] sm:$0xf]
        %v1456 = vld [vmem:[%s1243 + $0x4c] sm:$0xf]
        %v1457 = vld [vmem:[%s1243 + $0x50] sm:$0x1]
        %v1458 = vld [vmem:[%s1243 + $0x54] sm:$0xf]
        %v1459 = vld [vmem:[%s1243 + $0x58] sm:$0xf]
        %v1460 = vld [vmem:[%s1243 + $0x5c] sm:$0x1]
        %v1461 = vld [vmem:[%s1243 + $0x60] sm:$0xf]
        %v1462 = vld [vmem:[%s1243 + $0x64] sm:$0xf]
        %v1463 = vld [vmem:[%s1243 + $0x68] sm:$0x1]
        %v1464 = vld [vmem:[%s1243 + $0x6c] sm:$0xf]
        %v1465 = vld [vmem:[%s1243 + $0x70] sm:$0xf]
        %v1466 = vld [vmem:[%s1243 + $0x74] sm:$0x1]
        %v1467 = vld [vmem:[%s1243 + $0x78] sm:$0xf]
        %v1468 = vld [vmem:[%s1243 + $0x7c] sm:$0xf]
        %v1469 = vld [vmem:[%s1243 + $0x80] sm:$0x1]
        %v1470 = vld [vmem:[%s1243 + $0x84] sm:$0xf]
        %v1471 = vld [vmem:[%s1243 + $0x88] sm:$0xf]
        %v1472 = vld [vmem:[%s1243 + $0x8c] sm:$0x1]
        %v1473 = vld [vmem:[%s1243 + $0x90] sm:$0xf]
        %v1474 = vld [vmem:[%s1243 + $0x94] sm:$0xf]
        %v1475 = vld [vmem:[%s1243 + $0x98] sm:$0x1]
        %v1476 = vld [vmem:[%s1243 + $0x9c] sm:$0xf]
        %v1477 = vld [vmem:[%s1243 + $0xa0] sm:$0xf]
        %v1478 = vld [vmem:[%s1243 + $0xa4] sm:$0x1]
        %v1479 = vld [vmem:[%s1243 + $0xa8] sm:$0xf]
        %v1480 = vld [vmem:[%s1243 + $0xac] sm:$0xf]
        %v1481 = vld [vmem:[%s1243 + $0xb0] sm:$0x1]
        %v1482 = vld [vmem:[%s1243 + $0xb4] sm:$0xf]
        %v1483 = vld [vmem:[%s1243 + $0xb8] sm:$0xf]
        %v1484 = vld [vmem:[%s1243 + $0xbc] sm:$0x1]
        %v1486 = vshrl.u32 %v1437, 16
        %v1488 = vrot.slane %v1486, 4
        %v1489 = vshll.u32 %v1437, 16
        %v1491 = vrot.slane %v1489, 5
        %v1492 = vor.u32 %v1488, %v1491
        %v1493 = vrot.slane %v1492, 4
        %v1495 = vshll.u32 %v1438, 16
        %v1497 = vrot.slane %v1495, 5
        %v1498 = vsel %vm386, %v1493, %v1497
        %v1499 = vshrl.u32 %v1438, 16
        %v1501 = vrot.slane %v1499, 4
        %v1502 = vor.u32 %v1501, %v1497
        %v1503 = vrot.slane %v1502, 4
        %v1505 = vshll.u32 %v1439, 16
        %v1507 = vrot.slane %v1505, 5
        %v1508 = vsel %vm386, %v1503, %v1507
        %v1510 = vshrl.u32 %v1440, 16
        %v1512 = vrot.slane %v1510, 4
        %v1513 = vshll.u32 %v1440, 16
        %v1515 = vrot.slane %v1513, 5
        %v1516 = vor.u32 %v1512, %v1515
        %v1517 = vrot.slane %v1516, 4
        %v1519 = vshll.u32 %v1441, 16
        %v1521 = vrot.slane %v1519, 5
        %v1522 = vsel %vm386, %v1517, %v1521
        %v1523 = vshrl.u32 %v1441, 16
        %v1525 = vrot.slane %v1523, 4
        %v1526 = vor.u32 %v1525, %v1521
        %v1527 = vrot.slane %v1526, 4
        %v1529 = vshll.u32 %v1442, 16
        %v1531 = vrot.slane %v1529, 5
        %v1532 = vsel %vm386, %v1527, %v1531
        %v1534 = vshrl.u32 %v1443, 16
        %v1536 = vrot.slane %v1534, 4
        %v1537 = vshll.u32 %v1443, 16
        %v1539 = vrot.slane %v1537, 5
        %v1540 = vor.u32 %v1536, %v1539
        %v1541 = vrot.slane %v1540, 4
        %v1543 = vshll.u32 %v1444, 16
        %v1545 = vrot.slane %v1543, 5
        %v1546 = vsel %vm386, %v1541, %v1545
        %v1547 = vshrl.u32 %v1444, 16
        %v1549 = vrot.slane %v1547, 4
        %v1550 = vor.u32 %v1549, %v1545
        %v1551 = vrot.slane %v1550, 4
        %v1553 = vshll.u32 %v1445, 16
        %v1555 = vrot.slane %v1553, 5
        %v1556 = vsel %vm386, %v1551, %v1555
        %v1558 = vshrl.u32 %v1446, 16
        %v1560 = vrot.slane %v1558, 4
        %v1561 = vshll.u32 %v1446, 16
        %v1563 = vrot.slane %v1561, 5
        %v1564 = vor.u32 %v1560, %v1563
        %v1565 = vrot.slane %v1564, 4
        %v1567 = vshll.u32 %v1447, 16
        %v1569 = vrot.slane %v1567, 5
        %v1570 = vsel %vm386, %v1565, %v1569
        %v1571 = vshrl.u32 %v1447, 16
        %v1573 = vrot.slane %v1571, 4
        %v1574 = vor.u32 %v1573, %v1569
        %v1575 = vrot.slane %v1574, 4
        %v1577 = vshll.u32 %v1448, 16
        %v1579 = vrot.slane %v1577, 5
        %v1580 = vsel %vm386, %v1575, %v1579
        %v1582 = vshrl.u32 %v1449, 16
        %v1584 = vrot.slane %v1582, 4
        %v1585 = vshll.u32 %v1449, 16
        %v1587 = vrot.slane %v1585, 5
        %v1588 = vor.u32 %v1584, %v1587
        %v1589 = vrot.slane %v1588, 4
        %v1591 = vshll.u32 %v1450, 16
        %v1593 = vrot.slane %v1591, 5
        %v1594 = vsel %vm386, %v1589, %v1593
        %v1595 = vshrl.u32 %v1450, 16
        %v1597 = vrot.slane %v1595, 4
        %v1598 = vor.u32 %v1597, %v1593
        %v1599 = vrot.slane %v1598, 4
        %v1601 = vshll.u32 %v1451, 16
        %v1603 = vrot.slane %v1601, 5
        %v1604 = vsel %vm386, %v1599, %v1603
        %v1606 = vshrl.u32 %v1452, 16
        %v1608 = vrot.slane %v1606, 4
        %v1609 = vshll.u32 %v1452, 16
        %v1611 = vrot.slane %v1609, 5
        %v1612 = vor.u32 %v1608, %v1611
        %v1613 = vrot.slane %v1612, 4
        %v1615 = vshll.u32 %v1453, 16
        %v1617 = vrot.slane %v1615, 5
        %v1618 = vsel %vm386, %v1613, %v1617
        %v1619 = vshrl.u32 %v1453, 16
        %v1621 = vrot.slane %v1619, 4
        %v1622 = vor.u32 %v1621, %v1617
        %v1623 = vrot.slane %v1622, 4
        %v1625 = vshll.u32 %v1454, 16
        %v1627 = vrot.slane %v1625, 5
        %v1628 = vsel %vm386, %v1623, %v1627
        %v1630 = vshrl.u32 %v1455, 16
        %v1632 = vrot.slane %v1630, 4
        %v1633 = vshll.u32 %v1455, 16
        %v1635 = vrot.slane %v1633, 5
        %v1636 = vor.u32 %v1632, %v1635
        %v1637 = vrot.slane %v1636, 4
        %v1639 = vshll.u32 %v1456, 16
        %v1641 = vrot.slane %v1639, 5
        %v1642 = vsel %vm386, %v1637, %v1641
        %v1643 = vshrl.u32 %v1456, 16
        %v1645 = vrot.slane %v1643, 4
        %v1646 = vor.u32 %v1645, %v1641
        %v1647 = vrot.slane %v1646, 4
        %v1649 = vshll.u32 %v1457, 16
        %v1651 = vrot.slane %v1649, 5
        %v1652 = vsel %vm386, %v1647, %v1651
        %v1654 = vshrl.u32 %v1458, 16
        %v1656 = vrot.slane %v1654, 4
        %v1657 = vshll.u32 %v1458, 16
        %v1659 = vrot.slane %v1657, 5
        %v1660 = vor.u32 %v1656, %v1659
        %v1661 = vrot.slane %v1660, 4
        %v1663 = vshll.u32 %v1459, 16
        %v1665 = vrot.slane %v1663, 5
        %v1666 = vsel %vm386, %v1661, %v1665
        %v1667 = vshrl.u32 %v1459, 16
        %v1669 = vrot.slane %v1667, 4
        %v1670 = vor.u32 %v1669, %v1665
        %v1671 = vrot.slane %v1670, 4
        %v1673 = vshll.u32 %v1460, 16
        %v1675 = vrot.slane %v1673, 5
        %v1676 = vsel %vm386, %v1671, %v1675
        %v1678 = vshrl.u32 %v1461, 16
        %v1680 = vrot.slane %v1678, 4
        %v1681 = vshll.u32 %v1461, 16
        %v1683 = vrot.slane %v1681, 5
        %v1684 = vor.u32 %v1680, %v1683
        %v1685 = vrot.slane %v1684, 4
        %v1687 = vshll.u32 %v1462, 16
        %v1689 = vrot.slane %v1687, 5
        %v1690 = vsel %vm386, %v1685, %v1689
        %v1691 = vshrl.u32 %v1462, 16
        %v1693 = vrot.slane %v1691, 4
        %v1694 = vor.u32 %v1693, %v1689
        %v1695 = vrot.slane %v1694, 4
        %v1697 = vshll.u32 %v1463, 16
        %v1699 = vrot.slane %v1697, 5
        %v1700 = vsel %vm386, %v1695, %v1699
        %v1702 = vshrl.u32 %v1464, 16
        %v1704 = vrot.slane %v1702, 4
        %v1705 = vshll.u32 %v1464, 16
        %v1707 = vrot.slane %v1705, 5
        %v1708 = vor.u32 %v1704, %v1707
        %v1709 = vrot.slane %v1708, 4
        %v1711 = vshll.u32 %v1465, 16
        %v1713 = vrot.slane %v1711, 5
        %v1714 = vsel %vm386, %v1709, %v1713
        %v1715 = vshrl.u32 %v1465, 16
        %v1717 = vrot.slane %v1715, 4
        %v1718 = vor.u32 %v1717, %v1713
        %v1719 = vrot.slane %v1718, 4
        %v1721 = vshll.u32 %v1466, 16
        %v1723 = vrot.slane %v1721, 5
        %v1724 = vsel %vm386, %v1719, %v1723
        %v1726 = vshrl.u32 %v1467, 16
        %v1728 = vrot.slane %v1726, 4
        %v1729 = vshll.u32 %v1467, 16
        %v1731 = vrot.slane %v1729, 5
        %v1732 = vor.u32 %v1728, %v1731
        %v1733 = vrot.slane %v1732, 4
        %v1735 = vshll.u32 %v1468, 16
        %v1737 = vrot.slane %v1735, 5
        %v1738 = vsel %vm386, %v1733, %v1737
        %v1739 = vshrl.u32 %v1468, 16
        %v1741 = vrot.slane %v1739, 4
        %v1742 = vor.u32 %v1741, %v1737
        %v1743 = vrot.slane %v1742, 4
        %v1745 = vshll.u32 %v1469, 16
        %v1747 = vrot.slane %v1745, 5
        %v1748 = vsel %vm386, %v1743, %v1747
        %v1750 = vshrl.u32 %v1470, 16
        %v1752 = vrot.slane %v1750, 4
        %v1753 = vshll.u32 %v1470, 16
        %v1755 = vrot.slane %v1753, 5
        %v1756 = vor.u32 %v1752, %v1755
        %v1757 = vrot.slane %v1756, 4
        %v1759 = vshll.u32 %v1471, 16
        %v1761 = vrot.slane %v1759, 5
        %v1762 = vsel %vm386, %v1757, %v1761
        %v1763 = vshrl.u32 %v1471, 16
        %v1765 = vrot.slane %v1763, 4
        %v1766 = vor.u32 %v1765, %v1761
        %v1767 = vrot.slane %v1766, 4
        %v1769 = vshll.u32 %v1472, 16
        %v1771 = vrot.slane %v1769, 5
        %v1772 = vsel %vm386, %v1767, %v1771
        %v1774 = vshrl.u32 %v1473, 16
        %v1776 = vrot.slane %v1774, 4
        %v1777 = vshll.u32 %v1473, 16
        %v1779 = vrot.slane %v1777, 5
        %v1780 = vor.u32 %v1776, %v1779
        %v1781 = vrot.slane %v1780, 4
        %v1783 = vshll.u32 %v1474, 16
        %v1785 = vrot.slane %v1783, 5
        %v1786 = vsel %vm386, %v1781, %v1785
        %v1787 = vshrl.u32 %v1474, 16
        %v1789 = vrot.slane %v1787, 4
        %v1790 = vor.u32 %v1789, %v1785
        %v1791 = vrot.slane %v1790, 4
        %v1793 = vshll.u32 %v1475, 16
        %v1795 = vrot.slane %v1793, 5
        %v1796 = vsel %vm386, %v1791, %v1795
        %v1798 = vshrl.u32 %v1476, 16
        %v1800 = vrot.slane %v1798, 4
        %v1801 = vshll.u32 %v1476, 16
        %v1803 = vrot.slane %v1801, 5
        %v1804 = vor.u32 %v1800, %v1803
        %v1805 = vrot.slane %v1804, 4
        %v1807 = vshll.u32 %v1477, 16
        %v1809 = vrot.slane %v1807, 5
        %v1810 = vsel %vm386, %v1805, %v1809
        %v1811 = vshrl.u32 %v1477, 16
        %v1813 = vrot.slane %v1811, 4
        %v1814 = vor.u32 %v1813, %v1809
        %v1815 = vrot.slane %v1814, 4
        %v1817 = vshll.u32 %v1478, 16
        %v1819 = vrot.slane %v1817, 5
        %v1820 = vsel %vm386, %v1815, %v1819
        %v1822 = vshrl.u32 %v1479, 16
        %v1824 = vrot.slane %v1822, 4
        %v1825 = vshll.u32 %v1479, 16
        %v1827 = vrot.slane %v1825, 5
        %v1828 = vor.u32 %v1824, %v1827
        %v1829 = vrot.slane %v1828, 4
        %v1831 = vshll.u32 %v1480, 16
        %v1833 = vrot.slane %v1831, 5
        %v1834 = vsel %vm386, %v1829, %v1833
        %v1835 = vshrl.u32 %v1480, 16
        %v1837 = vrot.slane %v1835, 4
        %v1838 = vor.u32 %v1837, %v1833
        %v1839 = vrot.slane %v1838, 4
        %v1841 = vshll.u32 %v1481, 16
        %v1843 = vrot.slane %v1841, 5
        %v1844 = vsel %vm386, %v1839, %v1843
        %v1846 = vshrl.u32 %v1482, 16
        %v1848 = vrot.slane %v1846, 4
        %v1849 = vshll.u32 %v1482, 16
        %v1851 = vrot.slane %v1849, 5
        %v1852 = vor.u32 %v1848, %v1851
        %v1853 = vrot.slane %v1852, 4
        %v1855 = vshll.u32 %v1483, 16
        %v1857 = vrot.slane %v1855, 5
        %v1858 = vsel %vm386, %v1853, %v1857
        %v1859 = vshrl.u32 %v1483, 16
        %v1861 = vrot.slane %v1859, 4
        %v1862 = vor.u32 %v1861, %v1857
        %v1863 = vrot.slane %v1862, 4
        %v1865 = vshll.u32 %v1484, 16
        %v1867 = vrot.slane %v1865, 5
        %v1868 = vsel %vm386, %v1863, %v1867
        %1869 = vrot.lane.b32.xlu0 %v1498, 16
        %v1870 = vpop.permute.xlu0 %1869
        %1871 = vrot.lane.b32.xlu0 %v1508, 16
        %v1872 = vpop.permute.xlu0 %1871
        %1873 = vrot.lane.b32.xlu0 %v1522, 16
        %v1874 = vpop.permute.xlu0 %1873
        %1875 = vrot.lane.b32.xlu0 %v1532, 16
        %v1876 = vpop.permute.xlu0 %1875
        %1877 = vrot.lane.b32.xlu0 %v1546, 16
        %v1878 = vpop.permute.xlu0 %1877
        %1879 = vrot.lane.b32.xlu0 %v1556, 16
        %v1880 = vpop.permute.xlu0 %1879
        %1881 = vrot.lane.b32.xlu0 %v1570, 16
        %v1882 = vpop.permute.xlu0 %1881
        %1883 = vrot.lane.b32.xlu0 %v1580, 16
        %v1884 = vpop.permute.xlu0 %1883
        %1885 = vrot.lane.b32.xlu0 %v1594, 16
        %v1886 = vpop.permute.xlu0 %1885
        %1887 = vrot.lane.b32.xlu0 %v1604, 16
        %v1888 = vpop.permute.xlu0 %1887
        %1889 = vrot.lane.b32.xlu0 %v1618, 16
        %v1890 = vpop.permute.xlu0 %1889
        %1891 = vrot.lane.b32.xlu0 %v1628, 16
        %v1892 = vpop.permute.xlu0 %1891
        %1893 = vrot.lane.b32.xlu0 %v1642, 16
        %v1894 = vpop.permute.xlu0 %1893
        %1895 = vrot.lane.b32.xlu0 %v1652, 16
        %v1896 = vpop.permute.xlu0 %1895
        %1897 = vrot.lane.b32.xlu0 %v1666, 16
        %v1898 = vpop.permute.xlu0 %1897
        %1899 = vrot.lane.b32.xlu0 %v1676, 16
        %v1900 = vpop.permute.xlu0 %1899
        %1901 = vrot.lane.b32.xlu0 %v1690, 16
        %v1902 = vpop.permute.xlu0 %1901
        %1903 = vrot.lane.b32.xlu0 %v1700, 16
        %v1904 = vpop.permute.xlu0 %1903
        %1905 = vrot.lane.b32.xlu0 %v1714, 16
        %v1906 = vpop.permute.xlu0 %1905
        %1907 = vrot.lane.b32.xlu0 %v1724, 16
        %v1908 = vpop.permute.xlu0 %1907
        %1909 = vrot.lane.b32.xlu0 %v1738, 16
        %v1910 = vpop.permute.xlu0 %1909
        %1911 = vrot.lane.b32.xlu0 %v1748, 16
        %v1912 = vpop.permute.xlu0 %1911
        %1913 = vrot.lane.b32.xlu0 %v1762, 16
        %v1914 = vpop.permute.xlu0 %1913
        %1915 = vrot.lane.b32.xlu0 %v1772, 16
        %v1916 = vpop.permute.xlu0 %1915
        %1917 = vrot.lane.b32.xlu0 %v1786, 16
        %v1918 = vpop.permute.xlu0 %1917
        %1919 = vrot.lane.b32.xlu0 %v1796, 16
        %v1920 = vpop.permute.xlu0 %1919
        %1921 = vrot.lane.b32.xlu0 %v1810, 16
        %v1922 = vpop.permute.xlu0 %1921
        %1923 = vrot.lane.b32.xlu0 %v1820, 16
        %v1924 = vpop.permute.xlu0 %1923
        %1925 = vrot.lane.b32.xlu0 %v1834, 16
        %v1926 = vpop.permute.xlu0 %1925
        %1927 = vrot.lane.b32.xlu0 %v1844, 16
        %v1928 = vpop.permute.xlu0 %1927
        %1929 = vrot.lane.b32.xlu0 %v1858, 16
        %v1930 = vpop.permute.xlu0 %1929
        %1931 = vrot.lane.b32.xlu0 %v1868, 16
        %v1932 = vpop.permute.xlu0 %1931
        %vm1965 = vcmask 158848
        %1966 = vst.msk [vmem:[#allocation2] sm:$0xf] %vm1965, %v1870
        %1967 = vst.msk [vmem:[#allocation2 + $0x4] sm:$0xf] %vm1965, %v1872
        %1968 = vst.msk [vmem:[#allocation2 + $0x8] sm:$0xf] %vm1965, %v1874
        %1969 = vst.msk [vmem:[#allocation2 + $0xc] sm:$0xf] %vm1965, %v1876
        %1970 = vst.msk [vmem:[#allocation2 + $0x10] sm:$0xf] %vm1965, %v1878
        %1971 = vst.msk [vmem:[#allocation2 + $0x14] sm:$0xf] %vm1965, %v1880
        %1972 = vst.msk [vmem:[#allocation2 + $0x18] sm:$0xf] %vm1965, %v1882
        %1973 = vst.msk [vmem:[#allocation2 + $0x1c] sm:$0xf] %vm1965, %v1884
        %1974 = vst.msk [vmem:[#allocation2 + $0x20] sm:$0xf] %vm1965, %v1886
        %1975 = vst.msk [vmem:[#allocation2 + $0x24] sm:$0xf] %vm1965, %v1888
        %1976 = vst.msk [vmem:[#allocation2 + $0x28] sm:$0xf] %vm1965, %v1890
        %1977 = vst.msk [vmem:[#allocation2 + $0x2c] sm:$0xf] %vm1965, %v1892
        %1978 = vst.msk [vmem:[#allocation2 + $0x30] sm:$0xf] %vm1965, %v1894
        %1979 = vst.msk [vmem:[#allocation2 + $0x34] sm:$0xf] %vm1965, %v1896
        %1980 = vst.msk [vmem:[#allocation2 + $0x38] sm:$0xf] %vm1965, %v1898
        %1981 = vst.msk [vmem:[#allocation2 + $0x3c] sm:$0xf] %vm1965, %v1900
        %1982 = vst.msk [vmem:[#allocation2 + $0x40] sm:$0xf] %vm1965, %v1902
        %1983 = vst.msk [vmem:[#allocation2 + $0x44] sm:$0xf] %vm1965, %v1904
        %1984 = vst.msk [vmem:[#allocation2 + $0x48] sm:$0xf] %vm1965, %v1906
        %1985 = vst.msk [vmem:[#allocation2 + $0x4c] sm:$0xf] %vm1965, %v1908
        %1986 = vst.msk [vmem:[#allocation2 + $0x50] sm:$0xf] %vm1965, %v1910
        %1987 = vst.msk [vmem:[#allocation2 + $0x54] sm:$0xf] %vm1965, %v1912
        %1988 = vst.msk [vmem:[#allocation2 + $0x58] sm:$0xf] %vm1965, %v1914
        %1989 = vst.msk [vmem:[#allocation2 + $0x5c] sm:$0xf] %vm1965, %v1916
        %1990 = vst.msk [vmem:[#allocation2 + $0x60] sm:$0xf] %vm1965, %v1918
        %1991 = vst.msk [vmem:[#allocation2 + $0x64] sm:$0xf] %vm1965, %v1920
        %1992 = vst.msk [vmem:[#allocation2 + $0x68] sm:$0xf] %vm1965, %v1922
        %1993 = vst.msk [vmem:[#allocation2 + $0x6c] sm:$0xf] %vm1965, %v1924
        %1994 = vst.msk [vmem:[#allocation2 + $0x70] sm:$0xf] %vm1965, %v1926
        %1995 = vst.msk [vmem:[#allocation2 + $0x74] sm:$0xf] %vm1965, %v1928
        %1996 = vst.msk [vmem:[#allocation2 + $0x78] sm:$0xf] %vm1965, %v1930
        %1997 = vst.msk [vmem:[#allocation2 + $0x7c] sm:$0xf] %vm1965, %v1932
        %v1998 = vld [vmem:[%s1243] sm:$0xe]
        %v1999 = vld [vmem:[%s1243 + $0x4] sm:$0xf]
        %v2000 = vld [vmem:[%s1243 + $0x8] sm:$0x1]
        %v2001 = vld [vmem:[%s1243 + $0xc] sm:$0xe]
        %v2002 = vld [vmem:[%s1243 + $0x10] sm:$0xf]
        %v2003 = vld [vmem:[%s1243 + $0x14] sm:$0x1]
        %v2004 = vld [vmem:[%s1243 + $0x18] sm:$0xe]
        %v2005 = vld [vmem:[%s1243 + $0x1c] sm:$0xf]
        %v2006 = vld [vmem:[%s1243 + $0x20] sm:$0x1]
        %v2007 = vld [vmem:[%s1243 + $0x24] sm:$0xe]
        %v2008 = vld [vmem:[%s1243 + $0x28] sm:$0xf]
        %v2009 = vld [vmem:[%s1243 + $0x2c] sm:$0x1]
        %v2010 = vld [vmem:[%s1243 + $0x30] sm:$0xe]
        %v2011 = vld [vmem:[%s1243 + $0x34] sm:$0xf]
        %v2012 = vld [vmem:[%s1243 + $0x38] sm:$0x1]
        %v2013 = vld [vmem:[%s1243 + $0x3c] sm:$0xe]
        %v2014 = vld [vmem:[%s1243 + $0x40] sm:$0xf]
        %v2015 = vld [vmem:[%s1243 + $0x44] sm:$0x1]
        %v2016 = vld [vmem:[%s1243 + $0x48] sm:$0xe]
        %v2017 = vld [vmem:[%s1243 + $0x4c] sm:$0xf]
        %v2018 = vld [vmem:[%s1243 + $0x50] sm:$0x1]
        %v2019 = vld [vmem:[%s1243 + $0x54] sm:$0xe]
        %v2020 = vld [vmem:[%s1243 + $0x58] sm:$0xf]
        %v2021 = vld [vmem:[%s1243 + $0x5c] sm:$0x1]
        %v2022 = vld [vmem:[%s1243 + $0x60] sm:$0xe]
        %v2023 = vld [vmem:[%s1243 + $0x64] sm:$0xf]
        %v2024 = vld [vmem:[%s1243 + $0x68] sm:$0x1]
        %v2025 = vld [vmem:[%s1243 + $0x6c] sm:$0xe]
        %v2026 = vld [vmem:[%s1243 + $0x70] sm:$0xf]
        %v2027 = vld [vmem:[%s1243 + $0x74] sm:$0x1]
        %v2028 = vld [vmem:[%s1243 + $0x78] sm:$0xe]
        %v2029 = vld [vmem:[%s1243 + $0x7c] sm:$0xf]
        %v2030 = vld [vmem:[%s1243 + $0x80] sm:$0x1]
        %v2031 = vld [vmem:[%s1243 + $0x84] sm:$0xe]
        %v2032 = vld [vmem:[%s1243 + $0x88] sm:$0xf]
        %v2033 = vld [vmem:[%s1243 + $0x8c] sm:$0x1]
        %v2034 = vld [vmem:[%s1243 + $0x90] sm:$0xe]
        %v2035 = vld [vmem:[%s1243 + $0x94] sm:$0xf]
        %v2036 = vld [vmem:[%s1243 + $0x98] sm:$0x1]
        %v2037 = vld [vmem:[%s1243 + $0x9c] sm:$0xe]
        %v2038 = vld [vmem:[%s1243 + $0xa0] sm:$0xf]
        %v2039 = vld [vmem:[%s1243 + $0xa4] sm:$0x1]
        %v2040 = vld [vmem:[%s1243 + $0xa8] sm:$0xe]
        %v2041 = vld [vmem:[%s1243 + $0xac] sm:$0xf]
        %v2042 = vld [vmem:[%s1243 + $0xb0] sm:$0x1]
        %v2043 = vld [vmem:[%s1243 + $0xb4] sm:$0xe]
        %v2044 = vld [vmem:[%s1243 + $0xb8] sm:$0xf]
        %v2045 = vld [vmem:[%s1243 + $0xbc] sm:$0x1]
        %v2094 = vrot.slane %v1998, 5
        %v2095 = vrot.slane %v2094, 4
        %v2096 = vrot.slane %v1999, 5
        %v2097 = vsel %vm998, %v2095, %v2096
        %v2098 = vrot.slane %v2096, 4
        %v2099 = vrot.slane %v2000, 5
        %v2100 = vsel %vm998, %v2098, %v2099
        %v2101 = vrot.slane %v2001, 5
        %v2102 = vrot.slane %v2101, 4
        %v2103 = vrot.slane %v2002, 5
        %v2104 = vsel %vm998, %v2102, %v2103
        %v2105 = vrot.slane %v2103, 4
        %v2106 = vrot.slane %v2003, 5
        %v2107 = vsel %vm998, %v2105, %v2106
        %v2108 = vrot.slane %v2004, 5
        %v2109 = vrot.slane %v2108, 4
        %v2110 = vrot.slane %v2005, 5
        %v2111 = vsel %vm998, %v2109, %v2110
        %v2112 = vrot.slane %v2110, 4
        %v2113 = vrot.slane %v2006, 5
        %v2114 = vsel %vm998, %v2112, %v2113
        %v2115 = vrot.slane %v2007, 5
        %v2116 = vrot.slane %v2115, 4
        %v2117 = vrot.slane %v2008, 5
        %v2118 = vsel %vm998, %v2116, %v2117
        %v2119 = vrot.slane %v2117, 4
        %v2120 = vrot.slane %v2009, 5
        %v2121 = vsel %vm998, %v2119, %v2120
        %v2122 = vrot.slane %v2010, 5
        %v2123 = vrot.slane %v2122, 4
        %v2124 = vrot.slane %v2011, 5
        %v2125 = vsel %vm998, %v2123, %v2124
        %v2126 = vrot.slane %v2124, 4
        %v2127 = vrot.slane %v2012, 5
        %v2128 = vsel %vm998, %v2126, %v2127
        %v2129 = vrot.slane %v2013, 5
        %v2130 = vrot.slane %v2129, 4
        %v2131 = vrot.slane %v2014, 5
        %v2132 = vsel %vm998, %v2130, %v2131
        %v2133 = vrot.slane %v2131, 4
        %v2134 = vrot.slane %v2015, 5
        %v2135 = vsel %vm998, %v2133, %v2134
        %v2136 = vrot.slane %v2016, 5
        %v2137 = vrot.slane %v2136, 4
        %v2138 = vrot.slane %v2017, 5
        %v2139 = vsel %vm998, %v2137, %v2138
        %v2140 = vrot.slane %v2138, 4
        %v2141 = vrot.slane %v2018, 5
        %v2142 = vsel %vm998, %v2140, %v2141
        %v2143 = vrot.slane %v2019, 5
        %v2144 = vrot.slane %v2143, 4
        %v2145 = vrot.slane %v2020, 5
        %v2146 = vsel %vm998, %v2144, %v2145
        %v2147 = vrot.slane %v2145, 4
        %v2148 = vrot.slane %v2021, 5
        %v2149 = vsel %vm998, %v2147, %v2148
        %v2150 = vrot.slane %v2022, 5
        %v2151 = vrot.slane %v2150, 4
        %v2152 = vrot.slane %v2023, 5
        %v2153 = vsel %vm998, %v2151, %v2152
        %v2154 = vrot.slane %v2152, 4
        %v2155 = vrot.slane %v2024, 5
        %v2156 = vsel %vm998, %v2154, %v2155
        %v2157 = vrot.slane %v2025, 5
        %v2158 = vrot.slane %v2157, 4
        %v2159 = vrot.slane %v2026, 5
        %v2160 = vsel %vm998, %v2158, %v2159
        %v2161 = vrot.slane %v2159, 4
        %v2162 = vrot.slane %v2027, 5
        %v2163 = vsel %vm998, %v2161, %v2162
        %v2164 = vrot.slane %v2028, 5
        %v2165 = vrot.slane %v2164, 4
        %v2166 = vrot.slane %v2029, 5
        %v2167 = vsel %vm998, %v2165, %v2166
        %v2168 = vrot.slane %v2166, 4
        %v2169 = vrot.slane %v2030, 5
        %v2170 = vsel %vm998, %v2168, %v2169
        %v2171 = vrot.slane %v2031, 5
        %v2172 = vrot.slane %v2171, 4
        %v2173 = vrot.slane %v2032, 5
        %v2174 = vsel %vm998, %v2172, %v2173
        %v2175 = vrot.slane %v2173, 4
        %v2176 = vrot.slane %v2033, 5
        %v2177 = vsel %vm998, %v2175, %v2176
        %v2178 = vrot.slane %v2034, 5
        %v2179 = vrot.slane %v2178, 4
        %v2180 = vrot.slane %v2035, 5
        %v2181 = vsel %vm998, %v2179, %v2180
        %v2182 = vrot.slane %v2180, 4
        %v2183 = vrot.slane %v2036, 5
        %v2184 = vsel %vm998, %v2182, %v2183
        %v2185 = vrot.slane %v2037, 5
        %v2186 = vrot.slane %v2185, 4
        %v2187 = vrot.slane %v2038, 5
        %v2188 = vsel %vm998, %v2186, %v2187
        %v2189 = vrot.slane %v2187, 4
        %v2190 = vrot.slane %v2039, 5
        %v2191 = vsel %vm998, %v2189, %v2190
        %v2192 = vrot.slane %v2040, 5
        %v2193 = vrot.slane %v2192, 4
        %v2194 = vrot.slane %v2041, 5
        %v2195 = vsel %vm998, %v2193, %v2194
        %v2196 = vrot.slane %v2194, 4
        %v2197 = vrot.slane %v2042, 5
        %v2198 = vsel %vm998, %v2196, %v2197
        %v2199 = vrot.slane %v2043, 5
        %v2200 = vrot.slane %v2199, 4
        %v2201 = vrot.slane %v2044, 5
        %v2202 = vsel %vm998, %v2200, %v2201
        %v2203 = vrot.slane %v2201, 4
        %v2204 = vrot.slane %v2045, 5
        %v2205 = vsel %vm998, %v2203, %v2204
        %2206 = vrot.lane.b32.xlu0 %v2097, 20
        %v2207 = vpop.permute.xlu0 %2206
        %2208 = vrot.lane.b32.xlu0 %v2100, 20
        %v2209 = vpop.permute.xlu0 %2208
        %2210 = vrot.lane.b32.xlu0 %v2104, 20
        %v2211 = vpop.permute.xlu0 %2210
        %2212 = vrot.lane.b32.xlu0 %v2107, 20
        %v2213 = vpop.permute.xlu0 %2212
        %2214 = vrot.lane.b32.xlu0 %v2111, 20
        %v2215 = vpop.permute.xlu0 %2214
        %2216 = vrot.lane.b32.xlu0 %v2114, 20
        %v2217 = vpop.permute.xlu0 %2216
        %2218 = vrot.lane.b32.xlu0 %v2118, 20
        %v2219 = vpop.permute.xlu0 %2218
        %2220 = vrot.lane.b32.xlu0 %v2121, 20
        %v2221 = vpop.permute.xlu0 %2220
        %2222 = vrot.lane.b32.xlu0 %v2125, 20
        %v2223 = vpop.permute.xlu0 %2222
        %2224 = vrot.lane.b32.xlu0 %v2128, 20
        %v2225 = vpop.permute.xlu0 %2224
        %2226 = vrot.lane.b32.xlu0 %v2132, 20
        %v2227 = vpop.permute.xlu0 %2226
        %2228 = vrot.lane.b32.xlu0 %v2135, 20
        %v2229 = vpop.permute.xlu0 %2228
        %2230 = vrot.lane.b32.xlu0 %v2139, 20
        %v2231 = vpop.permute.xlu0 %2230
        %2232 = vrot.lane.b32.xlu0 %v2142, 20
        %v2233 = vpop.permute.xlu0 %2232
        %2234 = vrot.lane.b32.xlu0 %v2146, 20
        %v2235 = vpop.permute.xlu0 %2234
        %2236 = vrot.lane.b32.xlu0 %v2149, 20
        %v2237 = vpop.permute.xlu0 %2236
        %2238 = vrot.lane.b32.xlu0 %v2153, 20
        %v2239 = vpop.permute.xlu0 %2238
        %2240 = vrot.lane.b32.xlu0 %v2156, 20
        %v2241 = vpop.permute.xlu0 %2240
        %2242 = vrot.lane.b32.xlu0 %v2160, 20
        %v2243 = vpop.permute.xlu0 %2242
        %2244 = vrot.lane.b32.xlu0 %v2163, 20
        %v2245 = vpop.permute.xlu0 %2244
        %2246 = vrot.lane.b32.xlu0 %v2167, 20
        %v2247 = vpop.permute.xlu0 %2246
        %2248 = vrot.lane.b32.xlu0 %v2170, 20
        %v2249 = vpop.permute.xlu0 %2248
        %2250 = vrot.lane.b32.xlu0 %v2174, 20
        %v2251 = vpop.permute.xlu0 %2250
        %2252 = vrot.lane.b32.xlu0 %v2177, 20
        %v2253 = vpop.permute.xlu0 %2252
        %2254 = vrot.lane.b32.xlu0 %v2181, 20
        %v2255 = vpop.permute.xlu0 %2254
        %2256 = vrot.lane.b32.xlu0 %v2184, 20
        %v2257 = vpop.permute.xlu0 %2256
        %2258 = vrot.lane.b32.xlu0 %v2188, 20
        %v2259 = vpop.permute.xlu0 %2258
        %2260 = vrot.lane.b32.xlu0 %v2191, 20
        %v2261 = vpop.permute.xlu0 %2260
        %2262 = vrot.lane.b32.xlu0 %v2195, 20
        %v2263 = vpop.permute.xlu0 %2262
        %2264 = vrot.lane.b32.xlu0 %v2198, 20
        %v2265 = vpop.permute.xlu0 %2264
        %2266 = vrot.lane.b32.xlu0 %v2202, 20
        %v2267 = vpop.permute.xlu0 %2266
        %2268 = vrot.lane.b32.xlu0 %v2205, 20
        %v2269 = vpop.permute.xlu0 %2268
        %vm2302 = vcmask 191648
        %2303 = vst.msk [vmem:[#allocation2] sm:$0xf] %vm2302, %v2207
        %2304 = vst.msk [vmem:[#allocation2 + $0x4] sm:$0xf] %vm2302, %v2209
        %2305 = vst.msk [vmem:[#allocation2 + $0x8] sm:$0xf] %vm2302, %v2211
        %2306 = vst.msk [vmem:[#allocation2 + $0xc] sm:$0xf] %vm2302, %v2213
        %2307 = vst.msk [vmem:[#allocation2 + $0x10] sm:$0xf] %vm2302, %v2215
        %2308 = vst.msk [vmem:[#allocation2 + $0x14] sm:$0xf] %vm2302, %v2217
        %2309 = vst.msk [vmem:[#allocation2 + $0x18] sm:$0xf] %vm2302, %v2219
        %2310 = vst.msk [vmem:[#allocation2 + $0x1c] sm:$0xf] %vm2302, %v2221
        %2311 = vst.msk [vmem:[#allocation2 + $0x20] sm:$0xf] %vm2302, %v2223
        %2312 = vst.msk [vmem:[#allocation2 + $0x24] sm:$0xf] %vm2302, %v2225
        %2313 = vst.msk [vmem:[#allocation2 + $0x28] sm:$0xf] %vm2302, %v2227
        %2314 = vst.msk [vmem:[#allocation2 + $0x2c] sm:$0xf] %vm2302, %v2229
        %2315 = vst.msk [vmem:[#allocation2 + $0x30] sm:$0xf] %vm2302, %v2231
        %2316 = vst.msk [vmem:[#allocation2 + $0x34] sm:$0xf] %vm2302, %v2233
        %2317 = vst.msk [vmem:[#allocation2 + $0x38] sm:$0xf] %vm2302, %v2235
        %2318 = vst.msk [vmem:[#allocation2 + $0x3c] sm:$0xf] %vm2302, %v2237
        %2319 = vst.msk [vmem:[#allocation2 + $0x40] sm:$0xf] %vm2302, %v2239
        %2320 = vst.msk [vmem:[#allocation2 + $0x44] sm:$0xf] %vm2302, %v2241
        %2321 = vst.msk [vmem:[#allocation2 + $0x48] sm:$0xf] %vm2302, %v2243
        %2322 = vst.msk [vmem:[#allocation2 + $0x4c] sm:$0xf] %vm2302, %v2245
        %2323 = vst.msk [vmem:[#allocation2 + $0x50] sm:$0xf] %vm2302, %v2247
        %2324 = vst.msk [vmem:[#allocation2 + $0x54] sm:$0xf] %vm2302, %v2249
        %2325 = vst.msk [vmem:[#allocation2 + $0x58] sm:$0xf] %vm2302, %v2251
        %2326 = vst.msk [vmem:[#allocation2 + $0x5c] sm:$0xf] %vm2302, %v2253
        %2327 = vst.msk [vmem:[#allocation2 + $0x60] sm:$0xf] %vm2302, %v2255
        %2328 = vst.msk [vmem:[#allocation2 + $0x64] sm:$0xf] %vm2302, %v2257
        %2329 = vst.msk [vmem:[#allocation2 + $0x68] sm:$0xf] %vm2302, %v2259
        %2330 = vst.msk [vmem:[#allocation2 + $0x6c] sm:$0xf] %vm2302, %v2261
        %2331 = vst.msk [vmem:[#allocation2 + $0x70] sm:$0xf] %vm2302, %v2263
        %2332 = vst.msk [vmem:[#allocation2 + $0x74] sm:$0xf] %vm2302, %v2265
        %2333 = vst.msk [vmem:[#allocation2 + $0x78] sm:$0xf] %vm2302, %v2267
        %2334 = vst.msk [vmem:[#allocation2 + $0x7c] sm:$0xf] %vm2302, %v2269
        %s2335 = sadd.s32 %s267, 2
        %s2336 = smul.u32 %s2335, 3
        %s2337 = smul.addr %s2336, 4
        %s2338 = scalar_lea.vmem %s248, %s2337
        %v2339 = vld [vmem:[%s2338] sm:$0xf]
        %v2340 = vld [vmem:[%s2338 + $0x4] sm:$0xf]
        %v2341 = vld [vmem:[%s2338 + $0xc] sm:$0xf]
        %v2342 = vld [vmem:[%s2338 + $0x10] sm:$0xf]
        %v2343 = vld [vmem:[%s2338 + $0x18] sm:$0xf]
        %v2344 = vld [vmem:[%s2338 + $0x1c] sm:$0xf]
        %v2345 = vld [vmem:[%s2338 + $0x24] sm:$0xf]
        %v2346 = vld [vmem:[%s2338 + $0x28] sm:$0xf]
        %v2347 = vld [vmem:[%s2338 + $0x30] sm:$0xf]
        %v2348 = vld [vmem:[%s2338 + $0x34] sm:$0xf]
        %v2349 = vld [vmem:[%s2338 + $0x3c] sm:$0xf]
        %v2350 = vld [vmem:[%s2338 + $0x40] sm:$0xf]
        %v2351 = vld [vmem:[%s2338 + $0x48] sm:$0xf]
        %v2352 = vld [vmem:[%s2338 + $0x4c] sm:$0xf]
        %v2353 = vld [vmem:[%s2338 + $0x54] sm:$0xf]
        %v2354 = vld [vmem:[%s2338 + $0x58] sm:$0xf]
        %v2355 = vld [vmem:[%s2338 + $0x60] sm:$0xf]
        %v2356 = vld [vmem:[%s2338 + $0x64] sm:$0xf]
        %v2357 = vld [vmem:[%s2338 + $0x6c] sm:$0xf]
        %v2358 = vld [vmem:[%s2338 + $0x70] sm:$0xf]
        %v2359 = vld [vmem:[%s2338 + $0x78] sm:$0xf]
        %v2360 = vld [vmem:[%s2338 + $0x7c] sm:$0xf]
        %v2361 = vld [vmem:[%s2338 + $0x84] sm:$0xf]
        %v2362 = vld [vmem:[%s2338 + $0x88] sm:$0xf]
        %v2363 = vld [vmem:[%s2338 + $0x90] sm:$0xf]
        %v2364 = vld [vmem:[%s2338 + $0x94] sm:$0xf]
        %v2365 = vld [vmem:[%s2338 + $0x9c] sm:$0xf]
        %v2366 = vld [vmem:[%s2338 + $0xa0] sm:$0xf]
        %v2367 = vld [vmem:[%s2338 + $0xa8] sm:$0xf]
        %v2368 = vld [vmem:[%s2338 + $0xac] sm:$0xf]
        %v2369 = vld [vmem:[%s2338 + $0xb4] sm:$0xf]
        %v2370 = vld [vmem:[%s2338 + $0xb8] sm:$0xf]
        %2403 = vrot.lane.b32.xlu0 %v2339, 24
        %v2404 = vpop.permute.xlu0 %2403
        %2405 = vrot.lane.b32.xlu0 %v2340, 24
        %v2406 = vpop.permute.xlu0 %2405
        %2407 = vrot.lane.b32.xlu0 %v2341, 24
        %v2408 = vpop.permute.xlu0 %2407
        %2409 = vrot.lane.b32.xlu0 %v2342, 24
        %v2410 = vpop.permute.xlu0 %2409
        %2411 = vrot.lane.b32.xlu0 %v2343, 24
        %v2412 = vpop.permute.xlu0 %2411
        %2413 = vrot.lane.b32.xlu0 %v2344, 24
        %v2414 = vpop.permute.xlu0 %2413
        %2415 = vrot.lane.b32.xlu0 %v2345, 24
        %v2416 = vpop.permute.xlu0 %2415
        %2417 = vrot.lane.b32.xlu0 %v2346, 24
        %v2418 = vpop.permute.xlu0 %2417
        %2419 = vrot.lane.b32.xlu0 %v2347, 24
        %v2420 = vpop.permute.xlu0 %2419
        %2421 = vrot.lane.b32.xlu0 %v2348, 24
        %v2422 = vpop.permute.xlu0 %2421
        %2423 = vrot.lane.b32.xlu0 %v2349, 24
        %v2424 = vpop.permute.xlu0 %2423
        %2425 = vrot.lane.b32.xlu0 %v2350, 24
        %v2426 = vpop.permute.xlu0 %2425
        %2427 = vrot.lane.b32.xlu0 %v2351, 24
        %v2428 = vpop.permute.xlu0 %2427
        %2429 = vrot.lane.b32.xlu0 %v2352, 24
        %v2430 = vpop.permute.xlu0 %2429
        %2431 = vrot.lane.b32.xlu0 %v2353, 24
        %v2432 = vpop.permute.xlu0 %2431
        %2433 = vrot.lane.b32.xlu0 %v2354, 24
        %v2434 = vpop.permute.xlu0 %2433
        %2435 = vrot.lane.b32.xlu0 %v2355, 24
        %v2436 = vpop.permute.xlu0 %2435
        %2437 = vrot.lane.b32.xlu0 %v2356, 24
        %v2438 = vpop.permute.xlu0 %2437
        %2439 = vrot.lane.b32.xlu0 %v2357, 24
        %v2440 = vpop.permute.xlu0 %2439
        %2441 = vrot.lane.b32.xlu0 %v2358, 24
        %v2442 = vpop.permute.xlu0 %2441
        %2443 = vrot.lane.b32.xlu0 %v2359, 24
        %v2444 = vpop.permute.xlu0 %2443
        %2445 = vrot.lane.b32.xlu0 %v2360, 24
        %v2446 = vpop.permute.xlu0 %2445
        %2447 = vrot.lane.b32.xlu0 %v2361, 24
        %v2448 = vpop.permute.xlu0 %2447
        %2449 = vrot.lane.b32.xlu0 %v2362, 24
        %v2450 = vpop.permute.xlu0 %2449
        %2451 = vrot.lane.b32.xlu0 %v2363, 24
        %v2452 = vpop.permute.xlu0 %2451
        %2453 = vrot.lane.b32.xlu0 %v2364, 24
        %v2454 = vpop.permute.xlu0 %2453
        %2455 = vrot.lane.b32.xlu0 %v2365, 24
        %v2456 = vpop.permute.xlu0 %2455
        %2457 = vrot.lane.b32.xlu0 %v2366, 24
        %v2458 = vpop.permute.xlu0 %2457
        %2459 = vrot.lane.b32.xlu0 %v2367, 24
        %v2460 = vpop.permute.xlu0 %2459
        %2461 = vrot.lane.b32.xlu0 %v2368, 24
        %v2462 = vpop.permute.xlu0 %2461
        %2463 = vrot.lane.b32.xlu0 %v2369, 24
        %v2464 = vpop.permute.xlu0 %2463
        %2465 = vrot.lane.b32.xlu0 %v2370, 24
        %v2466 = vpop.permute.xlu0 %2465
        %vm2499 = vcmask 224448
        %2500 = vst.msk [vmem:[#allocation2] sm:$0xf] %vm2499, %v2404
        %2501 = vst.msk [vmem:[#allocation2 + $0x4] sm:$0xf] %vm2499, %v2406
        %2502 = vst.msk [vmem:[#allocation2 + $0x8] sm:$0xf] %vm2499, %v2408
        %2503 = vst.msk [vmem:[#allocation2 + $0xc] sm:$0xf] %vm2499, %v2410
        %2504 = vst.msk [vmem:[#allocation2 + $0x10] sm:$0xf] %vm2499, %v2412
        %2505 = vst.msk [vmem:[#allocation2 + $0x14] sm:$0xf] %vm2499, %v2414
        %2506 = vst.msk [vmem:[#allocation2 + $0x18] sm:$0xf] %vm2499, %v2416
        %2507 = vst.msk [vmem:[#allocation2 + $0x1c] sm:$0xf] %vm2499, %v2418
        %2508 = vst.msk [vmem:[#allocation2 + $0x20] sm:$0xf] %vm2499, %v2420
        %2509 = vst.msk [vmem:[#allocation2 + $0x24] sm:$0xf] %vm2499, %v2422
        %2510 = vst.msk [vmem:[#allocation2 + $0x28] sm:$0xf] %vm2499, %v2424
        %2511 = vst.msk [vmem:[#allocation2 + $0x2c] sm:$0xf] %vm2499, %v2426
        %2512 = vst.msk [vmem:[#allocation2 + $0x30] sm:$0xf] %vm2499, %v2428
        %2513 = vst.msk [vmem:[#allocation2 + $0x34] sm:$0xf] %vm2499, %v2430
        %2514 = vst.msk [vmem:[#allocation2 + $0x38] sm:$0xf] %vm2499, %v2432
        %2515 = vst.msk [vmem:[#allocation2 + $0x3c] sm:$0xf] %vm2499, %v2434
        %2516 = vst.msk [vmem:[#allocation2 + $0x40] sm:$0xf] %vm2499, %v2436
        %2517 = vst.msk [vmem:[#allocation2 + $0x44] sm:$0xf] %vm2499, %v2438
        %2518 = vst.msk [vmem:[#allocation2 + $0x48] sm:$0xf] %vm2499, %v2440
        %2519 = vst.msk [vmem:[#allocation2 + $0x4c] sm:$0xf] %vm2499, %v2442
        %2520 = vst.msk [vmem:[#allocation2 + $0x50] sm:$0xf] %vm2499, %v2444
        %2521 = vst.msk [vmem:[#allocation2 + $0x54] sm:$0xf] %vm2499, %v2446
        %2522 = vst.msk [vmem:[#allocation2 + $0x58] sm:$0xf] %vm2499, %v2448
        %2523 = vst.msk [vmem:[#allocation2 + $0x5c] sm:$0xf] %vm2499, %v2450
        %2524 = vst.msk [vmem:[#allocation2 + $0x60] sm:$0xf] %vm2499, %v2452
        %2525 = vst.msk [vmem:[#allocation2 + $0x64] sm:$0xf] %vm2499, %v2454
        %2526 = vst.msk [vmem:[#allocation2 + $0x68] sm:$0xf] %vm2499, %v2456
        %2527 = vst.msk [vmem:[#allocation2 + $0x6c] sm:$0xf] %vm2499, %v2458
        %2528 = vst.msk [vmem:[#allocation2 + $0x70] sm:$0xf] %vm2499, %v2460
        %2529 = vst.msk [vmem:[#allocation2 + $0x74] sm:$0xf] %vm2499, %v2462
        %2530 = vst.msk [vmem:[#allocation2 + $0x78] sm:$0xf] %vm2499, %v2464
        %2531 = vst.msk [vmem:[#allocation2 + $0x7c] sm:$0xf] %vm2499, %v2466
        %v2532 = vld [vmem:[%s2338] sm:$0xf]
        %v2533 = vld [vmem:[%s2338 + $0x4] sm:$0xf]
        %v2534 = vld [vmem:[%s2338 + $0x8] sm:$0x1]
        %v2535 = vld [vmem:[%s2338 + $0xc] sm:$0xf]
        %v2536 = vld [vmem:[%s2338 + $0x10] sm:$0xf]
        %v2537 = vld [vmem:[%s2338 + $0x14] sm:$0x1]
        %v2538 = vld [vmem:[%s2338 + $0x18] sm:$0xf]
        %v2539 = vld [vmem:[%s2338 + $0x1c] sm:$0xf]
        %v2540 = vld [vmem:[%s2338 + $0x20] sm:$0x1]
        %v2541 = vld [vmem:[%s2338 + $0x24] sm:$0xf]
        %v2542 = vld [vmem:[%s2338 + $0x28] sm:$0xf]
        %v2543 = vld [vmem:[%s2338 + $0x2c] sm:$0x1]
        %v2544 = vld [vmem:[%s2338 + $0x30] sm:$0xf]
        %v2545 = vld [vmem:[%s2338 + $0x34] sm:$0xf]
        %v2546 = vld [vmem:[%s2338 + $0x38] sm:$0x1]
        %v2547 = vld [vmem:[%s2338 + $0x3c] sm:$0xf]
        %v2548 = vld [vmem:[%s2338 + $0x40] sm:$0xf]
        %v2549 = vld [vmem:[%s2338 + $0x44] sm:$0x1]
        %v2550 = vld [vmem:[%s2338 + $0x48] sm:$0xf]
        %v2551 = vld [vmem:[%s2338 + $0x4c] sm:$0xf]
        %v2552 = vld [vmem:[%s2338 + $0x50] sm:$0x1]
        %v2553 = vld [vmem:[%s2338 + $0x54] sm:$0xf]
        %v2554 = vld [vmem:[%s2338 + $0x58] sm:$0xf]
        %v2555 = vld [vmem:[%s2338 + $0x5c] sm:$0x1]
        %v2556 = vld [vmem:[%s2338 + $0x60] sm:$0xf]
        %v2557 = vld [vmem:[%s2338 + $0x64] sm:$0xf]
        %v2558 = vld [vmem:[%s2338 + $0x68] sm:$0x1]
        %v2559 = vld [vmem:[%s2338 + $0x6c] sm:$0xf]
        %v2560 = vld [vmem:[%s2338 + $0x70] sm:$0xf]
        %v2561 = vld [vmem:[%s2338 + $0x74] sm:$0x1]
        %v2562 = vld [vmem:[%s2338 + $0x78] sm:$0xf]
        %v2563 = vld [vmem:[%s2338 + $0x7c] sm:$0xf]
        %v2564 = vld [vmem:[%s2338 + $0x80] sm:$0x1]
        %v2565 = vld [vmem:[%s2338 + $0x84] sm:$0xf]
        %v2566 = vld [vmem:[%s2338 + $0x88] sm:$0xf]
        %v2567 = vld [vmem:[%s2338 + $0x8c] sm:$0x1]
        %v2568 = vld [vmem:[%s2338 + $0x90] sm:$0xf]
        %v2569 = vld [vmem:[%s2338 + $0x94] sm:$0xf]
        %v2570 = vld [vmem:[%s2338 + $0x98] sm:$0x1]
        %v2571 = vld [vmem:[%s2338 + $0x9c] sm:$0xf]
        %v2572 = vld [vmem:[%s2338 + $0xa0] sm:$0xf]
        %v2573 = vld [vmem:[%s2338 + $0xa4] sm:$0x1]
        %v2574 = vld [vmem:[%s2338 + $0xa8] sm:$0xf]
        %v2575 = vld [vmem:[%s2338 + $0xac] sm:$0xf]
        %v2576 = vld [vmem:[%s2338 + $0xb0] sm:$0x1]
        %v2577 = vld [vmem:[%s2338 + $0xb4] sm:$0xf]
        %v2578 = vld [vmem:[%s2338 + $0xb8] sm:$0xf]
        %v2579 = vld [vmem:[%s2338 + $0xbc] sm:$0x1]
        %v2581 = vshrl.u32 %v2532, 16
        %v2583 = vrot.slane %v2581, 4
        %v2584 = vshll.u32 %v2532, 16
        %v2586 = vrot.slane %v2584, 5
        %v2587 = vor.u32 %v2583, %v2586
        %v2588 = vrot.slane %v2587, 4
        %v2590 = vshll.u32 %v2533, 16
        %v2592 = vrot.slane %v2590, 5
        %v2593 = vsel %vm386, %v2588, %v2592
        %v2594 = vshrl.u32 %v2533, 16
        %v2596 = vrot.slane %v2594, 4
        %v2597 = vor.u32 %v2596, %v2592
        %v2598 = vrot.slane %v2597, 4
        %v2600 = vshll.u32 %v2534, 16
        %v2602 = vrot.slane %v2600, 5
        %v2603 = vsel %vm386, %v2598, %v2602
        %v2605 = vshrl.u32 %v2535, 16
        %v2607 = vrot.slane %v2605, 4
        %v2608 = vshll.u32 %v2535, 16
        %v2610 = vrot.slane %v2608, 5
        %v2611 = vor.u32 %v2607, %v2610
        %v2612 = vrot.slane %v2611, 4
        %v2614 = vshll.u32 %v2536, 16
        %v2616 = vrot.slane %v2614, 5
        %v2617 = vsel %vm386, %v2612, %v2616
        %v2618 = vshrl.u32 %v2536, 16
        %v2620 = vrot.slane %v2618, 4
        %v2621 = vor.u32 %v2620, %v2616
        %v2622 = vrot.slane %v2621, 4
        %v2624 = vshll.u32 %v2537, 16
        %v2626 = vrot.slane %v2624, 5
        %v2627 = vsel %vm386, %v2622, %v2626
        %v2629 = vshrl.u32 %v2538, 16
        %v2631 = vrot.slane %v2629, 4
        %v2632 = vshll.u32 %v2538, 16
        %v2634 = vrot.slane %v2632, 5
        %v2635 = vor.u32 %v2631, %v2634
        %v2636 = vrot.slane %v2635, 4
        %v2638 = vshll.u32 %v2539, 16
        %v2640 = vrot.slane %v2638, 5
        %v2641 = vsel %vm386, %v2636, %v2640
        %v2642 = vshrl.u32 %v2539, 16
        %v2644 = vrot.slane %v2642, 4
        %v2645 = vor.u32 %v2644, %v2640
        %v2646 = vrot.slane %v2645, 4
        %v2648 = vshll.u32 %v2540, 16
        %v2650 = vrot.slane %v2648, 5
        %v2651 = vsel %vm386, %v2646, %v2650
        %v2653 = vshrl.u32 %v2541, 16
        %v2655 = vrot.slane %v2653, 4
        %v2656 = vshll.u32 %v2541, 16
        %v2658 = vrot.slane %v2656, 5
        %v2659 = vor.u32 %v2655, %v2658
        %v2660 = vrot.slane %v2659, 4
        %v2662 = vshll.u32 %v2542, 16
        %v2664 = vrot.slane %v2662, 5
        %v2665 = vsel %vm386, %v2660, %v2664
        %v2666 = vshrl.u32 %v2542, 16
        %v2668 = vrot.slane %v2666, 4
        %v2669 = vor.u32 %v2668, %v2664
        %v2670 = vrot.slane %v2669, 4
        %v2672 = vshll.u32 %v2543, 16
        %v2674 = vrot.slane %v2672, 5
        %v2675 = vsel %vm386, %v2670, %v2674
        %v2677 = vshrl.u32 %v2544, 16
        %v2679 = vrot.slane %v2677, 4
        %v2680 = vshll.u32 %v2544, 16
        %v2682 = vrot.slane %v2680, 5
        %v2683 = vor.u32 %v2679, %v2682
        %v2684 = vrot.slane %v2683, 4
        %v2686 = vshll.u32 %v2545, 16
        %v2688 = vrot.slane %v2686, 5
        %v2689 = vsel %vm386, %v2684, %v2688
        %v2690 = vshrl.u32 %v2545, 16
        %v2692 = vrot.slane %v2690, 4
        %v2693 = vor.u32 %v2692, %v2688
        %v2694 = vrot.slane %v2693, 4
        %v2696 = vshll.u32 %v2546, 16
        %v2698 = vrot.slane %v2696, 5
        %v2699 = vsel %vm386, %v2694, %v2698
        %v2701 = vshrl.u32 %v2547, 16
        %v2703 = vrot.slane %v2701, 4
        %v2704 = vshll.u32 %v2547, 16
        %v2706 = vrot.slane %v2704, 5
        %v2707 = vor.u32 %v2703, %v2706
        %v2708 = vrot.slane %v2707, 4
        %v2710 = vshll.u32 %v2548, 16
        %v2712 = vrot.slane %v2710, 5
        %v2713 = vsel %vm386, %v2708, %v2712
        %v2714 = vshrl.u32 %v2548, 16
        %v2716 = vrot.slane %v2714, 4
        %v2717 = vor.u32 %v2716, %v2712
        %v2718 = vrot.slane %v2717, 4
        %v2720 = vshll.u32 %v2549, 16
        %v2722 = vrot.slane %v2720, 5
        %v2723 = vsel %vm386, %v2718, %v2722
        %v2725 = vshrl.u32 %v2550, 16
        %v2727 = vrot.slane %v2725, 4
        %v2728 = vshll.u32 %v2550, 16
        %v2730 = vrot.slane %v2728, 5
        %v2731 = vor.u32 %v2727, %v2730
        %v2732 = vrot.slane %v2731, 4
        %v2734 = vshll.u32 %v2551, 16
        %v2736 = vrot.slane %v2734, 5
        %v2737 = vsel %vm386, %v2732, %v2736
        %v2738 = vshrl.u32 %v2551, 16
        %v2740 = vrot.slane %v2738, 4
        %v2741 = vor.u32 %v2740, %v2736
        %v2742 = vrot.slane %v2741, 4
        %v2744 = vshll.u32 %v2552, 16
        %v2746 = vrot.slane %v2744, 5
        %v2747 = vsel %vm386, %v2742, %v2746
        %v2749 = vshrl.u32 %v2553, 16
        %v2751 = vrot.slane %v2749, 4
        %v2752 = vshll.u32 %v2553, 16
        %v2754 = vrot.slane %v2752, 5
        %v2755 = vor.u32 %v2751, %v2754
        %v2756 = vrot.slane %v2755, 4
        %v2758 = vshll.u32 %v2554, 16
        %v2760 = vrot.slane %v2758, 5
        %v2761 = vsel %vm386, %v2756, %v2760
        %v2762 = vshrl.u32 %v2554, 16
        %v2764 = vrot.slane %v2762, 4
        %v2765 = vor.u32 %v2764, %v2760
        %v2766 = vrot.slane %v2765, 4
        %v2768 = vshll.u32 %v2555, 16
        %v2770 = vrot.slane %v2768, 5
        %v2771 = vsel %vm386, %v2766, %v2770
        %v2773 = vshrl.u32 %v2556, 16
        %v2775 = vrot.slane %v2773, 4
        %v2776 = vshll.u32 %v2556, 16
        %v2778 = vrot.slane %v2776, 5
        %v2779 = vor.u32 %v2775, %v2778
        %v2780 = vrot.slane %v2779, 4
        %v2782 = vshll.u32 %v2557, 16
        %v2784 = vrot.slane %v2782, 5
        %v2785 = vsel %vm386, %v2780, %v2784
        %v2786 = vshrl.u32 %v2557, 16
        %v2788 = vrot.slane %v2786, 4
        %v2789 = vor.u32 %v2788, %v2784
        %v2790 = vrot.slane %v2789, 4
        %v2792 = vshll.u32 %v2558, 16
        %v2794 = vrot.slane %v2792, 5
        %v2795 = vsel %vm386, %v2790, %v2794
        %v2797 = vshrl.u32 %v2559, 16
        %v2799 = vrot.slane %v2797, 4
        %v2800 = vshll.u32 %v2559, 16
        %v2802 = vrot.slane %v2800, 5
        %v2803 = vor.u32 %v2799, %v2802
        %v2804 = vrot.slane %v2803, 4
        %v2806 = vshll.u32 %v2560, 16
        %v2808 = vrot.slane %v2806, 5
        %v2809 = vsel %vm386, %v2804, %v2808
        %v2810 = vshrl.u32 %v2560, 16
        %v2812 = vrot.slane %v2810, 4
        %v2813 = vor.u32 %v2812, %v2808
        %v2814 = vrot.slane %v2813, 4
        %v2816 = vshll.u32 %v2561, 16
        %v2818 = vrot.slane %v2816, 5
        %v2819 = vsel %vm386, %v2814, %v2818
        %v2821 = vshrl.u32 %v2562, 16
        %v2823 = vrot.slane %v2821, 4
        %v2824 = vshll.u32 %v2562, 16
        %v2826 = vrot.slane %v2824, 5
        %v2827 = vor.u32 %v2823, %v2826
        %v2828 = vrot.slane %v2827, 4
        %v2830 = vshll.u32 %v2563, 16
        %v2832 = vrot.slane %v2830, 5
        %v2833 = vsel %vm386, %v2828, %v2832
        %v2834 = vshrl.u32 %v2563, 16
        %v2836 = vrot.slane %v2834, 4
        %v2837 = vor.u32 %v2836, %v2832
        %v2838 = vrot.slane %v2837, 4
        %v2840 = vshll.u32 %v2564, 16
        %v2842 = vrot.slane %v2840, 5
        %v2843 = vsel %vm386, %v2838, %v2842
        %v2845 = vshrl.u32 %v2565, 16
        %v2847 = vrot.slane %v2845, 4
        %v2848 = vshll.u32 %v2565, 16
        %v2850 = vrot.slane %v2848, 5
        %v2851 = vor.u32 %v2847, %v2850
        %v2852 = vrot.slane %v2851, 4
        %v2854 = vshll.u32 %v2566, 16
        %v2856 = vrot.slane %v2854, 5
        %v2857 = vsel %vm386, %v2852, %v2856
        %v2858 = vshrl.u32 %v2566, 16
        %v2860 = vrot.slane %v2858, 4
        %v2861 = vor.u32 %v2860, %v2856
        %v2862 = vrot.slane %v2861, 4
        %v2864 = vshll.u32 %v2567, 16
        %v2866 = vrot.slane %v2864, 5
        %v2867 = vsel %vm386, %v2862, %v2866
        %v2869 = vshrl.u32 %v2568, 16
        %v2871 = vrot.slane %v2869, 4
        %v2872 = vshll.u32 %v2568, 16
        %v2874 = vrot.slane %v2872, 5
        %v2875 = vor.u32 %v2871, %v2874
        %v2876 = vrot.slane %v2875, 4
        %v2878 = vshll.u32 %v2569, 16
        %v2880 = vrot.slane %v2878, 5
        %v2881 = vsel %vm386, %v2876, %v2880
        %v2882 = vshrl.u32 %v2569, 16
        %v2884 = vrot.slane %v2882, 4
        %v2885 = vor.u32 %v2884, %v2880
        %v2886 = vrot.slane %v2885, 4
        %v2888 = vshll.u32 %v2570, 16
        %v2890 = vrot.slane %v2888, 5
        %v2891 = vsel %vm386, %v2886, %v2890
        %v2893 = vshrl.u32 %v2571, 16
        %v2895 = vrot.slane %v2893, 4
        %v2896 = vshll.u32 %v2571, 16
        %v2898 = vrot.slane %v2896, 5
        %v2899 = vor.u32 %v2895, %v2898
        %v2900 = vrot.slane %v2899, 4
        %v2902 = vshll.u32 %v2572, 16
        %v2904 = vrot.slane %v2902, 5
        %v2905 = vsel %vm386, %v2900, %v2904
        %v2906 = vshrl.u32 %v2572, 16
        %v2908 = vrot.slane %v2906, 4
        %v2909 = vor.u32 %v2908, %v2904
        %v2910 = vrot.slane %v2909, 4
        %v2912 = vshll.u32 %v2573, 16
        %v2914 = vrot.slane %v2912, 5
        %v2915 = vsel %vm386, %v2910, %v2914
        %v2917 = vshrl.u32 %v2574, 16
        %v2919 = vrot.slane %v2917, 4
        %v2920 = vshll.u32 %v2574, 16
        %v2922 = vrot.slane %v2920, 5
        %v2923 = vor.u32 %v2919, %v2922
        %v2924 = vrot.slane %v2923, 4
        %v2926 = vshll.u32 %v2575, 16
        %v2928 = vrot.slane %v2926, 5
        %v2929 = vsel %vm386, %v2924, %v2928
        %v2930 = vshrl.u32 %v2575, 16
        %v2932 = vrot.slane %v2930, 4
        %v2933 = vor.u32 %v2932, %v2928
        %v2934 = vrot.slane %v2933, 4
        %v2936 = vshll.u32 %v2576, 16
        %v2938 = vrot.slane %v2936, 5
        %v2939 = vsel %vm386, %v2934, %v2938
        %v2941 = vshrl.u32 %v2577, 16
        %v2943 = vrot.slane %v2941, 4
        %v2944 = vshll.u32 %v2577, 16
        %v2946 = vrot.slane %v2944, 5
        %v2947 = vor.u32 %v2943, %v2946
        %v2948 = vrot.slane %v2947, 4
        %v2950 = vshll.u32 %v2578, 16
        %v2952 = vrot.slane %v2950, 5
        %v2953 = vsel %vm386, %v2948, %v2952
        %v2954 = vshrl.u32 %v2578, 16
        %v2956 = vrot.slane %v2954, 4
        %v2957 = vor.u32 %v2956, %v2952
        %v2958 = vrot.slane %v2957, 4
        %v2960 = vshll.u32 %v2579, 16
        %v2962 = vrot.slane %v2960, 5
        %v2963 = vsel %vm386, %v2958, %v2962
        %2964 = vrot.lane.b32.xlu0 %v2593, 28
        %v2965 = vpop.permute.xlu0 %2964
        %2966 = vrot.lane.b32.xlu0 %v2603, 28
        %v2967 = vpop.permute.xlu0 %2966
        %2968 = vrot.lane.b32.xlu0 %v2617, 28
        %v2969 = vpop.permute.xlu0 %2968
        %2970 = vrot.lane.b32.xlu0 %v2627, 28
        %v2971 = vpop.permute.xlu0 %2970
        %2972 = vrot.lane.b32.xlu0 %v2641, 28
        %v2973 = vpop.permute.xlu0 %2972
        %2974 = vrot.lane.b32.xlu0 %v2651, 28
        %v2975 = vpop.permute.xlu0 %2974
        %2976 = vrot.lane.b32.xlu0 %v2665, 28
        %v2977 = vpop.permute.xlu0 %2976
        %2978 = vrot.lane.b32.xlu0 %v2675, 28
        %v2979 = vpop.permute.xlu0 %2978
        %2980 = vrot.lane.b32.xlu0 %v2689, 28
        %v2981 = vpop.permute.xlu0 %2980
        %2982 = vrot.lane.b32.xlu0 %v2699, 28
        %v2983 = vpop.permute.xlu0 %2982
        %2984 = vrot.lane.b32.xlu0 %v2713, 28
        %v2985 = vpop.permute.xlu0 %2984
        %2986 = vrot.lane.b32.xlu0 %v2723, 28
        %v2987 = vpop.permute.xlu0 %2986
        %2988 = vrot.lane.b32.xlu0 %v2737, 28
        %v2989 = vpop.permute.xlu0 %2988
        %2990 = vrot.lane.b32.xlu0 %v2747, 28
        %v2991 = vpop.permute.xlu0 %2990
        %2992 = vrot.lane.b32.xlu0 %v2761, 28
        %v2993 = vpop.permute.xlu0 %2992
        %2994 = vrot.lane.b32.xlu0 %v2771, 28
        %v2995 = vpop.permute.xlu0 %2994
        %2996 = vrot.lane.b32.xlu0 %v2785, 28
        %v2997 = vpop.permute.xlu0 %2996
        %2998 = vrot.lane.b32.xlu0 %v2795, 28
        %v2999 = vpop.permute.xlu0 %2998
        %3000 = vrot.lane.b32.xlu0 %v2809, 28
        %v3001 = vpop.permute.xlu0 %3000
        %3002 = vrot.lane.b32.xlu0 %v2819, 28
        %v3003 = vpop.permute.xlu0 %3002
        %3004 = vrot.lane.b32.xlu0 %v2833, 28
        %v3005 = vpop.permute.xlu0 %3004
        %3006 = vrot.lane.b32.xlu0 %v2843, 28
        %v3007 = vpop.permute.xlu0 %3006
        %3008 = vrot.lane.b32.xlu0 %v2857, 28
        %v3009 = vpop.permute.xlu0 %3008
        %3010 = vrot.lane.b32.xlu0 %v2867, 28
        %v3011 = vpop.permute.xlu0 %3010
        %3012 = vrot.lane.b32.xlu0 %v2881, 28
        %v3013 = vpop.permute.xlu0 %3012
        %3014 = vrot.lane.b32.xlu0 %v2891, 28
        %v3015 = vpop.permute.xlu0 %3014
        %3016 = vrot.lane.b32.xlu0 %v2905, 28
        %v3017 = vpop.permute.xlu0 %3016
        %3018 = vrot.lane.b32.xlu0 %v2915, 28
        %v3019 = vpop.permute.xlu0 %3018
        %3020 = vrot.lane.b32.xlu0 %v2929, 28
        %v3021 = vpop.permute.xlu0 %3020
        %3022 = vrot.lane.b32.xlu0 %v2939, 28
        %v3023 = vpop.permute.xlu0 %3022
        %3024 = vrot.lane.b32.xlu0 %v2953, 28
        %v3025 = vpop.permute.xlu0 %3024
        %3026 = vrot.lane.b32.xlu0 %v2963, 28
        %v3027 = vpop.permute.xlu0 %3026
        %vm3060 = vcmask 257248
        %3061 = vst.msk [vmem:[#allocation2] sm:$0xf] %vm3060, %v2965
        %3062 = vst.msk [vmem:[#allocation2 + $0x4] sm:$0xf] %vm3060, %v2967
        %3063 = vst.msk [vmem:[#allocation2 + $0x8] sm:$0xf] %vm3060, %v2969
        %3064 = vst.msk [vmem:[#allocation2 + $0xc] sm:$0xf] %vm3060, %v2971
        %3065 = vst.msk [vmem:[#allocation2 + $0x10] sm:$0xf] %vm3060, %v2973
        %3066 = vst.msk [vmem:[#allocation2 + $0x14] sm:$0xf] %vm3060, %v2975
        %3067 = vst.msk [vmem:[#allocation2 + $0x18] sm:$0xf] %vm3060, %v2977
        %3068 = vst.msk [vmem:[#allocation2 + $0x1c] sm:$0xf] %vm3060, %v2979
        %3069 = vst.msk [vmem:[#allocation2 + $0x20] sm:$0xf] %vm3060, %v2981
        %3070 = vst.msk [vmem:[#allocation2 + $0x24] sm:$0xf] %vm3060, %v2983
        %3071 = vst.msk [vmem:[#allocation2 + $0x28] sm:$0xf] %vm3060, %v2985
        %3072 = vst.msk [vmem:[#allocation2 + $0x2c] sm:$0xf] %vm3060, %v2987
        %3073 = vst.msk [vmem:[#allocation2 + $0x30] sm:$0xf] %vm3060, %v2989
        %3074 = vst.msk [vmem:[#allocation2 + $0x34] sm:$0xf] %vm3060, %v2991
        %3075 = vst.msk [vmem:[#allocation2 + $0x38] sm:$0xf] %vm3060, %v2993
        %3076 = vst.msk [vmem:[#allocation2 + $0x3c] sm:$0xf] %vm3060, %v2995
        %3077 = vst.msk [vmem:[#allocation2 + $0x40] sm:$0xf] %vm3060, %v2997
        %3078 = vst.msk [vmem:[#allocation2 + $0x44] sm:$0xf] %vm3060, %v2999
        %3079 = vst.msk [vmem:[#allocation2 + $0x48] sm:$0xf] %vm3060, %v3001
        %3080 = vst.msk [vmem:[#allocation2 + $0x4c] sm:$0xf] %vm3060, %v3003
        %3081 = vst.msk [vmem:[#allocation2 + $0x50] sm:$0xf] %vm3060, %v3005
        %3082 = vst.msk [vmem:[#allocation2 + $0x54] sm:$0xf] %vm3060, %v3007
        %3083 = vst.msk [vmem:[#allocation2 + $0x58] sm:$0xf] %vm3060, %v3009
        %3084 = vst.msk [vmem:[#allocation2 + $0x5c] sm:$0xf] %vm3060, %v3011
        %3085 = vst.msk [vmem:[#allocation2 + $0x60] sm:$0xf] %vm3060, %v3013
        %3086 = vst.msk [vmem:[#allocation2 + $0x64] sm:$0xf] %vm3060, %v3015
        %3087 = vst.msk [vmem:[#allocation2 + $0x68] sm:$0xf] %vm3060, %v3017
        %3088 = vst.msk [vmem:[#allocation2 + $0x6c] sm:$0xf] %vm3060, %v3019
        %3089 = vst.msk [vmem:[#allocation2 + $0x70] sm:$0xf] %vm3060, %v3021
        %3090 = vst.msk [vmem:[#allocation2 + $0x74] sm:$0xf] %vm3060, %v3023
        %3091 = vst.msk [vmem:[#allocation2 + $0x78] sm:$0xf] %vm3060, %v3025
        %3092 = vst.msk [vmem:[#allocation2 + $0x7c] sm:$0xf] %vm3060, %v3027
        %v3093 = vld [vmem:[%s2338] sm:$0xe]
        %v3094 = vld [vmem:[%s2338 + $0x4] sm:$0xf]
        %v3095 = vld [vmem:[%s2338 + $0x8] sm:$0x1]
        %v3096 = vld [vmem:[%s2338 + $0xc] sm:$0xe]
        %v3097 = vld [vmem:[%s2338 + $0x10] sm:$0xf]
        %v3098 = vld [vmem:[%s2338 + $0x14] sm:$0x1]
        %v3099 = vld [vmem:[%s2338 + $0x18] sm:$0xe]
        %v3100 = vld [vmem:[%s2338 + $0x1c] sm:$0xf]
        %v3101 = vld [vmem:[%s2338 + $0x20] sm:$0x1]
        %v3102 = vld [vmem:[%s2338 + $0x24] sm:$0xe]
        %v3103 = vld [vmem:[%s2338 + $0x28] sm:$0xf]
        %v3104 = vld [vmem:[%s2338 + $0x2c] sm:$0x1]
        %v3105 = vld [vmem:[%s2338 + $0x30] sm:$0xe]
        %v3106 = vld [vmem:[%s2338 + $0x34] sm:$0xf]
        %v3107 = vld [vmem:[%s2338 + $0x38] sm:$0x1]
        %v3108 = vld [vmem:[%s2338 + $0x3c] sm:$0xe]
        %v3109 = vld [vmem:[%s2338 + $0x40] sm:$0xf]
        %v3110 = vld [vmem:[%s2338 + $0x44] sm:$0x1]
        %v3111 = vld [vmem:[%s2338 + $0x48] sm:$0xe]
        %v3112 = vld [vmem:[%s2338 + $0x4c] sm:$0xf]
        %v3113 = vld [vmem:[%s2338 + $0x50] sm:$0x1]
        %v3114 = vld [vmem:[%s2338 + $0x54] sm:$0xe]
        %v3115 = vld [vmem:[%s2338 + $0x58] sm:$0xf]
        %v3116 = vld [vmem:[%s2338 + $0x5c] sm:$0x1]
        %v3117 = vld [vmem:[%s2338 + $0x60] sm:$0xe]
        %v3118 = vld [vmem:[%s2338 + $0x64] sm:$0xf]
        %v3119 = vld [vmem:[%s2338 + $0x68] sm:$0x1]
        %v3120 = vld [vmem:[%s2338 + $0x6c] sm:$0xe]
        %v3121 = vld [vmem:[%s2338 + $0x70] sm:$0xf]
        %v3122 = vld [vmem:[%s2338 + $0x74] sm:$0x1]
        %v3123 = vld [vmem:[%s2338 + $0x78] sm:$0xe]
        %v3124 = vld [vmem:[%s2338 + $0x7c] sm:$0xf]
        %v3125 = vld [vmem:[%s2338 + $0x80] sm:$0x1]
        %v3126 = vld [vmem:[%s2338 + $0x84] sm:$0xe]
        %v3127 = vld [vmem:[%s2338 + $0x88] sm:$0xf]
        %v3128 = vld [vmem:[%s2338 + $0x8c] sm:$0x1]
        %v3129 = vld [vmem:[%s2338 + $0x90] sm:$0xe]
        %v3130 = vld [vmem:[%s2338 + $0x94] sm:$0xf]
        %v3131 = vld [vmem:[%s2338 + $0x98] sm:$0x1]
        %v3132 = vld [vmem:[%s2338 + $0x9c] sm:$0xe]
        %v3133 = vld [vmem:[%s2338 + $0xa0] sm:$0xf]
        %v3134 = vld [vmem:[%s2338 + $0xa4] sm:$0x1]
        %v3135 = vld [vmem:[%s2338 + $0xa8] sm:$0xe]
        %v3136 = vld [vmem:[%s2338 + $0xac] sm:$0xf]
        %v3137 = vld [vmem:[%s2338 + $0xb0] sm:$0x1]
        %v3138 = vld [vmem:[%s2338 + $0xb4] sm:$0xe]
        %v3139 = vld [vmem:[%s2338 + $0xb8] sm:$0xf]
        %v3140 = vld [vmem:[%s2338 + $0xbc] sm:$0x1]
        %v3189 = vrot.slane %v3093, 5
        %v3190 = vrot.slane %v3189, 4
        %v3191 = vrot.slane %v3094, 5
        %v3192 = vsel %vm998, %v3190, %v3191
        %v3193 = vrot.slane %v3191, 4
        %v3194 = vrot.slane %v3095, 5
        %v3195 = vsel %vm998, %v3193, %v3194
        %v3196 = vrot.slane %v3096, 5
        %v3197 = vrot.slane %v3196, 4
        %v3198 = vrot.slane %v3097, 5
        %v3199 = vsel %vm998, %v3197, %v3198
        %v3200 = vrot.slane %v3198, 4
        %v3201 = vrot.slane %v3098, 5
        %v3202 = vsel %vm998, %v3200, %v3201
        %v3203 = vrot.slane %v3099, 5
        %v3204 = vrot.slane %v3203, 4
        %v3205 = vrot.slane %v3100, 5
        %v3206 = vsel %vm998, %v3204, %v3205
        %v3207 = vrot.slane %v3205, 4
        %v3208 = vrot.slane %v3101, 5
        %v3209 = vsel %vm998, %v3207, %v3208
        %v3210 = vrot.slane %v3102, 5
        %v3211 = vrot.slane %v3210, 4
        %v3212 = vrot.slane %v3103, 5
        %v3213 = vsel %vm998, %v3211, %v3212
        %v3214 = vrot.slane %v3212, 4
        %v3215 = vrot.slane %v3104, 5
        %v3216 = vsel %vm998, %v3214, %v3215
        %v3217 = vrot.slane %v3105, 5
        %v3218 = vrot.slane %v3217, 4
        %v3219 = vrot.slane %v3106, 5
        %v3220 = vsel %vm998, %v3218, %v3219
        %v3221 = vrot.slane %v3219, 4
        %v3222 = vrot.slane %v3107, 5
        %v3223 = vsel %vm998, %v3221, %v3222
        %v3224 = vrot.slane %v3108, 5
        %v3225 = vrot.slane %v3224, 4
        %v3226 = vrot.slane %v3109, 5
        %v3227 = vsel %vm998, %v3225, %v3226
        %v3228 = vrot.slane %v3226, 4
        %v3229 = vrot.slane %v3110, 5
        %v3230 = vsel %vm998, %v3228, %v3229
        %v3231 = vrot.slane %v3111, 5
        %v3232 = vrot.slane %v3231, 4
        %v3233 = vrot.slane %v3112, 5
        %v3234 = vsel %vm998, %v3232, %v3233
        %v3235 = vrot.slane %v3233, 4
        %v3236 = vrot.slane %v3113, 5
        %v3237 = vsel %vm998, %v3235, %v3236
        %v3238 = vrot.slane %v3114, 5
        %v3239 = vrot.slane %v3238, 4
        %v3240 = vrot.slane %v3115, 5
        %v3241 = vsel %vm998, %v3239, %v3240
        %v3242 = vrot.slane %v3240, 4
        %v3243 = vrot.slane %v3116, 5
        %v3244 = vsel %vm998, %v3242, %v3243
        %v3245 = vrot.slane %v3117, 5
        %v3246 = vrot.slane %v3245, 4
        %v3247 = vrot.slane %v3118, 5
        %v3248 = vsel %vm998, %v3246, %v3247
        %v3249 = vrot.slane %v3247, 4
        %v3250 = vrot.slane %v3119, 5
        %v3251 = vsel %vm998, %v3249, %v3250
        %v3252 = vrot.slane %v3120, 5
        %v3253 = vrot.slane %v3252, 4
        %v3254 = vrot.slane %v3121, 5
        %v3255 = vsel %vm998, %v3253, %v3254
        %v3256 = vrot.slane %v3254, 4
        %v3257 = vrot.slane %v3122, 5
        %v3258 = vsel %vm998, %v3256, %v3257
        %v3259 = vrot.slane %v3123, 5
        %v3260 = vrot.slane %v3259, 4
        %v3261 = vrot.slane %v3124, 5
        %v3262 = vsel %vm998, %v3260, %v3261
        %v3263 = vrot.slane %v3261, 4
        %v3264 = vrot.slane %v3125, 5
        %v3265 = vsel %vm998, %v3263, %v3264
        %v3266 = vrot.slane %v3126, 5
        %v3267 = vrot.slane %v3266, 4
        %v3268 = vrot.slane %v3127, 5
        %v3269 = vsel %vm998, %v3267, %v3268
        %v3270 = vrot.slane %v3268, 4
        %v3271 = vrot.slane %v3128, 5
        %v3272 = vsel %vm998, %v3270, %v3271
        %v3273 = vrot.slane %v3129, 5
        %v3274 = vrot.slane %v3273, 4
        %v3275 = vrot.slane %v3130, 5
        %v3276 = vsel %vm998, %v3274, %v3275
        %v3277 = vrot.slane %v3275, 4
        %v3278 = vrot.slane %v3131, 5
        %v3279 = vsel %vm998, %v3277, %v3278
        %v3280 = vrot.slane %v3132, 5
        %v3281 = vrot.slane %v3280, 4
        %v3282 = vrot.slane %v3133, 5
        %v3283 = vsel %vm998, %v3281, %v3282
        %v3284 = vrot.slane %v3282, 4
        %v3285 = vrot.slane %v3134, 5
        %v3286 = vsel %vm998, %v3284, %v3285
        %v3287 = vrot.slane %v3135, 5
        %v3288 = vrot.slane %v3287, 4
        %v3289 = vrot.slane %v3136, 5
        %v3290 = vsel %vm998, %v3288, %v3289
        %v3291 = vrot.slane %v3289, 4
        %v3292 = vrot.slane %v3137, 5
        %v3293 = vsel %vm998, %v3291, %v3292
        %v3294 = vrot.slane %v3138, 5
        %v3295 = vrot.slane %v3294, 4
        %v3296 = vrot.slane %v3139, 5
        %v3297 = vsel %vm998, %v3295, %v3296
        %v3298 = vrot.slane %v3296, 4
        %v3299 = vrot.slane %v3140, 5
        %v3300 = vsel %vm998, %v3298, %v3299
        %3301 = vrot.lane.b32.xlu0 %v3192, 32
        %v3302 = vpop.permute.xlu0 %3301
        %3303 = vrot.lane.b32.xlu0 %v3195, 32
        %v3304 = vpop.permute.xlu0 %3303
        %3305 = vrot.lane.b32.xlu0 %v3199, 32
        %v3306 = vpop.permute.xlu0 %3305
        %3307 = vrot.lane.b32.xlu0 %v3202, 32
        %v3308 = vpop.permute.xlu0 %3307
        %3309 = vrot.lane.b32.xlu0 %v3206, 32
        %v3310 = vpop.permute.xlu0 %3309
        %3311 = vrot.lane.b32.xlu0 %v3209, 32
        %v3312 = vpop.permute.xlu0 %3311
        %3313 = vrot.lane.b32.xlu0 %v3213, 32
        %v3314 = vpop.permute.xlu0 %3313
        %3315 = vrot.lane.b32.xlu0 %v3216, 32
        %v3316 = vpop.permute.xlu0 %3315
        %3317 = vrot.lane.b32.xlu0 %v3220, 32
        %v3318 = vpop.permute.xlu0 %3317
        %3319 = vrot.lane.b32.xlu0 %v3223, 32
        %v3320 = vpop.permute.xlu0 %3319
        %3321 = vrot.lane.b32.xlu0 %v3227, 32
        %v3322 = vpop.permute.xlu0 %3321
        %3323 = vrot.lane.b32.xlu0 %v3230, 32
        %v3324 = vpop.permute.xlu0 %3323
        %3325 = vrot.lane.b32.xlu0 %v3234, 32
        %v3326 = vpop.permute.xlu0 %3325
        %3327 = vrot.lane.b32.xlu0 %v3237, 32
        %v3328 = vpop.permute.xlu0 %3327
        %3329 = vrot.lane.b32.xlu0 %v3241, 32
        %v3330 = vpop.permute.xlu0 %3329
        %3331 = vrot.lane.b32.xlu0 %v3244, 32
        %v3332 = vpop.permute.xlu0 %3331
        %3333 = vrot.lane.b32.xlu0 %v3248, 32
        %v3334 = vpop.permute.xlu0 %3333
        %3335 = vrot.lane.b32.xlu0 %v3251, 32
        %v3336 = vpop.permute.xlu0 %3335
        %3337 = vrot.lane.b32.xlu0 %v3255, 32
        %v3338 = vpop.permute.xlu0 %3337
        %3339 = vrot.lane.b32.xlu0 %v3258, 32
        %v3340 = vpop.permute.xlu0 %3339
        %3341 = vrot.lane.b32.xlu0 %v3262, 32
        %v3342 = vpop.permute.xlu0 %3341
        %3343 = vrot.lane.b32.xlu0 %v3265, 32
        %v3344 = vpop.permute.xlu0 %3343
        %3345 = vrot.lane.b32.xlu0 %v3269, 32
        %v3346 = vpop.permute.xlu0 %3345
        %3347 = vrot.lane.b32.xlu0 %v3272, 32
        %v3348 = vpop.permute.xlu0 %3347
        %3349 = vrot.lane.b32.xlu0 %v3276, 32
        %v3350 = vpop.permute.xlu0 %3349
        %3351 = vrot.lane.b32.xlu0 %v3279, 32
        %v3352 = vpop.permute.xlu0 %3351
        %3353 = vrot.lane.b32.xlu0 %v3283, 32
        %v3354 = vpop.permute.xlu0 %3353
        %3355 = vrot.lane.b32.xlu0 %v3286, 32
        %v3356 = vpop.permute.xlu0 %3355
        %3357 = vrot.lane.b32.xlu0 %v3290, 32
        %v3358 = vpop.permute.xlu0 %3357
        %3359 = vrot.lane.b32.xlu0 %v3293, 32
        %v3360 = vpop.permute.xlu0 %3359
        %3361 = vrot.lane.b32.xlu0 %v3297, 32
        %v3362 = vpop.permute.xlu0 %3361
        %3363 = vrot.lane.b32.xlu0 %v3300, 32
        %v3364 = vpop.permute.xlu0 %3363
        %vm3397 = vcmask 290048
        %3398 = vst.msk [vmem:[#allocation2] sm:$0xf] %vm3397, %v3302
        %3399 = vst.msk [vmem:[#allocation2 + $0x4] sm:$0xf] %vm3397, %v3304
        %3400 = vst.msk [vmem:[#allocation2 + $0x8] sm:$0xf] %vm3397, %v3306
        %3401 = vst.msk [vmem:[#allocation2 + $0xc] sm:$0xf] %vm3397, %v3308
        %3402 = vst.msk [vmem:[#allocation2 + $0x10] sm:$0xf] %vm3397, %v3310
        %3403 = vst.msk [vmem:[#allocation2 + $0x14] sm:$0xf] %vm3397, %v3312
        %3404 = vst.msk [vmem:[#allocation2 + $0x18] sm:$0xf] %vm3397, %v3314
        %3405 = vst.msk [vmem:[#allocation2 + $0x1c] sm:$0xf] %vm3397, %v3316
        %3406 = vst.msk [vmem:[#allocation2 + $0x20] sm:$0xf] %vm3397, %v3318
        %3407 = vst.msk [vmem:[#allocation2 + $0x24] sm:$0xf] %vm3397, %v3320
        %3408 = vst.msk [vmem:[#allocation2 + $0x28] sm:$0xf] %vm3397, %v3322
        %3409 = vst.msk [vmem:[#allocation2 + $0x2c] sm:$0xf] %vm3397, %v3324
        %3410 = vst.msk [vmem:[#allocation2 + $0x30] sm:$0xf] %vm3397, %v3326
        %3411 = vst.msk [vmem:[#allocation2 + $0x34] sm:$0xf] %vm3397, %v3328
        %3412 = vst.msk [vmem:[#allocation2 + $0x38] sm:$0xf] %vm3397, %v3330
        %3413 = vst.msk [vmem:[#allocation2 + $0x3c] sm:$0xf] %vm3397, %v3332
        %3414 = vst.msk [vmem:[#allocation2 + $0x40] sm:$0xf] %vm3397, %v3334
        %3415 = vst.msk [vmem:[#allocation2 + $0x44] sm:$0xf] %vm3397, %v3336
        %3416 = vst.msk [vmem:[#allocation2 + $0x48] sm:$0xf] %vm3397, %v3338
        %3417 = vst.msk [vmem:[#allocation2 + $0x4c] sm:$0xf] %vm3397, %v3340
        %3418 = vst.msk [vmem:[#allocation2 + $0x50] sm:$0xf] %vm3397, %v3342
        %3419 = vst.msk [vmem:[#allocation2 + $0x54] sm:$0xf] %vm3397, %v3344
        %3420 = vst.msk [vmem:[#allocation2 + $0x58] sm:$0xf] %vm3397, %v3346
        %3421 = vst.msk [vmem:[#allocation2 + $0x5c] sm:$0xf] %vm3397, %v3348
        %3422 = vst.msk [vmem:[#allocation2 + $0x60] sm:$0xf] %vm3397, %v3350
        %3423 = vst.msk [vmem:[#allocation2 + $0x64] sm:$0xf] %vm3397, %v3352
        %3424 = vst.msk [vmem:[#allocation2 + $0x68] sm:$0xf] %vm3397, %v3354
        %3425 = vst.msk [vmem:[#allocation2 + $0x6c] sm:$0xf] %vm3397, %v3356
        %3426 = vst.msk [vmem:[#allocation2 + $0x70] sm:$0xf] %vm3397, %v3358
        %3427 = vst.msk [vmem:[#allocation2 + $0x74] sm:$0xf] %vm3397, %v3360
        %3428 = vst.msk [vmem:[#allocation2 + $0x78] sm:$0xf] %vm3397, %v3362
        %3429 = vst.msk [vmem:[#allocation2 + $0x7c] sm:$0xf] %vm3397, %v3364
        %v3430 = vld [vmem:[#allocation2] sm:$0xf]
        %v3431 = vld [vmem:[#allocation2 + $0x4] sm:$0xf]
        %v3432 = vld [vmem:[#allocation2 + $0x8] sm:$0xf]
        %v3433 = vld [vmem:[#allocation2 + $0xc] sm:$0xf]
        %v3434 = vld [vmem:[#allocation2 + $0x10] sm:$0xf]
        %v3435 = vld [vmem:[#allocation2 + $0x14] sm:$0xf]
        %v3436 = vld [vmem:[#allocation2 + $0x18] sm:$0xf]
        %v3437 = vld [vmem:[#allocation2 + $0x1c] sm:$0xf]
        %v3438 = vld [vmem:[#allocation2 + $0x20] sm:$0xf]
        %v3439 = vld [vmem:[#allocation2 + $0x24] sm:$0xf]
        %v3440 = vld [vmem:[#allocation2 + $0x28] sm:$0xf]
        %v3441 = vld [vmem:[#allocation2 + $0x2c] sm:$0xf]
        %v3442 = vld [vmem:[#allocation2 + $0x30] sm:$0xf]
        %v3443 = vld [vmem:[#allocation2 + $0x34] sm:$0xf]
        %v3444 = vld [vmem:[#allocation2 + $0x38] sm:$0xf]
        %v3445 = vld [vmem:[#allocation2 + $0x3c] sm:$0xf]
        %v3446 = vld [vmem:[#allocation2 + $0x40] sm:$0xf]
        %v3447 = vld [vmem:[#allocation2 + $0x44] sm:$0xf]
        %v3448 = vld [vmem:[#allocation2 + $0x48] sm:$0xf]
        %v3449 = vld [vmem:[#allocation2 + $0x4c] sm:$0xf]
        %v3450 = vld [vmem:[#allocation2 + $0x50] sm:$0xf]
        %v3451 = vld [vmem:[#allocation2 + $0x54] sm:$0xf]
        %v3452 = vld [vmem:[#allocation2 + $0x58] sm:$0xf]
        %v3453 = vld [vmem:[#allocation2 + $0x5c] sm:$0xf]
        %v3454 = vld [vmem:[#allocation2 + $0x60] sm:$0xf]
        %v3455 = vld [vmem:[#allocation2 + $0x64] sm:$0xf]
        %v3456 = vld [vmem:[#allocation2 + $0x68] sm:$0xf]
        %v3457 = vld [vmem:[#allocation2 + $0x6c] sm:$0xf]
        %v3458 = vld [vmem:[#allocation2 + $0x70] sm:$0xf]
        %v3459 = vld [vmem:[#allocation2 + $0x74] sm:$0xf]
        %v3460 = vld [vmem:[#allocation2 + $0x78] sm:$0xf]
        %v3461 = vld [vmem:[#allocation2 + $0x7c] sm:$0xf]
        %v3462 = vld [vmem:[%s257] sm:$0xf]
        %v3463 = vld [vmem:[%s257 + $0x4] sm:$0xf]
        %v3464 = vld [vmem:[%s257 + $0x8] sm:$0xf]
        %v3465 = vld [vmem:[%s257 + $0xc] sm:$0xf]
        %v3466 = vld [vmem:[%s257 + $0x10] sm:$0x3]
        %v3467 = vld [vmem:[%s263] sm:$0x1]
        %v3469 = vperm.slane %v3467, 0
        %v3503 = vunpack.c.l.b16 %v3430
        %v3504 = vunpack.c.l.b16 %v3431
        %v3505 = vunpack.c.l.b16 %v3432
        %v3506 = vunpack.c.l.b16 %v3433
        %v3507 = vunpack.c.l.b16 %v3434
        %v3508 = vunpack.c.l.b16 %v3435
        %v3509 = vunpack.c.l.b16 %v3436
        %v3510 = vunpack.c.l.b16 %v3437
        %v3511 = vunpack.c.l.b16 %v3438
        %v3512 = vunpack.c.l.b16 %v3439
        %v3513 = vunpack.c.l.b16 %v3440
        %v3514 = vunpack.c.l.b16 %v3441
        %v3515 = vunpack.c.l.b16 %v3442
        %v3516 = vunpack.c.l.b16 %v3443
        %v3517 = vunpack.c.l.b16 %v3444
        %v3518 = vunpack.c.l.b16 %v3445
        %v3519 = vunpack.c.l.b16 %v3446
        %v3520 = vunpack.c.l.b16 %v3447
        %v3521 = vunpack.c.l.b16 %v3448
        %v3522 = vunpack.c.l.b16 %v3449
        %v3523 = vunpack.c.l.b16 %v3450
        %v3524 = vunpack.c.l.b16 %v3451
        %v3525 = vunpack.c.l.b16 %v3452
        %v3526 = vunpack.c.l.b16 %v3453
        %v3527 = vunpack.c.l.b16 %v3454
        %v3528 = vunpack.c.l.b16 %v3455
        %v3529 = vunpack.c.l.b16 %v3456
        %v3530 = vunpack.c.l.b16 %v3457
        %v3531 = vunpack.c.l.b16 %v3458
        %v3532 = vunpack.c.l.b16 %v3459
        %v3533 = vunpack.c.l.b16 %v3460
        %v3534 = vunpack.c.l.b16 %v3461
        %v3535 = vpack.c.b16 %v3504, %v3503
        %v3536 = vpack.c.b16 %v3506, %v3505
        %v3537 = vpack.c.b16 %v3508, %v3507
        %v3538 = vpack.c.b16 %v3510, %v3509
        %v3539 = vpack.c.b16 %v3512, %v3511
        %v3540 = vpack.c.b16 %v3514, %v3513
        %v3541 = vpack.c.b16 %v3516, %v3515
        %v3542 = vpack.c.b16 %v3518, %v3517
        %v3543 = vpack.c.b16 %v3520, %v3519
        %v3544 = vpack.c.b16 %v3522, %v3521
        %v3545 = vpack.c.b16 %v3524, %v3523
        %v3546 = vpack.c.b16 %v3526, %v3525
        %v3547 = vpack.c.b16 %v3528, %v3527
        %v3548 = vpack.c.b16 %v3530, %v3529
        %v3549 = vpack.c.b16 %v3532, %v3531
        %v3550 = vpack.c.b16 %v3534, %v3533
        %v3556 = vunpack.c.l.b16 %v3462
        %v3557 = vunpack.c.l.b16 %v3463
        %v3558 = vunpack.c.l.b16 %v3464
        %v3559 = vunpack.c.l.b16 %v3465
        %v3560 = vunpack.c.l.b16 %v3466
        %v3561 = vpack.c.b16 %v3557, %v3556
        %v3562 = vpack.c.b16 %v3559, %v3558
        %v3563 = vpack.c.b16 %v3560, %v3560
        %vm3566 = vcmask 293888
        %v3568 = vsel %vm3566, %v3535, 0
        %v3571 = vsel %vm3566, %v3536, 0
        %v3574 = vsel %vm3566, %v3537, 0
        %v3577 = vsel %vm3566, %v3538, 0
        %v3580 = vsel %vm3566, %v3539, 0
        %v3583 = vsel %vm3566, %v3540, 0
        %v3586 = vsel %vm3566, %v3541, 0
        %v3589 = vsel %vm3566, %v3542, 0
        %v3592 = vsel %vm3566, %v3543, 0
        %v3595 = vsel %vm3566, %v3544, 0
        %v3598 = vsel %vm3566, %v3545, 0
        %v3601 = vsel %vm3566, %v3546, 0
        %v3604 = vsel %vm3566, %v3547, 0
        %v3607 = vsel %vm3566, %v3548, 0
        %v3610 = vsel %vm3566, %v3549, 0
        %v3613 = vsel %vm3566, %v3550, 0
        %vm3615 = vcmask 1041408
        %v3617 = vsel %vm3615, %v3563, 0
        %3619 = vmatpush.bf16.msra.mxu0 0
        %3620 = vmatpush.bf16.msra.mxu0 0
        %3621 = vmatpush.bf16.msra.mxu0 0
        %3622 = vmatpush.bf16.msra.mxu0 0
        %3623 = vmatpush.bf16.msra.mxu0 0
        %3624 = vmatpush.bf16.msra.mxu0 %v3617
        %3625 = vmatpush.bf16.msra.mxu0 %v3562
        %3626 = vmatpush.bf16.msra.mxu0 %v3561
        %3627 = vmatmul.bf16.gmra.mxu0 %v3568
        %v3628 = vpop.f32.mrf.mxu0
        %v3629 = vadd.f32 %v3469, %v3628
        %v3630 = vpop.f32.mrf.mxu0
        %v3631 = vadd.f32 %v3469, %v3630
        %3632 = vmatmul.bf16.gmra.mxu0 %v3571
        %v3633 = vpop.f32.mrf.mxu0
        %v3634 = vadd.f32 %v3469, %v3633
        %v3635 = vpop.f32.mrf.mxu0
        %v3636 = vadd.f32 %v3469, %v3635
        %3637 = vmatmul.bf16.gmra.mxu0 %v3574
        %v3638 = vpop.f32.mrf.mxu0
        %v3639 = vadd.f32 %v3469, %v3638
        %v3640 = vpop.f32.mrf.mxu0
        %v3641 = vadd.f32 %v3469, %v3640
        %3642 = vmatmul.bf16.gmra.mxu0 %v3577
        %v3643 = vpop.f32.mrf.mxu0
        %v3644 = vadd.f32 %v3469, %v3643
        %v3645 = vpop.f32.mrf.mxu0
        %v3646 = vadd.f32 %v3469, %v3645
        %3647 = vmatmul.bf16.gmra.mxu0 %v3580
        %v3648 = vpop.f32.mrf.mxu0
        %v3649 = vadd.f32 %v3469, %v3648
        %v3650 = vpop.f32.mrf.mxu0
        %v3651 = vadd.f32 %v3469, %v3650
        %3652 = vmatmul.bf16.gmra.mxu0 %v3583
        %v3653 = vpop.f32.mrf.mxu0
        %v3654 = vadd.f32 %v3469, %v3653
        %v3655 = vpop.f32.mrf.mxu0
        %v3656 = vadd.f32 %v3469, %v3655
        %3657 = vmatmul.bf16.gmra.mxu0 %v3586
        %v3658 = vpop.f32.mrf.mxu0
        %v3659 = vadd.f32 %v3469, %v3658
        %v3660 = vpop.f32.mrf.mxu0
        %v3661 = vadd.f32 %v3469, %v3660
        %3662 = vmatmul.bf16.gmra.mxu0 %v3589
        %v3663 = vpop.f32.mrf.mxu0
        %v3664 = vadd.f32 %v3469, %v3663
        %v3665 = vpop.f32.mrf.mxu0
        %v3666 = vadd.f32 %v3469, %v3665
        %3667 = vmatmul.bf16.gmra.mxu0 %v3592
        %v3668 = vpop.f32.mrf.mxu0
        %v3669 = vadd.f32 %v3469, %v3668
        %v3670 = vpop.f32.mrf.mxu0
        %v3671 = vadd.f32 %v3469, %v3670
        %3672 = vmatmul.bf16.gmra.mxu0 %v3595
        %v3673 = vpop.f32.mrf.mxu0
        %v3674 = vadd.f32 %v3469, %v3673
        %v3675 = vpop.f32.mrf.mxu0
        %v3676 = vadd.f32 %v3469, %v3675
        %3677 = vmatmul.bf16.gmra.mxu0 %v3598
        %v3678 = vpop.f32.mrf.mxu0
        %v3679 = vadd.f32 %v3469, %v3678
        %v3680 = vpop.f32.mrf.mxu0
        %v3681 = vadd.f32 %v3469, %v3680
        %3682 = vmatmul.bf16.gmra.mxu0 %v3601
        %v3683 = vpop.f32.mrf.mxu0
        %v3684 = vadd.f32 %v3469, %v3683
        %v3685 = vpop.f32.mrf.mxu0
        %v3686 = vadd.f32 %v3469, %v3685
        %3687 = vmatmul.bf16.gmra.mxu0 %v3604
        %v3688 = vpop.f32.mrf.mxu0
        %v3689 = vadd.f32 %v3469, %v3688
        %v3690 = vpop.f32.mrf.mxu0
        %v3691 = vadd.f32 %v3469, %v3690
        %3692 = vmatmul.bf16.gmra.mxu0 %v3607
        %v3693 = vpop.f32.mrf.mxu0
        %v3694 = vadd.f32 %v3469, %v3693
        %v3695 = vpop.f32.mrf.mxu0
        %v3696 = vadd.f32 %v3469, %v3695
        %3697 = vmatmul.bf16.gmra.mxu0 %v3610
        %v3698 = vpop.f32.mrf.mxu0
        %v3699 = vadd.f32 %v3469, %v3698
        %v3700 = vpop.f32.mrf.mxu0
        %v3701 = vadd.f32 %v3469, %v3700
        %3702 = vmatmul.bf16.gmra.mxu0 %v3613
        %v3703 = vpop.f32.mrf.mxu0
        %v3704 = vadd.f32 %v3469, %v3703
        %v3705 = vpop.f32.mrf.mxu0
        %v3706 = vadd.f32 %v3469, %v3705
        %3707 = vdwg.mxu0
        %v3708 = vadd.f32 %v3629, 3.0
        %v3709 = vadd.f32 %v3631, 3.0
        %v3710 = vadd.f32 %v3634, 3.0
        %v3711 = vadd.f32 %v3636, 3.0
        %v3712 = vadd.f32 %v3639, 3.0
        %v3713 = vadd.f32 %v3641, 3.0
        %v3714 = vadd.f32 %v3644, 3.0
        %v3715 = vadd.f32 %v3646, 3.0
        %v3716 = vadd.f32 %v3649, 3.0
        %v3717 = vadd.f32 %v3651, 3.0
        %v3718 = vadd.f32 %v3654, 3.0
        %v3719 = vadd.f32 %v3656, 3.0
        %v3720 = vadd.f32 %v3659, 3.0
        %v3721 = vadd.f32 %v3661, 3.0
        %v3722 = vadd.f32 %v3664, 3.0
        %v3723 = vadd.f32 %v3666, 3.0
        %v3724 = vadd.f32 %v3669, 3.0
        %v3725 = vadd.f32 %v3671, 3.0
        %v3726 = vadd.f32 %v3674, 3.0
        %v3727 = vadd.f32 %v3676, 3.0
        %v3728 = vadd.f32 %v3679, 3.0
        %v3729 = vadd.f32 %v3681, 3.0
        %v3730 = vadd.f32 %v3684, 3.0
        %v3731 = vadd.f32 %v3686, 3.0
        %v3732 = vadd.f32 %v3689, 3.0
        %v3733 = vadd.f32 %v3691, 3.0
        %v3734 = vadd.f32 %v3694, 3.0
        %v3735 = vadd.f32 %v3696, 3.0
        %v3736 = vadd.f32 %v3699, 3.0
        %v3737 = vadd.f32 %v3701, 3.0
        %v3738 = vadd.f32 %v3704, 3.0
        %v3739 = vadd.f32 %v3706, 3.0
        %v3740 = vmax.f32 %v3708, 0.0
        %v3741 = vmax.f32 %v3709, 0.0
        %v3742 = vmax.f32 %v3710, 0.0
        %v3743 = vmax.f32 %v3711, 0.0
        %v3744 = vmax.f32 %v3712, 0.0
        %v3745 = vmax.f32 %v3713, 0.0
        %v3746 = vmax.f32 %v3714, 0.0
        %v3747 = vmax.f32 %v3715, 0.0
        %v3748 = vmax.f32 %v3716, 0.0
        %v3749 = vmax.f32 %v3717, 0.0
        %v3750 = vmax.f32 %v3718, 0.0
        %v3751 = vmax.f32 %v3719, 0.0
        %v3752 = vmax.f32 %v3720, 0.0
        %v3753 = vmax.f32 %v3721, 0.0
        %v3754 = vmax.f32 %v3722, 0.0
        %v3755 = vmax.f32 %v3723, 0.0
        %v3756 = vmax.f32 %v3724, 0.0
        %v3757 = vmax.f32 %v3725, 0.0
        %v3758 = vmax.f32 %v3726, 0.0
        %v3759 = vmax.f32 %v3727, 0.0
        %v3760 = vmax.f32 %v3728, 0.0
        %v3761 = vmax.f32 %v3729, 0.0
        %v3762 = vmax.f32 %v3730, 0.0
        %v3763 = vmax.f32 %v3731, 0.0
        %v3764 = vmax.f32 %v3732, 0.0
        %v3765 = vmax.f32 %v3733, 0.0
        %v3766 = vmax.f32 %v3734, 0.0
        %v3767 = vmax.f32 %v3735, 0.0
        %v3768 = vmax.f32 %v3736, 0.0
        %v3769 = vmax.f32 %v3737, 0.0
        %v3770 = vmax.f32 %v3738, 0.0
        %v3771 = vmax.f32 %v3739, 0.0
        %v3772 = vmin.f32 %v3740, 6.0
        %v3773 = vmin.f32 %v3741, 6.0
        %v3774 = vmin.f32 %v3742, 6.0
        %v3775 = vmin.f32 %v3743, 6.0
        %v3776 = vmin.f32 %v3744, 6.0
        %v3777 = vmin.f32 %v3745, 6.0
        %v3778 = vmin.f32 %v3746, 6.0
        %v3779 = vmin.f32 %v3747, 6.0
        %v3780 = vmin.f32 %v3748, 6.0
        %v3781 = vmin.f32 %v3749, 6.0
        %v3782 = vmin.f32 %v3750, 6.0
        %v3783 = vmin.f32 %v3751, 6.0
        %v3784 = vmin.f32 %v3752, 6.0
        %v3785 = vmin.f32 %v3753, 6.0
        %v3786 = vmin.f32 %v3754, 6.0
        %v3787 = vmin.f32 %v3755, 6.0
        %v3788 = vmin.f32 %v3756, 6.0
        %v3789 = vmin.f32 %v3757, 6.0
        %v3790 = vmin.f32 %v3758, 6.0
        %v3791 = vmin.f32 %v3759, 6.0
        %v3792 = vmin.f32 %v3760, 6.0
        %v3793 = vmin.f32 %v3761, 6.0
        %v3794 = vmin.f32 %v3762, 6.0
        %v3795 = vmin.f32 %v3763, 6.0
        %v3796 = vmin.f32 %v3764, 6.0
        %v3797 = vmin.f32 %v3765, 6.0
        %v3798 = vmin.f32 %v3766, 6.0
        %v3799 = vmin.f32 %v3767, 6.0
        %v3800 = vmin.f32 %v3768, 6.0
        %v3801 = vmin.f32 %v3769, 6.0
        %v3802 = vmin.f32 %v3770, 6.0
        %v3803 = vmin.f32 %v3771, 6.0
        %v3804 = vmul.f32 %v3772, 0.16666667
        %v3805 = vmul.f32 %v3773, 0.16666667
        %v3806 = vmul.f32 %v3774, 0.16666667
        %v3807 = vmul.f32 %v3775, 0.16666667
        %v3808 = vmul.f32 %v3776, 0.16666667
        %v3809 = vmul.f32 %v3777, 0.16666667
        %v3810 = vmul.f32 %v3778, 0.16666667
        %v3811 = vmul.f32 %v3779, 0.16666667
        %v3812 = vmul.f32 %v3780, 0.16666667
        %v3813 = vmul.f32 %v3781, 0.16666667
        %v3814 = vmul.f32 %v3782, 0.16666667
        %v3815 = vmul.f32 %v3783, 0.16666667
        %v3816 = vmul.f32 %v3784, 0.16666667
        %v3817 = vmul.f32 %v3785, 0.16666667
        %v3818 = vmul.f32 %v3786, 0.16666667
        %v3819 = vmul.f32 %v3787, 0.16666667
        %v3820 = vmul.f32 %v3788, 0.16666667
        %v3821 = vmul.f32 %v3789, 0.16666667
        %v3822 = vmul.f32 %v3790, 0.16666667
        %v3823 = vmul.f32 %v3791, 0.16666667
        %v3824 = vmul.f32 %v3792, 0.16666667
        %v3825 = vmul.f32 %v3793, 0.16666667
        %v3826 = vmul.f32 %v3794, 0.16666667
        %v3827 = vmul.f32 %v3795, 0.16666667
        %v3828 = vmul.f32 %v3796, 0.16666667
        %v3829 = vmul.f32 %v3797, 0.16666667
        %v3830 = vmul.f32 %v3798, 0.16666667
        %v3831 = vmul.f32 %v3799, 0.16666667
        %v3832 = vmul.f32 %v3800, 0.16666667
        %v3833 = vmul.f32 %v3801, 0.16666667
        %v3834 = vmul.f32 %v3802, 0.16666667
        %v3835 = vmul.f32 %v3803, 0.16666667
        %v3836 = vmul.f32 %v3629, %v3804
        %v3837 = vmul.f32 %v3631, %v3805
        %v3838 = vmul.f32 %v3634, %v3806
        %v3839 = vmul.f32 %v3636, %v3807
        %v3840 = vmul.f32 %v3639, %v3808
        %v3841 = vmul.f32 %v3641, %v3809
        %v3842 = vmul.f32 %v3644, %v3810
        %v3843 = vmul.f32 %v3646, %v3811
        %v3844 = vmul.f32 %v3649, %v3812
        %v3845 = vmul.f32 %v3651, %v3813
        %v3846 = vmul.f32 %v3654, %v3814
        %v3847 = vmul.f32 %v3656, %v3815
        %v3848 = vmul.f32 %v3659, %v3816
        %v3849 = vmul.f32 %v3661, %v3817
        %v3850 = vmul.f32 %v3664, %v3818
        %v3851 = vmul.f32 %v3666, %v3819
        %v3852 = vmul.f32 %v3669, %v3820
        %v3853 = vmul.f32 %v3671, %v3821
        %v3854 = vmul.f32 %v3674, %v3822
        %v3855 = vmul.f32 %v3676, %v3823
        %v3856 = vmul.f32 %v3679, %v3824
        %v3857 = vmul.f32 %v3681, %v3825
        %v3858 = vmul.f32 %v3684, %v3826
        %v3859 = vmul.f32 %v3686, %v3827
        %v3860 = vmul.f32 %v3689, %v3828
        %v3861 = vmul.f32 %v3691, %v3829
        %v3862 = vmul.f32 %v3694, %v3830
        %v3863 = vmul.f32 %v3696, %v3831
        %v3864 = vmul.f32 %v3699, %v3832
        %v3865 = vmul.f32 %v3701, %v3833
        %v3866 = vmul.f32 %v3704, %v3834
        %v3867 = vmul.f32 %v3706, %v3835
        %3868 = vst [vmem:[%s242] sm:$0xff] %v3836
        %3869 = vst [vmem:[%s242 + $0x8] sm:$0xff] %v3837
        %3870 = vst [vmem:[%s242 + $0x10] sm:$0xff] %v3838
        %3871 = vst [vmem:[%s242 + $0x18] sm:$0xff] %v3839
        %3872 = vst [vmem:[%s242 + $0x20] sm:$0xff] %v3840
        %3873 = vst [vmem:[%s242 + $0x28] sm:$0xff] %v3841
        %3874 = vst [vmem:[%s242 + $0x30] sm:$0xff] %v3842
        %3875 = vst [vmem:[%s242 + $0x38] sm:$0xff] %v3843
        %3876 = vst [vmem:[%s242 + $0x40] sm:$0xff] %v3844
        %3877 = vst [vmem:[%s242 + $0x48] sm:$0xff] %v3845
        %3878 = vst [vmem:[%s242 + $0x50] sm:$0xff] %v3846
        %3879 = vst [vmem:[%s242 + $0x58] sm:$0xff] %v3847
        %3880 = vst [vmem:[%s242 + $0x60] sm:$0xff] %v3848
        %3881 = vst [vmem:[%s242 + $0x68] sm:$0xff] %v3849
        %3882 = vst [vmem:[%s242 + $0x70] sm:$0xff] %v3850
        %3883 = vst [vmem:[%s242 + $0x78] sm:$0xff] %v3851
        %3884 = vst [vmem:[%s242 + $0x80] sm:$0xff] %v3852
        %3885 = vst [vmem:[%s242 + $0x88] sm:$0xff] %v3853
        %3886 = vst [vmem:[%s242 + $0x90] sm:$0xff] %v3854
        %3887 = vst [vmem:[%s242 + $0x98] sm:$0xff] %v3855
        %3888 = vst [vmem:[%s242 + $0xa0] sm:$0xff] %v3856
        %3889 = vst [vmem:[%s242 + $0xa8] sm:$0xff] %v3857
        %3890 = vst [vmem:[%s242 + $0xb0] sm:$0xff] %v3858
        %3891 = vst [vmem:[%s242 + $0xb8] sm:$0xff] %v3859
        %3892 = vst [vmem:[%s242 + $0xc0] sm:$0xff] %v3860
        %3893 = vst [vmem:[%s242 + $0xc8] sm:$0xff] %v3861
        %3894 = vst [vmem:[%s242 + $0xd0] sm:$0xff] %v3862
        %3895 = vst [vmem:[%s242 + $0xd8] sm:$0xff] %v3863
        %3896 = vst [vmem:[%s242 + $0xe0] sm:$0xff] %v3864
        %3897 = vst [vmem:[%s242 + $0xe8] sm:$0xff] %v3865
        %3898 = vst [vmem:[%s242 + $0xf0] sm:$0xff] %v3866
        %3899 = vst [vmem:[%s242 + $0xf8] sm:$0xff] %v3867
        %s3900 = sand.u32 %s141, 1
        %s3901 = scalar_lea.sflag [#allocation4], %s3900
        %s3902 = sand.u32 %s141, 1
        %s3903 = smul.addr %s3902, 256
        %s3904 = scalar_lea.vmem [#allocation3], %s3903
        // Predicated region
        $region33: #{tpu_custom_call.1} parent=31 // pred_check
          %p3905 = pneg %p151
        $region34: #{tpu_custom_call.1} parent=31 // pred_check_branch
          %3907 = sbr.rel (%p3905) target = $region36
        $region35: #{tpu_custom_call.1} parent=31 // pred_region
          %s3908 = sadd.s32 %s25, %s23
          %s3909 = smul.u32 32, %s26
          %3911 = vsyncadd %s3901, 0
          %s3912 = sadd.s32 %s24, %s3909
          %s3913 = smul.addr %s3908, 32
          %s3914 = sadd.s32 %s3912, %s3913
          %s3915 = smul.addr %s3914, 8
          %s3916 = scalar_lea.hbm %s3, %s3915
          %s3917 = sshll.u32 %s3904, 4
          %s3918 = int_to_ptr.vmem [resolvable:$true] %s3917
          %s3919 = sshll.u32 %s3916, 4
          %s3920 = int_to_ptr.hbm [resolvable:$true] %s3919
          %3925 = dma.vmem_to_hbm [thread:$0]  %s3918, 4096, %s3920, %s3901, 128, 128, 8
        $region36: #{tpu_custom_call.1} parent=31 // pred_fallthru
          _
      $region32: #{tpu_custom_call.1} parent=5 // pred_fallthru
        _
      %p3926 = scmp.le.s32.totalorder 2, %s12
      // Predicated region
      $region37: #{tpu_custom_call.1} parent=5 // pred_check
        %p3927 = pneg %p3926
      $region38: #{tpu_custom_call.1} parent=5 // pred_check_branch
        %3929 = sbr.rel (%p3927) target = $region40
      $region39: #{tpu_custom_call.1} parent=5 // pred_region
        %s3930 = ssub.s32 %s12, 2
        // Predicated region
        $region41: #{tpu_custom_call.1} parent=39 // pred_check
          %p3931 = pneg %p157
        $region42: #{tpu_custom_call.1} parent=39 // pred_check_branch
          %3933 = sbr.rel (%p3931) target = $region44
        $region43: #{tpu_custom_call.1} parent=39 // pred_region
          %s3934 = sand.u32 %s142, 1
          %s3935 = scalar_lea.sflag [#allocation4], %s3934
          %s3936 = sand.u32 %s142, 1
          %s3937 = smul.addr %s3936, 256
          %s3938 = scalar_lea.vmem [#allocation3], %s3937
          %3940 = dma.done %s3935, 4096
        $region44: #{tpu_custom_call.1} parent=39 // pred_fallthru
          _
      $region40: #{tpu_custom_call.1} parent=5 // pred_fallthru
        _
    $region6: #{tpu_custom_call.1} parent=1 // loop_footer
      %s16 = sadd.s32 1, %s12
    $region7: #{tpu_custom_call.1} parent=1 // loop_footer_branch
      %11 = sbr.rel target = $region3
    $region8: #{tpu_custom_call.1} parent=1 // loop_exit
      _
    %3941 = vsyncpa [#allocation4], 1
    %s3942 = scalar_lea.sflag [#allocation4], 1
    %3943 = vsyncpa %s3942, 1

</llo_original>
